<compile_context>
chip_gen: v5e
topology: v5e:2x2
jax: 0.10.0
libtpu: 0.0.40
codegen_flags: <defaults>
</compile_context>

<pallas_src>
import functools

import jax
import jax.numpy as jnp
from jax.experimental import pallas as pl
from jax.experimental.pallas import tpu as pltpu


# ----------------------------------------------------------------------------
# Pallas kernels
# ----------------------------------------------------------------------------
def _bilstm_chunk_kernel(*refs, hidden, tc, batch, nparts):
    """One chunk of `tc` time steps, BOTH directions, input projection fused.

    Ref layout (P = nparts input feature parts):
      inputs : xf_0..xf_{P-1}   (tc*B, K_i)  fwd x-chunk  (chunk c)
               xb_0..xb_{P-1}   (tc*B, K_i)  bwd x-chunk  (chunk nc-1-c)
               wih_0..wih_{P-1} (2, K_i, 4H) stacked W_ih^T          [const]
               whh              (2, H, 4H)   stacked W_hh^T          [const]
               bias             (2, 1, 4H)   b_ih + b_hh             [const]
               h0, c0           (2, B, H)    initial state           [const]
      outputs: yf, yb           (tc*B, H)    per-step hidden outputs
               hn, cn           (2, B, H)    running state (resident blocks)
      scratch: pgf, pgb         (tc*B, 4H)   chunk pre-gates (matmul dtype)
    """
    H, B, P = hidden, batch, nparts
    xf = refs[0:P]
    xb = refs[P:2 * P]
    wih = refs[2 * P:3 * P]
    whh_ref, b_ref, h0_ref, c0_ref = refs[3 * P:3 * P + 4]
    yf_ref, yb_ref, hn_ref, cn_ref = refs[3 * P + 4:3 * P + 8]
    pgf_ref, pgb_ref = refs[3 * P + 8:3 * P + 10]

    mm = pgf_ref.dtype                      # matmul / pre-gate storage dtype
    c_idx = pl.program_id(0)

    @pl.when(c_idx == 0)
    def _():
        hn_ref[...] = h0_ref[...]
        cn_ref[...] = c0_ref[...]

    # ---- Fused input projection for this chunk (one matmul per part/dir);
    #      bias folded in, so only h @ W_hh^T remains on the serial path. ----
    acc_f = jnp.dot(xf[0][...], wih[0][0], preferred_element_type=jnp.float32)
    acc_b = jnp.dot(xb[0][...], wih[0][1], preferred_element_type=jnp.float32)
    for i in range(1, P):
        acc_f = acc_f + jnp.dot(xf[i][...], wih[i][0],
                                preferred_element_type=jnp.float32)
        acc_b = acc_b + jnp.dot(xb[i][...], wih[i][1],
                                preferred_element_type=jnp.float32)
    pgf_ref[...] = (acc_f + b_ref[0]).astype(mm)
    pgb_ref[...] = (acc_b + b_ref[1]).astype(mm)

    # ---- Recurrence: both directions advance together so two independent
    #      MXU dots are in flight every step (hides MXU latency on 1-TC). ----
    whh_f = whh_ref[0]
    whh_b = whh_ref[1]
    h_f = hn_ref[0]
    h_b = hn_ref[1]
    c_f = cn_ref[0]
    c_b = cn_ref[1]

    # All offsets below are static Python ints: static slices, zero-cost views.
    for s in range(tc):
        rf = s * B                   # fwd local time s
        rb = (tc - 1 - s) * B        # bwd local time tc-1-s (global T-1..0)
        gates_f = pgf_ref[pl.ds(rf, B), :].astype(jnp.float32) + jnp.dot(
            h_f.astype(mm), whh_f, preferred_element_type=jnp.float32)
        gates_b = pgb_ref[pl.ds(rb, B), :].astype(jnp.float32) + jnp.dot(
            h_b.astype(mm), whh_b, preferred_element_type=jnp.float32)

        # PyTorch gate order: i, f, g, o.  (For production, H should be a
        # multiple of 128 so these slices are lane-aligned; correct for any H.)
        i_f = jax.nn.sigmoid(gates_f[:, 0 * H:1 * H])
        f_f = jax.nn.sigmoid(gates_f[:, 1 * H:2 * H])
        g_f = jnp.tanh(gates_f[:, 2 * H:3 * H])
        o_f = jax.nn.sigmoid(gates_f[:, 3 * H:4 * H])
        i_b = jax.nn.sigmoid(gates_b[:, 0 * H:1 * H])
        f_b = jax.nn.sigmoid(gates_b[:, 1 * H:2 * H])
        g_b = jnp.tanh(gates_b[:, 2 * H:3 * H])
        o_b = jax.nn.sigmoid(gates_b[:, 3 * H:4 * H])

        c_f = f_f * c_f + i_f * g_f
        c_b = f_b * c_b + i_b * g_b
        h_f = o_f * jnp.tanh(c_f)
        h_b = o_b * jnp.tanh(c_b)

        yf_ref[pl.ds(rf, B), :] = h_f.astype(yf_ref.dtype)
        yb_ref[pl.ds(rb, B), :] = h_b.astype(yb_ref.dtype)

    hn_ref[0] = h_f
    hn_ref[1] = h_b
    cn_ref[0] = c_f
    cn_ref[1] = c_b


def _linear_kernel(*refs, nparts):
    """out = sum_i x_i @ w_i + b for one (rt, N) row tile (f32 accumulate)."""
    x = refs[0:nparts]
    w = refs[nparts:2 * nparts]
    b_ref = refs[2 * nparts]
    o_ref = refs[2 * nparts + 1]
    acc = jnp.dot(x[0][...], w[0][...], preferred_element_type=jnp.float32)
    for i in range(1, nparts):
        acc = acc + jnp.dot(x[i][...], w[i][...],
                            preferred_element_type=jnp.float32)
    o_ref[...] = (acc + b_ref[...]).astype(o_ref.dtype)


# ----------------------------------------------------------------------------
# Wrappers
# ----------------------------------------------------------------------------
def _pick_time_chunk(T, B, cap):
    """Largest divisor tc of T with tc <= cap and (tc*B) % 8 == 0 (so the
    (tc*B, .) blocks satisfy the (8,128) sublane constraint); else full T."""
    for t in range(min(T, cap), 0, -1):
        if T % t == 0 and (t == T or (t * B) % 8 == 0):
            return t
    return T


def bilstm_layer(x_parts, wih_stacks, whh_stack, b_stack, h0, c0, *,
                 seq_len, batch, hidden, time_chunk=32,
                 mm_dtype=jnp.bfloat16, vmem_limit_bytes=64 * 1024 * 1024):
    """One bidirectional LSTM layer (fused input projection + recurrence).

    x_parts    : list of (T*B, K_i) arrays (feature parts of the layer input,
                 already in mm_dtype; their concat is never materialised).
    wih_stacks : list of (2, K_i, 4H) stacked W_ih^T per part   (mm_dtype)
    whh_stack  : (2, H, 4H) stacked W_hh^T                      (mm_dtype)
    b_stack    : (2, 1, 4H)  b_ih + b_hh                        (float32)
    h0, c0     : (2, B, H)   initial state                      (float32)

    Returns yf, yb (each (T*B, H) mm_dtype) and h_n, c_n (each (2, B, H) f32).
    """
    T, B, H = seq_len, batch, hidden
    P = len(x_parts)
    tc = _pick_time_chunk(T, B, time_chunk)
    nc = T // tc
    RB = tc * B

    def f_chunk(c):          # forward walks chunks left -> right
        return (c, 0)

    def b_chunk(c):          # backward walks chunks right -> left
        return (nc - 1 - c, 0)

    def const3(c):
        return (0, 0, 0)

    single = pl.Buffered(1)  # constants: no pointless double-buffering
    xf_specs = [pl.BlockSpec((RB, p.shape[1]), f_chunk) for p in x_parts]
    xb_specs = [pl.BlockSpec((RB, p.shape[1]), b_chunk) for p in x_parts]
    wih_specs = [pl.BlockSpec(w.shape, const3, pipeline_mode=single)
                 for w in wih_stacks]
    const_specs = [
        pl.BlockSpec(whh_stack.shape, const3, pipeline_mode=single),
        pl.BlockSpec(b_stack.shape, const3, pipeline_mode=single),
        pl.BlockSpec(h0.shape, const3, pipeline_mode=single),
        pl.BlockSpec(c0.shape, const3, pipeline_mode=single),
    ]

    kernel = functools.partial(_bilstm_chunk_kernel, hidden=H, tc=tc,
                               batch=B, nparts=P)
    yf, yb, h_n, c_n = pl.pallas_call(
        kernel,
        out_shape=(jax.ShapeDtypeStruct((T * B, H), mm_dtype),
                   jax.ShapeDtypeStruct((T * B, H), mm_dtype),
                   jax.ShapeDtypeStruct((2, B, H), jnp.float32),
                   jax.ShapeDtypeStruct((2, B, H), jnp.float32)),
        grid=(nc,),
        in_specs=xf_specs + xb_specs + wih_specs + const_specs,
        out_specs=(pl.BlockSpec((RB, H), f_chunk),
                   pl.BlockSpec((RB, H), b_chunk),
                   pl.BlockSpec((2, B, H), const3),
                   pl.BlockSpec((2, B, H), const3)),
        scratch_shapes=[pltpu.VMEM((RB, 4 * H), mm_dtype),
                        pltpu.VMEM((RB, 4 * H), mm_dtype)],
        compiler_params=pltpu.CompilerParams(
            dimension_semantics=("arbitrary",),
            vmem_limit_bytes=vmem_limit_bytes),
    )(*x_parts, *x_parts, *wih_stacks, whh_stack, b_stack, h0, c0)
    return yf, yb, h_n, c_n


def fused_linear(x_parts, w_parts, b, *, out_dtype=jnp.float32,
                 mm_dtype=jnp.bfloat16, row_tile=512,
                 vmem_limit_bytes=64 * 1024 * 1024):
    """y = concat(x_parts, -1) @ concat(w_parts, 0) + b, row-tiled.

    The concatenation is never materialised: each part gets its own matmul,
    summed in f32.  Row tiles are multiples of 8 (remainder tile handled by
    Pallas masking); weights/bias are single-buffered constants.
    """
    P = len(x_parts)
    R = x_parts[0].shape[0]
    N = w_parts[0].shape[1]
    x_parts = [p.astype(mm_dtype) for p in x_parts]
    w_parts = [w.astype(mm_dtype) for w in w_parts]
    b2 = b.reshape(1, N).astype(jnp.float32)

    rt = R if R <= row_tile else (row_tile // 8) * 8
    single = pl.Buffered(1)
    x_specs = [pl.BlockSpec((rt, p.shape[1]), lambda r: (r, 0))
               for p in x_parts]
    w_specs = [pl.BlockSpec(w.shape, lambda r: (0, 0), pipeline_mode=single)
               for w in w_parts]
    b_spec = pl.BlockSpec((1, N), lambda r: (0, 0), pipeline_mode=single)

    return pl.pallas_call(
        functools.partial(_linear_kernel, nparts=P),
        out_shape=jax.ShapeDtypeStruct((R, N), out_dtype),
        grid=(pl.cdiv(R, rt),),
        in_specs=x_specs + w_specs + [b_spec],
        out_specs=pl.BlockSpec((rt, N), lambda r: (r, 0)),
        compiler_params=pltpu.CompilerParams(
            dimension_semantics=("parallel",),
            vmem_limit_bytes=vmem_limit_bytes),
    )(*x_parts, *w_parts, b2)


def blstm_forward(x, params, hidden=None, *, time_chunk=32,
                  matmul_dtype=jnp.bfloat16):
    """Forward pass matching BLSTM(dim, layers=2, bi=True).

    x : (T, B, D) float32.  Returns y (T, B, D) f32 and (h_n, c_n), each
    (4, B, D) f32, matching torch.nn.LSTM(batch_first=False) + Linear(2D, D).
    """
    T, B, D = x.shape
    num_layers = 2

    if hidden is None:
        h0 = jnp.zeros((num_layers * 2, B, D), jnp.float32)
        c0 = jnp.zeros((num_layers * 2, B, D), jnp.float32)
    else:
        h0, c0 = hidden
        h0 = h0.astype(jnp.float32)
        c0 = c0.astype(jnp.float32)

    # Inter-layer activations live as 2-D (T*B, K) slabs in matmul_dtype; the
    # (T, B, 2H) direction concatenation never exists in HBM.
    x_parts = [x.reshape(T * B, D).astype(matmul_dtype)]
    h_list, c_list = [], []
    for layer in range(num_layers):
        Ks = [p.shape[1] for p in x_parts]
        wih_stacks, col = [], 0
        for K in Ks:
            wih_stacks.append(jnp.stack(
                [params[f"l{layer}_d{d}"]["w_ih"][:, col:col + K].T
                 for d in range(2)]).astype(matmul_dtype))
            col += K                                    # (2, K_i, 4H) each
        whh_stack = jnp.stack(
            [params[f"l{layer}_d{d}"]["w_hh"].T
             for d in range(2)]).astype(matmul_dtype)   # (2, H, 4H)
        b_stack = jnp.stack(
            [params[f"l{layer}_d{d}"]["b_ih"] + params[f"l{layer}_d{d}"]["b_hh"]
             for d in range(2)]).reshape(2, 1, 4 * D).astype(jnp.float32)

        yf, yb, h_n_l, c_n_l = bilstm_layer(
            x_parts, wih_stacks, whh_stack, b_stack,
            h0[2 * layer:2 * layer + 2], c0[2 * layer:2 * layer + 2],
            seq_len=T, batch=B, hidden=D, time_chunk=time_chunk,
            mm_dtype=matmul_dtype)
        h_list.append(h_n_l)
        c_list.append(c_n_l)
        x_parts = [yf, yb]

    h_n = jnp.concatenate(h_list, axis=0)               # (4, B, D)
    c_n = jnp.concatenate(c_list, axis=0)

    # Final Linear(2D -> D): y = y_fwd @ W[:D] + y_bwd @ W[D:] + b.
    w_lin = params["linear"]["w"]                       # (2D, D) == torch W^T
    b_lin = params["linear"]["b"]                       # (D,)
    y2d = fused_linear(x_parts, [w_lin[:D], w_lin[D:]], b_lin,
                       out_dtype=jnp.float32, mm_dtype=matmul_dtype)
    return y2d.reshape(T, B, D), (h_n, c_n)


# ----------------------------------------------------------------------------
# Deterministic parameter init (same shapes as the PyTorch module)
# ----------------------------------------------------------------------------
def init_params(key, dim, num_layers=2):
    params = {}
    scale = 1.0 / jnp.sqrt(dim)
    for layer in range(num_layers):
        in_size = dim if layer == 0 else 2 * dim
        for d in range(2):
            key, k1, k2, k3, k4 = jax.random.split(key, 5)
            params[f"l{layer}_d{d}"] = dict(
                w_ih=jax.random.uniform(k1, (4 * dim, in_size), jnp.float32,
                                        -scale, scale),
                w_hh=jax.random.uniform(k2, (4 * dim, dim), jnp.float32,
                                        -scale, scale),
                b_ih=jax.random.uniform(k3, (4 * dim,), jnp.float32,
                                        -scale, scale),
                b_hh=jax.random.uniform(k4, (4 * dim,), jnp.float32,
                                        -scale, scale),
            )
    key, k1, k2 = jax.random.split(key, 3)
    params["linear"] = dict(
        w=jax.random.uniform(k1, (2 * dim, dim), jnp.float32, -scale, scale),
        b=jax.random.uniform(k2, (dim,), jnp.float32, -scale, scale),
    )
    return params


# ----------------------------------------------------------------------------
# Pure-JAX reference (sanity check)
# ----------------------------------------------------------------------------
def _lstm_dir_ref(x, w_ih, w_hh, b_ih, b_hh, h0, c0, reverse):
    xs = x[::-1] if reverse else x

    def step(carry, x_t):
        h, c = carry
        gates = x_t @ w_ih.T + b_ih + h @ w_hh.T + b_hh
        i, f, g, o = jnp.split(gates, 4, axis=-1)
        c = jax.nn.sigmoid(f) * c + jax.nn.sigmoid(i) * jnp.tanh(g)
        h = jax.nn.sigmoid(o) * jnp.tanh(c)
        return (h, c), h

    (h_n, c_n), ys = jax.lax.scan(step, (h0, c0), xs)
    if reverse:
        ys = ys[::-1]
    return ys, h_n, c_n


def blstm_ref(x, params, hidden=None):
    T, B, D = x.shape
    if hidden is None:
        h0 = jnp.zeros((4, B, D), jnp.float32)
        c0 = jnp.zeros((4, B, D), jnp.float32)
    else:
        h0, c0 = hidden
    layer_in = x
    hs, cs = [], []
    for layer in range(2):
        outs = []
        for d, rev in enumerate((False, True)):
            p = params[f"l{layer}_d{d}"]
            idx = layer * 2 + d
            y_d, h_d, c_d = _lstm_dir_ref(layer_in, p["w_ih"], p["w_hh"],
                                          p["b_ih"], p["b_hh"],
                                          h0[idx], c0[idx], rev)
            outs.append(y_d)
            hs.append(h_d)
            cs.append(c_d)
        layer_in = jnp.concatenate(outs, axis=-1)
    y = layer_in @ params["linear"]["w"] + params["linear"]["b"]
    return y, (jnp.stack(hs), jnp.stack(cs))


# ----------------------------------------------------------------------------
if __name__ == "__main__":
    T, B, D = 8, 2, 32     # seq_len, batch, dim (dim = hidden_size = input_size)
    key = jax.random.PRNGKey(0)
    k_x, k_p = jax.random.split(key)
    x = jax.random.normal(k_x, (T, B, D), jnp.float32)
    params = init_params(k_p, D)

    # Exact-precision path (f32 matmuls) -> tight check against the reference.
    y32, (h32, c32) = jax.jit(
        lambda v: blstm_forward(v, params, matmul_dtype=jnp.float32))(x)
    jax.block_until_ready((y32, h32, c32))

    # Default fast path (bf16 matmuls, bf16 inter-layer activations).
    y16, (h16, c16) = jax.jit(lambda v: blstm_forward(v, params))(x)
    jax.block_until_ready((y16, h16, c16))

    y_ref, (h_ref, c_ref) = blstm_ref(x, params, hidden=None)
    assert y32.shape == (T, B, D)
    assert h32.shape == (4, B, D) and c32.shape == (4, B, D)
    assert jnp.allclose(y32, y_ref, atol=1e-4, rtol=1e-4)
    assert jnp.allclose(h32, h_ref, atol=1e-4, rtol=1e-4)
    assert jnp.allclose(c32, c_ref, atol=1e-4, rtol=1e-4)
    # bf16 MXU path: looser tolerance (f32 gate/state math bounds the drift).
    assert jnp.allclose(y16, y_ref, atol=1e-1, rtol=1e-1)
    assert jnp.allclose(h16, h_ref, atol=1e-1, rtol=1e-1)
    assert jnp.allclose(c16, c_ref, atol=1e-1, rtol=1e-1)

    print("KERNEL_OK")
</pallas_src>

<mosaic_0001>
module attributes {stable_mosaic.version = 11 : i64} {
  func.func @_linear_kernel(%arg0: i32, %arg1: memref<16x32xf32, #tpu.memory_space<vmem>>, %arg2: memref<16x32xf32, #tpu.memory_space<vmem>>, %arg3: memref<32x32xf32, #tpu.memory_space<vmem>>, %arg4: memref<32x32xf32, #tpu.memory_space<vmem>>, %arg5: memref<1x32xf32, #tpu.memory_space<vmem>>, %arg6: memref<16x32xf32, #tpu.memory_space<vmem>>) attributes {dimension_semantics = [#tpu.dimension_semantics<parallel>], iteration_bounds = array<i64: 1>, scalar_prefetch = 0 : i64, scratch_operands = 0 : i64, tpu.core_type = #tpu.core_type<tc>, window_params = [{transform_indices = @transform_0, window_bounds = array<i64: 16, 32>}, {transform_indices = @transform_1, window_bounds = array<i64: 16, 32>}, {pipeline_mode = #tpu.pipeline_mode<synchronous>, transform_indices = @transform_2, window_bounds = array<i64: 32, 32>}, {pipeline_mode = #tpu.pipeline_mode<synchronous>, transform_indices = @transform_3, window_bounds = array<i64: 32, 32>}, {pipeline_mode = #tpu.pipeline_mode<synchronous>, transform_indices = @transform_4, window_bounds = array<i64: 1, 32>}, {transform_indices = @transform_5, window_bounds = array<i64: 16, 32>}]} {
    %c0 = arith.constant 0 : index
    %c0_0 = arith.constant 0 : index
    %0 = vector.load %arg1[%c0, %c0_0] : memref<16x32xf32, #tpu.memory_space<vmem>>, vector<16x32xf32>
    %c0_1 = arith.constant 0 : index
    %c0_2 = arith.constant 0 : index
    %1 = vector.load %arg3[%c0_1, %c0_2] : memref<32x32xf32, #tpu.memory_space<vmem>>, vector<32x32xf32>
    %cst = arith.constant dense<0.000000e+00> : vector<16x32xf32>
    %2 = tpu.matmul %0, %1, %cst {dimension_numbers = #tpu.dot_dimension_numbers<[1], [0], [0], [1], [0, 0, 1, 1], [], []>} : vector<16x32xf32>, vector<32x32xf32>, vector<16x32xf32> -> vector<16x32xf32>
    %c0_3 = arith.constant 0 : index
    %c0_4 = arith.constant 0 : index
    %3 = vector.load %arg2[%c0_3, %c0_4] : memref<16x32xf32, #tpu.memory_space<vmem>>, vector<16x32xf32>
    %c0_5 = arith.constant 0 : index
    %c0_6 = arith.constant 0 : index
    %4 = vector.load %arg4[%c0_5, %c0_6] : memref<32x32xf32, #tpu.memory_space<vmem>>, vector<32x32xf32>
    %cst_7 = arith.constant dense<0.000000e+00> : vector<16x32xf32>
    %5 = tpu.matmul %3, %4, %cst_7 {dimension_numbers = #tpu.dot_dimension_numbers<[1], [0], [0], [1], [0, 0, 1, 1], [], []>} : vector<16x32xf32>, vector<32x32xf32>, vector<16x32xf32> -> vector<16x32xf32>
    %6 = arith.addf %2, %5 : vector<16x32xf32>
    %c0_8 = arith.constant 0 : index
    %c0_9 = arith.constant 0 : index
    %7 = vector.load %arg5[%c0_8, %c0_9] : memref<1x32xf32, #tpu.memory_space<vmem>>, vector<1x32xf32>
    %8 = vector.broadcast %7 : vector<1x32xf32> to vector<16x32xf32>
    %9 = arith.addf %6, %8 : vector<16x32xf32>
    %c0_10 = arith.constant 0 : index
    %c0_11 = arith.constant 0 : index
    %10 = vector.load %arg6[%c0_10, %c0_11] : memref<16x32xf32, #tpu.memory_space<vmem>>, vector<16x32xf32>
    tpu.vector_store %arg6[%c0_10, %c0_11], %9 {strides = array<i32>} : memref<16x32xf32, #tpu.memory_space<vmem>>, vector<16x32xf32>,
    return
  }
  func.func @transform_0(%arg0: i32) -> (i32, i32) {
    %c0_i32 = arith.constant 0 : i32
    %c0_i32_0 = arith.constant 0 : i32
    return %arg0, %c0_i32 : i32, i32
  }
  func.func @transform_1(%arg0: i32) -> (i32, i32) {
    %c0_i32 = arith.constant 0 : i32
    %c0_i32_0 = arith.constant 0 : i32
    return %arg0, %c0_i32 : i32, i32
  }
  func.func @transform_2(%arg0: i32) -> (i32, i32) {
    %c0_i32 = arith.constant 0 : i32
    %c0_i32_0 = arith.constant 0 : i32
    %c0_i32_1 = arith.constant 0 : i32
    return %c0_i32, %c0_i32_0 : i32, i32
  }
  func.func @transform_3(%arg0: i32) -> (i32, i32) {
    %c0_i32 = arith.constant 0 : i32
    %c0_i32_0 = arith.constant 0 : i32
    %c0_i32_1 = arith.constant 0 : i32
    return %c0_i32, %c0_i32_0 : i32, i32
  }
  func.func @transform_4(%arg0: i32) -> (i32, i32) {
    %c0_i32 = arith.constant 0 : i32
    %c0_i32_0 = arith.constant 0 : i32
    %c0_i32_1 = arith.constant 0 : i32
    return %c0_i32, %c0_i32_0 : i32, i32
  }
  func.func @transform_5(%arg0: i32) -> (i32, i32) {
    %c0_i32 = arith.constant 0 : i32
    %c0_i32_0 = arith.constant 0 : i32
    return %arg0, %c0_i32 : i32, i32
  }
}

module attributes {stable_mosaic.version = 11 : i64} {
  func.func @_bilstm_chunk_kernel(%arg0: i32, %arg1: memref<16x32xf32, #tpu.memory_space<vmem>>, %arg2: memref<16x32xf32, #tpu.memory_space<vmem>>, %arg3: memref<16x32xf32, #tpu.memory_space<vmem>>, %arg4: memref<16x32xf32, #tpu.memory_space<vmem>>, %arg5: memref<2x32x128xf32, #tpu.memory_space<vmem>>, %arg6: memref<2x32x128xf32, #tpu.memory_space<vmem>>, %arg7: memref<2x32x128xf32, #tpu.memory_space<vmem>>, %arg8: memref<2x1x128xf32, #tpu.memory_space<vmem>>, %arg9: memref<2x2x32xf32, #tpu.memory_space<vmem>>, %arg10: memref<2x2x32xf32, #tpu.memory_space<vmem>>, %arg11: memref<16x32xf32, #tpu.memory_space<vmem>>, %arg12: memref<16x32xf32, #tpu.memory_space<vmem>>, %arg13: memref<2x2x32xf32, #tpu.memory_space<vmem>>, %arg14: memref<2x2x32xf32, #tpu.memory_space<vmem>>, %arg15: memref<16x128xf32, #tpu.memory_space<vmem>>, %arg16: memref<16x128xf32, #tpu.memory_space<vmem>>) attributes {dimension_semantics = [#tpu.dimension_semantics<arbitrary>], iteration_bounds = array<i64: 1>, scalar_prefetch = 0 : i64, scratch_operands = 2 : i64, tpu.core_type = #tpu.core_type<tc>, window_params = [{transform_indices = @transform_0, window_bounds = array<i64: 16, 32>}, {transform_indices = @transform_1, window_bounds = array<i64: 16, 32>}, {transform_indices = @transform_2, window_bounds = array<i64: 16, 32>}, {transform_indices = @transform_3, window_bounds = array<i64: 16, 32>}, {pipeline_mode = #tpu.pipeline_mode<synchronous>, transform_indices = @transform_4, window_bounds = array<i64: 2, 32, 128>}, {pipeline_mode = #tpu.pipeline_mode<synchronous>, transform_indices = @transform_5, window_bounds = array<i64: 2, 32, 128>}, {pipeline_mode = #tpu.pipeline_mode<synchronous>, transform_indices = @transform_6, window_bounds = array<i64: 2, 32, 128>}, {pipeline_mode = #tpu.pipeline_mode<synchronous>, transform_indices = @transform_7, window_bounds = array<i64: 2, 1, 128>}, {pipeline_mode = #tpu.pipeline_mode<synchronous>, transform_indices = @transform_8, window_bounds = array<i64: 2, 2, 32>}, {pipeline_mode = #tpu.pipeline_mode<synchronous>, transform_indices = @transform_9, window_bounds = array<i64: 2, 2, 32>}, {transform_indices = @transform_10, window_bounds = array<i64: 16, 32>}, {transform_indices = @transform_11, window_bounds = array<i64: 16, 32>}, {pipeline_mode = #tpu.pipeline_mode<synchronous>, transform_indices = @transform_12, window_bounds = array<i64: 2, 2, 32>}, {pipeline_mode = #tpu.pipeline_mode<synchronous>, transform_indices = @transform_13, window_bounds = array<i64: 2, 2, 32>}]} {
    %c0_i32 = arith.constant 0 : i32
    %0 = arith.cmpi eq, %arg0, %c0_i32 : i32
    %1 = arith.extui %0 : i1 to i32
    %c0_i32_0 = arith.constant 0 : i32
    %2 = arith.cmpi ne, %1, %c0_i32_0 : i32
    scf.if %2 {
      %c0_183 = arith.constant 0 : index
      %c0_184 = arith.constant 0 : index
      %c0_185 = arith.constant 0 : index
      %519 = vector.load %arg9[%c0_183, %c0_184, %c0_185] : memref<2x2x32xf32, #tpu.memory_space<vmem>>, vector<2x2x32xf32>
      %c0_186 = arith.constant 0 : index
      %c0_187 = arith.constant 0 : index
      %c0_188 = arith.constant 0 : index
      %520 = vector.load %arg13[%c0_186, %c0_187, %c0_188] : memref<2x2x32xf32, #tpu.memory_space<vmem>>, vector<2x2x32xf32>
      tpu.vector_store %arg13[%c0_186, %c0_187, %c0_188], %519 {strides = array<i32>} : memref<2x2x32xf32, #tpu.memory_space<vmem>>, vector<2x2x32xf32>,
      %c0_189 = arith.constant 0 : index
      %c0_190 = arith.constant 0 : index
      %c0_191 = arith.constant 0 : index
      %521 = vector.load %arg10[%c0_189, %c0_190, %c0_191] : memref<2x2x32xf32, #tpu.memory_space<vmem>>, vector<2x2x32xf32>
      %c0_192 = arith.constant 0 : index
      %c0_193 = arith.constant 0 : index
      %c0_194 = arith.constant 0 : index
      %522 = vector.load %arg14[%c0_192, %c0_193, %c0_194] : memref<2x2x32xf32, #tpu.memory_space<vmem>>, vector<2x2x32xf32>
      tpu.vector_store %arg14[%c0_192, %c0_193, %c0_194], %521 {strides = array<i32>} : memref<2x2x32xf32, #tpu.memory_space<vmem>>, vector<2x2x32xf32>,
    } else {
    }
    %c0 = arith.constant 0 : index
    %c0_1 = arith.constant 0 : index
    %3 = vector.load %arg1[%c0, %c0_1] : memref<16x32xf32, #tpu.memory_space<vmem>>, vector<16x32xf32>
    %c0_2 = arith.constant 0 : index
    %c0_3 = arith.constant 0 : index
    %c0_4 = arith.constant 0 : index
    %4 = vector.load %arg5[%c0_2, %c0_3, %c0_4] : memref<2x32x128xf32, #tpu.memory_space<vmem>>, vector<1x32x128xf32>
    %5 = vector.shape_cast %4 : vector<1x32x128xf32> to vector<32x128xf32>
    %cst = arith.constant dense<0.000000e+00> : vector<16x128xf32>
    %6 = tpu.matmul %3, %5, %cst {dimension_numbers = #tpu.dot_dimension_numbers<[1], [0], [0], [1], [0, 0, 1, 1], [], []>} : vector<16x32xf32>, vector<32x128xf32>, vector<16x128xf32> -> vector<16x128xf32>
    %c0_5 = arith.constant 0 : index
    %c0_6 = arith.constant 0 : index
    %7 = vector.load %arg3[%c0_5, %c0_6] : memref<16x32xf32, #tpu.memory_space<vmem>>, vector<16x32xf32>
    %c1 = arith.constant 1 : index
    %c0_7 = arith.constant 0 : index
    %c0_8 = arith.constant 0 : index
    %8 = vector.load %arg5[%c1, %c0_7, %c0_8] : memref<2x32x128xf32, #tpu.memory_space<vmem>>, vector<1x32x128xf32>
    %9 = vector.shape_cast %8 : vector<1x32x128xf32> to vector<32x128xf32>
    %cst_9 = arith.constant dense<0.000000e+00> : vector<16x128xf32>
    %10 = tpu.matmul %7, %9, %cst_9 {dimension_numbers = #tpu.dot_dimension_numbers<[1], [0], [0], [1], [0, 0, 1, 1], [], []>} : vector<16x32xf32>, vector<32x128xf32>, vector<16x128xf32> -> vector<16x128xf32>
    %c0_10 = arith.constant 0 : index
    %c0_11 = arith.constant 0 : index
    %11 = vector.load %arg2[%c0_10, %c0_11] : memref<16x32xf32, #tpu.memory_space<vmem>>, vector<16x32xf32>
    %c0_12 = arith.constant 0 : index
    %c0_13 = arith.constant 0 : index
    %c0_14 = arith.constant 0 : index
    %12 = vector.load %arg6[%c0_12, %c0_13, %c0_14] : memref<2x32x128xf32, #tpu.memory_space<vmem>>, vector<1x32x128xf32>
    %13 = vector.shape_cast %12 : vector<1x32x128xf32> to vector<32x128xf32>
    %cst_15 = arith.constant dense<0.000000e+00> : vector<16x128xf32>
    %14 = tpu.matmul %11, %13, %cst_15 {dimension_numbers = #tpu.dot_dimension_numbers<[1], [0], [0], [1], [0, 0, 1, 1], [], []>} : vector<16x32xf32>, vector<32x128xf32>, vector<16x128xf32> -> vector<16x128xf32>
    %15 = arith.addf %6, %14 : vector<16x128xf32>
    %c0_16 = arith.constant 0 : index
    %c0_17 = arith.constant 0 : index
    %16 = vector.load %arg4[%c0_16, %c0_17] : memref<16x32xf32, #tpu.memory_space<vmem>>, vector<16x32xf32>
    %c1_18 = arith.constant 1 : index
    %c0_19 = arith.constant 0 : index
    %c0_20 = arith.constant 0 : index
    %17 = vector.load %arg6[%c1_18, %c0_19, %c0_20] : memref<2x32x128xf32, #tpu.memory_space<vmem>>, vector<1x32x128xf32>
    %18 = vector.shape_cast %17 : vector<1x32x128xf32> to vector<32x128xf32>
    %cst_21 = arith.constant dense<0.000000e+00> : vector<16x128xf32>
    %19 = tpu.matmul %16, %18, %cst_21 {dimension_numbers = #tpu.dot_dimension_numbers<[1], [0], [0], [1], [0, 0, 1, 1], [], []>} : vector<16x32xf32>, vector<32x128xf32>, vector<16x128xf32> -> vector<16x128xf32>
    %20 = arith.addf %10, %19 : vector<16x128xf32>
    %c0_22 = arith.constant 0 : index
    %c0_23 = arith.constant 0 : index
    %c0_24 = arith.constant 0 : index
    %21 = vector.load %arg8[%c0_22, %c0_23, %c0_24] : memref<2x1x128xf32, #tpu.memory_space<vmem>>, vector<1x1x128xf32>
    %22 = vector.shape_cast %21 : vector<1x1x128xf32> to vector<1x128xf32>
    %23 = vector.broadcast %22 : vector<1x128xf32> to vector<16x128xf32>
    %24 = arith.addf %15, %23 : vector<16x128xf32>
    %c0_25 = arith.constant 0 : index
    %c0_26 = arith.constant 0 : index
    %25 = vector.load %arg15[%c0_25, %c0_26] : memref<16x128xf32, #tpu.memory_space<vmem>>, vector<16x128xf32>
    tpu.vector_store %arg15[%c0_25, %c0_26], %24 {strides = array<i32>} : memref<16x128xf32, #tpu.memory_space<vmem>>, vector<16x128xf32>,
    %c1_27 = arith.constant 1 : index
    %c0_28 = arith.constant 0 : index
    %c0_29 = arith.constant 0 : index
    %26 = vector.load %arg8[%c1_27, %c0_28, %c0_29] : memref<2x1x128xf32, #tpu.memory_space<vmem>>, vector<1x1x128xf32>
    %27 = vector.shape_cast %26 : vector<1x1x128xf32> to vector<1x128xf32>
    %28 = vector.broadcast %27 : vector<1x128xf32> to vector<16x128xf32>
    %29 = arith.addf %20, %28 : vector<16x128xf32>
    %c0_30 = arith.constant 0 : index
    %c0_31 = arith.constant 0 : index
    %30 = vector.load %arg16[%c0_30, %c0_31] : memref<16x128xf32, #tpu.memory_space<vmem>>, vector<16x128xf32>
    tpu.vector_store %arg16[%c0_30, %c0_31], %29 {strides = array<i32>} : memref<16x128xf32, #tpu.memory_space<vmem>>, vector<16x128xf32>,
    %c0_32 = arith.constant 0 : index
    %c0_33 = arith.constant 0 : index
    %c0_34 = arith.constant 0 : index
    %31 = vector.load %arg7[%c0_32, %c0_33, %c0_34] : memref<2x32x128xf32, #tpu.memory_space<vmem>>, vector<1x32x128xf32>
    %32 = vector.shape_cast %31 : vector<1x32x128xf32> to vector<32x128xf32>
    %c1_35 = arith.constant 1 : index
    %c0_36 = arith.constant 0 : index
    %c0_37 = arith.constant 0 : index
    %33 = vector.load %arg7[%c1_35, %c0_36, %c0_37] : memref<2x32x128xf32, #tpu.memory_space<vmem>>, vector<1x32x128xf32>
    %34 = vector.shape_cast %33 : vector<1x32x128xf32> to vector<32x128xf32>
    %c0_38 = arith.constant 0 : index
    %c0_39 = arith.constant 0 : index
    %c0_40 = arith.constant 0 : index
    %35 = vector.load %arg13[%c0_38, %c0_39, %c0_40] : memref<2x2x32xf32, #tpu.memory_space<vmem>>, vector<1x2x32xf32>
    %36 = vector.shape_cast %35 : vector<1x2x32xf32> to vector<2x32xf32>
    %c1_41 = arith.constant 1 : index
    %c0_42 = arith.constant 0 : index
    %c0_43 = arith.constant 0 : index
    %37 = vector.load %arg13[%c1_41, %c0_42, %c0_43] : memref<2x2x32xf32, #tpu.memory_space<vmem>>, vector<1x2x32xf32>
    %38 = vector.shape_cast %37 : vector<1x2x32xf32> to vector<2x32xf32>
    %c0_44 = arith.constant 0 : index
    %c0_45 = arith.constant 0 : index
    %c0_46 = arith.constant 0 : index
    %39 = vector.load %arg14[%c0_44, %c0_45, %c0_46] : memref<2x2x32xf32, #tpu.memory_space<vmem>>, vector<1x2x32xf32>
    %40 = vector.shape_cast %39 : vector<1x2x32xf32> to vector<2x32xf32>
    %c1_47 = arith.constant 1 : index
    %c0_48 = arith.constant 0 : index
    %c0_49 = arith.constant 0 : index
    %41 = vector.load %arg14[%c1_47, %c0_48, %c0_49] : memref<2x2x32xf32, #tpu.memory_space<vmem>>, vector<1x2x32xf32>
    %42 = vector.shape_cast %41 : vector<1x2x32xf32> to vector<2x32xf32>
    %c0_50 = arith.constant 0 : index
    %c0_51 = arith.constant 0 : index
    %43 = vector.load %arg15[%c0_50, %c0_51] : memref<16x128xf32, #tpu.memory_space<vmem>>, vector<2x128xf32>
    %cst_52 = arith.constant dense<0.000000e+00> : vector<2x128xf32>
    %44 = tpu.matmul %36, %32, %cst_52 {dimension_numbers = #tpu.dot_dimension_numbers<[1], [0], [0], [1], [0, 0, 1, 1], [], []>} : vector<2x32xf32>, vector<32x128xf32>, vector<2x128xf32> -> vector<2x128xf32>
    %45 = arith.addf %43, %44 : vector<2x128xf32>
    %c14 = arith.constant 14 : index
    %c0_53 = arith.constant 0 : index
    %46 = vector.load %arg16[%c14, %c0_53] : memref<16x128xf32, #tpu.memory_space<vmem>>, vector<2x128xf32>
    %cst_54 = arith.constant dense<0.000000e+00> : vector<2x128xf32>
    %47 = tpu.matmul %38, %34, %cst_54 {dimension_numbers = #tpu.dot_dimension_numbers<[1], [0], [0], [1], [0, 0, 1, 1], [], []>} : vector<2x32xf32>, vector<32x128xf32>, vector<2x128xf32> -> vector<2x128xf32>
    %48 = arith.addf %46, %47 : vector<2x128xf32>
    %49 = vector.extract_strided_slice %45 {offsets = [0, 0], sizes = [2, 32], strides = [1, 1]} : vector<2x128xf32> to vector<2x32xf32>
    %50 = arith.negf %49 : vector<2x32xf32>
    %51 = math.exp %50 : vector<2x32xf32>
    %cst_55 = arith.constant 1.000000e+00 : f32
    %52 = vector.broadcast %cst_55 : f32 to vector<2x32xf32>
    %53 = arith.addf %52, %51 : vector<2x32xf32>
    %54 = arith.divf %52, %53 : vector<2x32xf32>
    %55 = vector.extract_strided_slice %45 {offsets = [0, 32], sizes = [2, 32], strides = [1, 1]} : vector<2x128xf32> to vector<2x32xf32>
    %56 = arith.negf %55 : vector<2x32xf32>
    %57 = math.exp %56 : vector<2x32xf32>
    %cst_56 = arith.constant 1.000000e+00 : f32
    %58 = vector.broadcast %cst_56 : f32 to vector<2x32xf32>
    %59 = arith.addf %58, %57 : vector<2x32xf32>
    %60 = arith.divf %58, %59 : vector<2x32xf32>
    %61 = vector.extract_strided_slice %45 {offsets = [0, 64], sizes = [2, 32], strides = [1, 1]} : vector<2x128xf32> to vector<2x32xf32>
    %62 = math.tanh %61 : vector<2x32xf32>
    %63 = vector.extract_strided_slice %45 {offsets = [0, 96], sizes = [2, 32], strides = [1, 1]} : vector<2x128xf32> to vector<2x32xf32>
    %64 = arith.negf %63 : vector<2x32xf32>
    %65 = math.exp %64 : vector<2x32xf32>
    %cst_57 = arith.constant 1.000000e+00 : f32
    %66 = vector.broadcast %cst_57 : f32 to vector<2x32xf32>
    %67 = arith.addf %66, %65 : vector<2x32xf32>
    %68 = arith.divf %66, %67 : vector<2x32xf32>
    %69 = vector.extract_strided_slice %48 {offsets = [0, 0], sizes = [2, 32], strides = [1, 1]} : vector<2x128xf32> to vector<2x32xf32>
    %70 = arith.negf %69 : vector<2x32xf32>
    %71 = math.exp %70 : vector<2x32xf32>
    %cst_58 = arith.constant 1.000000e+00 : f32
    %72 = vector.broadcast %cst_58 : f32 to vector<2x32xf32>
    %73 = arith.addf %72, %71 : vector<2x32xf32>
    %74 = arith.divf %72, %73 : vector<2x32xf32>
    %75 = vector.extract_strided_slice %48 {offsets = [0, 32], sizes = [2, 32], strides = [1, 1]} : vector<2x128xf32> to vector<2x32xf32>
    %76 = arith.negf %75 : vector<2x32xf32>
    %77 = math.exp %76 : vector<2x32xf32>
    %cst_59 = arith.constant 1.000000e+00 : f32
    %78 = vector.broadcast %cst_59 : f32 to vector<2x32xf32>
    %79 = arith.addf %78, %77 : vector<2x32xf32>
    %80 = arith.divf %78, %79 : vector<2x32xf32>
    %81 = vector.extract_strided_slice %48 {offsets = [0, 64], sizes = [2, 32], strides = [1, 1]} : vector<2x128xf32> to vector<2x32xf32>
    %82 = math.tanh %81 : vector<2x32xf32>
    %83 = vector.extract_strided_slice %48 {offsets = [0, 96], sizes = [2, 32], strides = [1, 1]} : vector<2x128xf32> to vector<2x32xf32>
    %84 = arith.negf %83 : vector<2x32xf32>
    %85 = math.exp %84 : vector<2x32xf32>
    %cst_60 = arith.constant 1.000000e+00 : f32
    %86 = vector.broadcast %cst_60 : f32 to vector<2x32xf32>
    %87 = arith.addf %86, %85 : vector<2x32xf32>
    %88 = arith.divf %86, %87 : vector<2x32xf32>
    %89 = arith.mulf %60, %40 : vector<2x32xf32>
    %90 = arith.mulf %54, %62 : vector<2x32xf32>
    %91 = arith.addf %89, %90 : vector<2x32xf32>
    %92 = arith.mulf %80, %42 : vector<2x32xf32>
    %93 = arith.mulf %74, %82 : vector<2x32xf32>
    %94 = arith.addf %92, %93 : vector<2x32xf32>
    %95 = math.tanh %91 : vector<2x32xf32>
    %96 = arith.mulf %68, %95 : vector<2x32xf32>
    %97 = math.tanh %94 : vector<2x32xf32>
    %98 = arith.mulf %88, %97 : vector<2x32xf32>
    %c0_61 = arith.constant 0 : index
    %c0_62 = arith.constant 0 : index
    %99 = vector.load %arg11[%c0_61, %c0_62] : memref<16x32xf32, #tpu.memory_space<vmem>>, vector<2x32xf32>
    tpu.vector_store %arg11[%c0_61, %c0_62], %96 {strides = array<i32>} : memref<16x32xf32, #tpu.memory_space<vmem>>, vector<2x32xf32>,
    %c14_63 = arith.constant 14 : index
    %c0_64 = arith.constant 0 : index
    %100 = vector.load %arg12[%c14_63, %c0_64] : memref<16x32xf32, #tpu.memory_space<vmem>>, vector<2x32xf32>
    tpu.vector_store %arg12[%c14_63, %c0_64], %98 {strides = array<i32>} : memref<16x32xf32, #tpu.memory_space<vmem>>, vector<2x32xf32>,
    %c2 = arith.constant 2 : index
    %c0_65 = arith.constant 0 : index
    %101 = vector.load %arg15[%c2, %c0_65] : memref<16x128xf32, #tpu.memory_space<vmem>>, vector<2x128xf32>
    %cst_66 = arith.constant dense<0.000000e+00> : vector<2x128xf32>
    %102 = tpu.matmul %96, %32, %cst_66 {dimension_numbers = #tpu.dot_dimension_numbers<[1], [0], [0], [1], [0, 0, 1, 1], [], []>} : vector<2x32xf32>, vector<32x128xf32>, vector<2x128xf32> -> vector<2x128xf32>
    %103 = arith.addf %101, %102 : vector<2x128xf32>
    %c12 = arith.constant 12 : index
    %c0_67 = arith.constant 0 : index
    %104 = vector.load %arg16[%c12, %c0_67] : memref<16x128xf32, #tpu.memory_space<vmem>>, vector<2x128xf32>
    %cst_68 = arith.constant dense<0.000000e+00> : vector<2x128xf32>
    %105 = tpu.matmul %98, %34, %cst_68 {dimension_numbers = #tpu.dot_dimension_numbers<[1], [0], [0], [1], [0, 0, 1, 1], [], []>} : vector<2x32xf32>, vector<32x128xf32>, vector<2x128xf32> -> vector<2x128xf32>
    %106 = arith.addf %104, %105 : vector<2x128xf32>
    %107 = vector.extract_strided_slice %103 {offsets = [0, 0], sizes = [2, 32], strides = [1, 1]} : vector<2x128xf32> to vector<2x32xf32>
    %108 = arith.negf %107 : vector<2x32xf32>
    %109 = math.exp %108 : vector<2x32xf32>
    %cst_69 = arith.constant 1.000000e+00 : f32
    %110 = vector.broadcast %cst_69 : f32 to vector<2x32xf32>
    %111 = arith.addf %110, %109 : vector<2x32xf32>
    %112 = arith.divf %110, %111 : vector<2x32xf32>
    %113 = vector.extract_strided_slice %103 {offsets = [0, 32], sizes = [2, 32], strides = [1, 1]} : vector<2x128xf32> to vector<2x32xf32>
    %114 = arith.negf %113 : vector<2x32xf32>
    %115 = math.exp %114 : vector<2x32xf32>
    %cst_70 = arith.constant 1.000000e+00 : f32
    %116 = vector.broadcast %cst_70 : f32 to vector<2x32xf32>
    %117 = arith.addf %116, %115 : vector<2x32xf32>
    %118 = arith.divf %116, %117 : vector<2x32xf32>
    %119 = vector.extract_strided_slice %103 {offsets = [0, 64], sizes = [2, 32], strides = [1, 1]} : vector<2x128xf32> to vector<2x32xf32>
    %120 = math.tanh %119 : vector<2x32xf32>
    %121 = vector.extract_strided_slice %103 {offsets = [0, 96], sizes = [2, 32], strides = [1, 1]} : vector<2x128xf32> to vector<2x32xf32>
    %122 = arith.negf %121 : vector<2x32xf32>
    %123 = math.exp %122 : vector<2x32xf32>
    %cst_71 = arith.constant 1.000000e+00 : f32
    %124 = vector.broadcast %cst_71 : f32 to vector<2x32xf32>
    %125 = arith.addf %124, %123 : vector<2x32xf32>
    %126 = arith.divf %124, %125 : vector<2x32xf32>
    %127 = vector.extract_strided_slice %106 {offsets = [0, 0], sizes = [2, 32], strides = [1, 1]} : vector<2x128xf32> to vector<2x32xf32>
    %128 = arith.negf %127 : vector<2x32xf32>
    %129 = math.exp %128 : vector<2x32xf32>
    %cst_72 = arith.constant 1.000000e+00 : f32
    %130 = vector.broadcast %cst_72 : f32 to vector<2x32xf32>
    %131 = arith.addf %130, %129 : vector<2x32xf32>
    %132 = arith.divf %130, %131 : vector<2x32xf32>
    %133 = vector.extract_strided_slice %106 {offsets = [0, 32], sizes = [2, 32], strides = [1, 1]} : vector<2x128xf32> to vector<2x32xf32>
    %134 = arith.negf %133 : vector<2x32xf32>
    %135 = math.exp %134 : vector<2x32xf32>
    %cst_73 = arith.constant 1.000000e+00 : f32
    %136 = vector.broadcast %cst_73 : f32 to vector<2x32xf32>
    %137 = arith.addf %136, %135 : vector<2x32xf32>
    %138 = arith.divf %136, %137 : vector<2x32xf32>
    %139 = vector.extract_strided_slice %106 {offsets = [0, 64], sizes = [2, 32], strides = [1, 1]} : vector<2x128xf32> to vector<2x32xf32>
    %140 = math.tanh %139 : vector<2x32xf32>
    %141 = vector.extract_strided_slice %106 {offsets = [0, 96], sizes = [2, 32], strides = [1, 1]} : vector<2x128xf32> to vector<2x32xf32>
    %142 = arith.negf %141 : vector<2x32xf32>
    %143 = math.exp %142 : vector<2x32xf32>
    %cst_74 = arith.constant 1.000000e+00 : f32
    %144 = vector.broadcast %cst_74 : f32 to vector<2x32xf32>
    %145 = arith.addf %144, %143 : vector<2x32xf32>
    %146 = arith.divf %144, %145 : vector<2x32xf32>
    %147 = arith.mulf %118, %91 : vector<2x32xf32>
    %148 = arith.mulf %112, %120 : vector<2x32xf32>
    %149 = arith.addf %147, %148 : vector<2x32xf32>
    %150 = arith.mulf %138, %94 : vector<2x32xf32>
    %151 = arith.mulf %132, %140 : vector<2x32xf32>
    %152 = arith.addf %150, %151 : vector<2x32xf32>
    %153 = math.tanh %149 : vector<2x32xf32>
    %154 = arith.mulf %126, %153 : vector<2x32xf32>
    %155 = math.tanh %152 : vector<2x32xf32>
    %156 = arith.mulf %146, %155 : vector<2x32xf32>
    %c2_75 = arith.constant 2 : index
    %c0_76 = arith.constant 0 : index
    %157 = vector.load %arg11[%c2_75, %c0_76] : memref<16x32xf32, #tpu.memory_space<vmem>>, vector<2x32xf32>
    tpu.vector_store %arg11[%c2_75, %c0_76], %154 {strides = array<i32>} : memref<16x32xf32, #tpu.memory_space<vmem>>, vector<2x32xf32>,
    %c12_77 = arith.constant 12 : index
    %c0_78 = arith.constant 0 : index
    %158 = vector.load %arg12[%c12_77, %c0_78] : memref<16x32xf32, #tpu.memory_space<vmem>>, vector<2x32xf32>
    tpu.vector_store %arg12[%c12_77, %c0_78], %156 {strides = array<i32>} : memref<16x32xf32, #tpu.memory_space<vmem>>, vector<2x32xf32>,
    %c4 = arith.constant 4 : index
    %c0_79 = arith.constant 0 : index
    %159 = vector.load %arg15[%c4, %c0_79] : memref<16x128xf32, #tpu.memory_space<vmem>>, vector<2x128xf32>
    %cst_80 = arith.constant dense<0.000000e+00> : vector<2x128xf32>
    %160 = tpu.matmul %154, %32, %cst_80 {dimension_numbers = #tpu.dot_dimension_numbers<[1], [0], [0], [1], [0, 0, 1, 1], [], []>} : vector<2x32xf32>, vector<32x128xf32>, vector<2x128xf32> -> vector<2x128xf32>
    %161 = arith.addf %159, %160 : vector<2x128xf32>
    %c10 = arith.constant 10 : index
    %c0_81 = arith.constant 0 : index
    %162 = vector.load %arg16[%c10, %c0_81] : memref<16x128xf32, #tpu.memory_space<vmem>>, vector<2x128xf32>
    %cst_82 = arith.constant dense<0.000000e+00> : vector<2x128xf32>
    %163 = tpu.matmul %156, %34, %cst_82 {dimension_numbers = #tpu.dot_dimension_numbers<[1], [0], [0], [1], [0, 0, 1, 1], [], []>} : vector<2x32xf32>, vector<32x128xf32>, vector<2x128xf32> -> vector<2x128xf32>
    %164 = arith.addf %162, %163 : vector<2x128xf32>
    %165 = vector.extract_strided_slice %161 {offsets = [0, 0], sizes = [2, 32], strides = [1, 1]} : vector<2x128xf32> to vector<2x32xf32>
    %166 = arith.negf %165 : vector<2x32xf32>
    %167 = math.exp %166 : vector<2x32xf32>
    %cst_83 = arith.constant 1.000000e+00 : f32
    %168 = vector.broadcast %cst_83 : f32 to vector<2x32xf32>
    %169 = arith.addf %168, %167 : vector<2x32xf32>
    %170 = arith.divf %168, %169 : vector<2x32xf32>
    %171 = vector.extract_strided_slice %161 {offsets = [0, 32], sizes = [2, 32], strides = [1, 1]} : vector<2x128xf32> to vector<2x32xf32>
    %172 = arith.negf %171 : vector<2x32xf32>
    %173 = math.exp %172 : vector<2x32xf32>
    %cst_84 = arith.constant 1.000000e+00 : f32
    %174 = vector.broadcast %cst_84 : f32 to vector<2x32xf32>
    %175 = arith.addf %174, %173 : vector<2x32xf32>
    %176 = arith.divf %174, %175 : vector<2x32xf32>
    %177 = vector.extract_strided_slice %161 {offsets = [0, 64], sizes = [2, 32], strides = [1, 1]} : vector<2x128xf32> to vector<2x32xf32>
    %178 = math.tanh %177 : vector<2x32xf32>
    %179 = vector.extract_strided_slice %161 {offsets = [0, 96], sizes = [2, 32], strides = [1, 1]} : vector<2x128xf32> to vector<2x32xf32>
    %180 = arith.negf %179 : vector<2x32xf32>
    %181 = math.exp %180 : vector<2x32xf32>
    %cst_85 = arith.constant 1.000000e+00 : f32
    %182 = vector.broadcast %cst_85 : f32 to vector<2x32xf32>
    %183 = arith.addf %182, %181 : vector<2x32xf32>
    %184 = arith.divf %182, %183 : vector<2x32xf32>
    %185 = vector.extract_strided_slice %164 {offsets = [0, 0], sizes = [2, 32], strides = [1, 1]} : vector<2x128xf32> to vector<2x32xf32>
    %186 = arith.negf %185 : vector<2x32xf32>
    %187 = math.exp %186 : vector<2x32xf32>
    %cst_86 = arith.constant 1.000000e+00 : f32
    %188 = vector.broadcast %cst_86 : f32 to vector<2x32xf32>
    %189 = arith.addf %188, %187 : vector<2x32xf32>
    %190 = arith.divf %188, %189 : vector<2x32xf32>
    %191 = vector.extract_strided_slice %164 {offsets = [0, 32], sizes = [2, 32], strides = [1, 1]} : vector<2x128xf32> to vector<2x32xf32>
    %192 = arith.negf %191 : vector<2x32xf32>
    %193 = math.exp %192 : vector<2x32xf32>
    %cst_87 = arith.constant 1.000000e+00 : f32
    %194 = vector.broadcast %cst_87 : f32 to vector<2x32xf32>
    %195 = arith.addf %194, %193 : vector<2x32xf32>
    %196 = arith.divf %194, %195 : vector<2x32xf32>
    %197 = vector.extract_strided_slice %164 {offsets = [0, 64], sizes = [2, 32], strides = [1, 1]} : vector<2x128xf32> to vector<2x32xf32>
    %198 = math.tanh %197 : vector<2x32xf32>
    %199 = vector.extract_strided_slice %164 {offsets = [0, 96], sizes = [2, 32], strides = [1, 1]} : vector<2x128xf32> to vector<2x32xf32>
    %200 = arith.negf %199 : vector<2x32xf32>
    %201 = math.exp %200 : vector<2x32xf32>
    %cst_88 = arith.constant 1.000000e+00 : f32
    %202 = vector.broadcast %cst_88 : f32 to vector<2x32xf32>
    %203 = arith.addf %202, %201 : vector<2x32xf32>
    %204 = arith.divf %202, %203 : vector<2x32xf32>
    %205 = arith.mulf %176, %149 : vector<2x32xf32>
    %206 = arith.mulf %170, %178 : vector<2x32xf32>
    %207 = arith.addf %205, %206 : vector<2x32xf32>
    %208 = arith.mulf %196, %152 : vector<2x32xf32>
    %209 = arith.mulf %190, %198 : vector<2x32xf32>
    %210 = arith.addf %208, %209 : vector<2x32xf32>
    %211 = math.tanh %207 : vector<2x32xf32>
    %212 = arith.mulf %184, %211 : vector<2x32xf32>
    %213 = math.tanh %210 : vector<2x32xf32>
    %214 = arith.mulf %204, %213 : vector<2x32xf32>
    %c4_89 = arith.constant 4 : index
    %c0_90 = arith.constant 0 : index
    %215 = vector.load %arg11[%c4_89, %c0_90] : memref<16x32xf32, #tpu.memory_space<vmem>>, vector<2x32xf32>
    tpu.vector_store %arg11[%c4_89, %c0_90], %212 {strides = array<i32>} : memref<16x32xf32, #tpu.memory_space<vmem>>, vector<2x32xf32>,
    %c10_91 = arith.constant 10 : index
    %c0_92 = arith.constant 0 : index
    %216 = vector.load %arg12[%c10_91, %c0_92] : memref<16x32xf32, #tpu.memory_space<vmem>>, vector<2x32xf32>
    tpu.vector_store %arg12[%c10_91, %c0_92], %214 {strides = array<i32>} : memref<16x32xf32, #tpu.memory_space<vmem>>, vector<2x32xf32>,
    %c6 = arith.constant 6 : index
    %c0_93 = arith.constant 0 : index
    %217 = vector.load %arg15[%c6, %c0_93] : memref<16x128xf32, #tpu.memory_space<vmem>>, vector<2x128xf32>
    %cst_94 = arith.constant dense<0.000000e+00> : vector<2x128xf32>
    %218 = tpu.matmul %212, %32, %cst_94 {dimension_numbers = #tpu.dot_dimension_numbers<[1], [0], [0], [1], [0, 0, 1, 1], [], []>} : vector<2x32xf32>, vector<32x128xf32>, vector<2x128xf32> -> vector<2x128xf32>
    %219 = arith.addf %217, %218 : vector<2x128xf32>
    %c8 = arith.constant 8 : index
    %c0_95 = arith.constant 0 : index
    %220 = vector.load %arg16[%c8, %c0_95] : memref<16x128xf32, #tpu.memory_space<vmem>>, vector<2x128xf32>
    %cst_96 = arith.constant dense<0.000000e+00> : vector<2x128xf32>
    %221 = tpu.matmul %214, %34, %cst_96 {dimension_numbers = #tpu.dot_dimension_numbers<[1], [0], [0], [1], [0, 0, 1, 1], [], []>} : vector<2x32xf32>, vector<32x128xf32>, vector<2x128xf32> -> vector<2x128xf32>
    %222 = arith.addf %220, %221 : vector<2x128xf32>
    %223 = vector.extract_strided_slice %219 {offsets = [0, 0], sizes = [2, 32], strides = [1, 1]} : vector<2x128xf32> to vector<2x32xf32>
    %224 = arith.negf %223 : vector<2x32xf32>
    %225 = math.exp %224 : vector<2x32xf32>
    %cst_97 = arith.constant 1.000000e+00 : f32
    %226 = vector.broadcast %cst_97 : f32 to vector<2x32xf32>
    %227 = arith.addf %226, %225 : vector<2x32xf32>
    %228 = arith.divf %226, %227 : vector<2x32xf32>
    %229 = vector.extract_strided_slice %219 {offsets = [0, 32], sizes = [2, 32], strides = [1, 1]} : vector<2x128xf32> to vector<2x32xf32>
    %230 = arith.negf %229 : vector<2x32xf32>
    %231 = math.exp %230 : vector<2x32xf32>
    %cst_98 = arith.constant 1.000000e+00 : f32
    %232 = vector.broadcast %cst_98 : f32 to vector<2x32xf32>
    %233 = arith.addf %232, %231 : vector<2x32xf32>
    %234 = arith.divf %232, %233 : vector<2x32xf32>
    %235 = vector.extract_strided_slice %219 {offsets = [0, 64], sizes = [2, 32], strides = [1, 1]} : vector<2x128xf32> to vector<2x32xf32>
    %236 = math.tanh %235 : vector<2x32xf32>
    %237 = vector.extract_strided_slice %219 {offsets = [0, 96], sizes = [2, 32], strides = [1, 1]} : vector<2x128xf32> to vector<2x32xf32>
    %238 = arith.negf %237 : vector<2x32xf32>
    %239 = math.exp %238 : vector<2x32xf32>
    %cst_99 = arith.constant 1.000000e+00 : f32
    %240 = vector.broadcast %cst_99 : f32 to vector<2x32xf32>
    %241 = arith.addf %240, %239 : vector<2x32xf32>
    %242 = arith.divf %240, %241 : vector<2x32xf32>
    %243 = vector.extract_strided_slice %222 {offsets = [0, 0], sizes = [2, 32], strides = [1, 1]} : vector<2x128xf32> to vector<2x32xf32>
    %244 = arith.negf %243 : vector<2x32xf32>
    %245 = math.exp %244 : vector<2x32xf32>
    %cst_100 = arith.constant 1.000000e+00 : f32
    %246 = vector.broadcast %cst_100 : f32 to vector<2x32xf32>
    %247 = arith.addf %246, %245 : vector<2x32xf32>
    %248 = arith.divf %246, %247 : vector<2x32xf32>
    %249 = vector.extract_strided_slice %222 {offsets = [0, 32], sizes = [2, 32], strides = [1, 1]} : vector<2x128xf32> to vector<2x32xf32>
    %250 = arith.negf %249 : vector<2x32xf32>
    %251 = math.exp %250 : vector<2x32xf32>
    %cst_101 = arith.constant 1.000000e+00 : f32
    %252 = vector.broadcast %cst_101 : f32 to vector<2x32xf32>
    %253 = arith.addf %252, %251 : vector<2x32xf32>
    %254 = arith.divf %252, %253 : vector<2x32xf32>
    %255 = vector.extract_strided_slice %222 {offsets = [0, 64], sizes = [2, 32], strides = [1, 1]} : vector<2x128xf32> to vector<2x32xf32>
    %256 = math.tanh %255 : vector<2x32xf32>
    %257 = vector.extract_strided_slice %222 {offsets = [0, 96], sizes = [2, 32], strides = [1, 1]} : vector<2x128xf32> to vector<2x32xf32>
    %258 = arith.negf %257 : vector<2x32xf32>
    %259 = math.exp %258 : vector<2x32xf32>
    %cst_102 = arith.constant 1.000000e+00 : f32
    %260 = vector.broadcast %cst_102 : f32 to vector<2x32xf32>
    %261 = arith.addf %260, %259 : vector<2x32xf32>
    %262 = arith.divf %260, %261 : vector<2x32xf32>
    %263 = arith.mulf %234, %207 : vector<2x32xf32>
    %264 = arith.mulf %228, %236 : vector<2x32xf32>
    %265 = arith.addf %263, %264 : vector<2x32xf32>
    %266 = arith.mulf %254, %210 : vector<2x32xf32>
    %267 = arith.mulf %248, %256 : vector<2x32xf32>
    %268 = arith.addf %266, %267 : vector<2x32xf32>
    %269 = math.tanh %265 : vector<2x32xf32>
    %270 = arith.mulf %242, %269 : vector<2x32xf32>
    %271 = math.tanh %268 : vector<2x32xf32>
    %272 = arith.mulf %262, %271 : vector<2x32xf32>
    %c6_103 = arith.constant 6 : index
    %c0_104 = arith.constant 0 : index
    %273 = vector.load %arg11[%c6_103, %c0_104] : memref<16x32xf32, #tpu.memory_space<vmem>>, vector<2x32xf32>
    tpu.vector_store %arg11[%c6_103, %c0_104], %270 {strides = array<i32>} : memref<16x32xf32, #tpu.memory_space<vmem>>, vector<2x32xf32>,
    %c8_105 = arith.constant 8 : index
    %c0_106 = arith.constant 0 : index
    %274 = vector.load %arg12[%c8_105, %c0_106] : memref<16x32xf32, #tpu.memory_space<vmem>>, vector<2x32xf32>
    tpu.vector_store %arg12[%c8_105, %c0_106], %272 {strides = array<i32>} : memref<16x32xf32, #tpu.memory_space<vmem>>, vector<2x32xf32>,
    %c8_107 = arith.constant 8 : index
    %c0_108 = arith.constant 0 : index
    %275 = vector.load %arg15[%c8_107, %c0_108] : memref<16x128xf32, #tpu.memory_space<vmem>>, vector<2x128xf32>
    %cst_109 = arith.constant dense<0.000000e+00> : vector<2x128xf32>
    %276 = tpu.matmul %270, %32, %cst_109 {dimension_numbers = #tpu.dot_dimension_numbers<[1], [0], [0], [1], [0, 0, 1, 1], [], []>} : vector<2x32xf32>, vector<32x128xf32>, vector<2x128xf32> -> vector<2x128xf32>
    %277 = arith.addf %275, %276 : vector<2x128xf32>
    %c6_110 = arith.constant 6 : index
    %c0_111 = arith.constant 0 : index
    %278 = vector.load %arg16[%c6_110, %c0_111] : memref<16x128xf32, #tpu.memory_space<vmem>>, vector<2x128xf32>
    %cst_112 = arith.constant dense<0.000000e+00> : vector<2x128xf32>
    %279 = tpu.matmul %272, %34, %cst_112 {dimension_numbers = #tpu.dot_dimension_numbers<[1], [0], [0], [1], [0, 0, 1, 1], [], []>} : vector<2x32xf32>, vector<32x128xf32>, vector<2x128xf32> -> vector<2x128xf32>
    %280 = arith.addf %278, %279 : vector<2x128xf32>
    %281 = vector.extract_strided_slice %277 {offsets = [0, 0], sizes = [2, 32], strides = [1, 1]} : vector<2x128xf32> to vector<2x32xf32>
    %282 = arith.negf %281 : vector<2x32xf32>
    %283 = math.exp %282 : vector<2x32xf32>
    %cst_113 = arith.constant 1.000000e+00 : f32
    %284 = vector.broadcast %cst_113 : f32 to vector<2x32xf32>
    %285 = arith.addf %284, %283 : vector<2x32xf32>
    %286 = arith.divf %284, %285 : vector<2x32xf32>
    %287 = vector.extract_strided_slice %277 {offsets = [0, 32], sizes = [2, 32], strides = [1, 1]} : vector<2x128xf32> to vector<2x32xf32>
    %288 = arith.negf %287 : vector<2x32xf32>
    %289 = math.exp %288 : vector<2x32xf32>
    %cst_114 = arith.constant 1.000000e+00 : f32
    %290 = vector.broadcast %cst_114 : f32 to vector<2x32xf32>
    %291 = arith.addf %290, %289 : vector<2x32xf32>
    %292 = arith.divf %290, %291 : vector<2x32xf32>
    %293 = vector.extract_strided_slice %277 {offsets = [0, 64], sizes = [2, 32], strides = [1, 1]} : vector<2x128xf32> to vector<2x32xf32>
    %294 = math.tanh %293 : vector<2x32xf32>
    %295 = vector.extract_strided_slice %277 {offsets = [0, 96], sizes = [2, 32], strides = [1, 1]} : vector<2x128xf32> to vector<2x32xf32>
    %296 = arith.negf %295 : vector<2x32xf32>
    %297 = math.exp %296 : vector<2x32xf32>
    %cst_115 = arith.constant 1.000000e+00 : f32
    %298 = vector.broadcast %cst_115 : f32 to vector<2x32xf32>
    %299 = arith.addf %298, %297 : vector<2x32xf32>
    %300 = arith.divf %298, %299 : vector<2x32xf32>
    %301 = vector.extract_strided_slice %280 {offsets = [0, 0], sizes = [2, 32], strides = [1, 1]} : vector<2x128xf32> to vector<2x32xf32>
    %302 = arith.negf %301 : vector<2x32xf32>
    %303 = math.exp %302 : vector<2x32xf32>
    %cst_116 = arith.constant 1.000000e+00 : f32
    %304 = vector.broadcast %cst_116 : f32 to vector<2x32xf32>
    %305 = arith.addf %304, %303 : vector<2x32xf32>
    %306 = arith.divf %304, %305 : vector<2x32xf32>
    %307 = vector.extract_strided_slice %280 {offsets = [0, 32], sizes = [2, 32], strides = [1, 1]} : vector<2x128xf32> to vector<2x32xf32>
    %308 = arith.negf %307 : vector<2x32xf32>
    %309 = math.exp %308 : vector<2x32xf32>
    %cst_117 = arith.constant 1.000000e+00 : f32
    %310 = vector.broadcast %cst_117 : f32 to vector<2x32xf32>
    %311 = arith.addf %310, %309 : vector<2x32xf32>
    %312 = arith.divf %310, %311 : vector<2x32xf32>
    %313 = vector.extract_strided_slice %280 {offsets = [0, 64], sizes = [2, 32], strides = [1, 1]} : vector<2x128xf32> to vector<2x32xf32>
    %314 = math.tanh %313 : vector<2x32xf32>
    %315 = vector.extract_strided_slice %280 {offsets = [0, 96], sizes = [2, 32], strides = [1, 1]} : vector<2x128xf32> to vector<2x32xf32>
    %316 = arith.negf %315 : vector<2x32xf32>
    %317 = math.exp %316 : vector<2x32xf32>
    %cst_118 = arith.constant 1.000000e+00 : f32
    %318 = vector.broadcast %cst_118 : f32 to vector<2x32xf32>
    %319 = arith.addf %318, %317 : vector<2x32xf32>
    %320 = arith.divf %318, %319 : vector<2x32xf32>
    %321 = arith.mulf %292, %265 : vector<2x32xf32>
    %322 = arith.mulf %286, %294 : vector<2x32xf32>
    %323 = arith.addf %321, %322 : vector<2x32xf32>
    %324 = arith.mulf %312, %268 : vector<2x32xf32>
    %325 = arith.mulf %306, %314 : vector<2x32xf32>
    %326 = arith.addf %324, %325 : vector<2x32xf32>
    %327 = math.tanh %323 : vector<2x32xf32>
    %328 = arith.mulf %300, %327 : vector<2x32xf32>
    %329 = math.tanh %326 : vector<2x32xf32>
    %330 = arith.mulf %320, %329 : vector<2x32xf32>
    %c8_119 = arith.constant 8 : index
    %c0_120 = arith.constant 0 : index
    %331 = vector.load %arg11[%c8_119, %c0_120] : memref<16x32xf32, #tpu.memory_space<vmem>>, vector<2x32xf32>
    tpu.vector_store %arg11[%c8_119, %c0_120], %328 {strides = array<i32>} : memref<16x32xf32, #tpu.memory_space<vmem>>, vector<2x32xf32>,
    %c6_121 = arith.constant 6 : index
    %c0_122 = arith.constant 0 : index
    %332 = vector.load %arg12[%c6_121, %c0_122] : memref<16x32xf32, #tpu.memory_space<vmem>>, vector<2x32xf32>
    tpu.vector_store %arg12[%c6_121, %c0_122], %330 {strides = array<i32>} : memref<16x32xf32, #tpu.memory_space<vmem>>, vector<2x32xf32>,
    %c10_123 = arith.constant 10 : index
    %c0_124 = arith.constant 0 : index
    %333 = vector.load %arg15[%c10_123, %c0_124] : memref<16x128xf32, #tpu.memory_space<vmem>>, vector<2x128xf32>
    %cst_125 = arith.constant dense<0.000000e+00> : vector<2x128xf32>
    %334 = tpu.matmul %328, %32, %cst_125 {dimension_numbers = #tpu.dot_dimension_numbers<[1], [0], [0], [1], [0, 0, 1, 1], [], []>} : vector<2x32xf32>, vector<32x128xf32>, vector<2x128xf32> -> vector<2x128xf32>
    %335 = arith.addf %333, %334 : vector<2x128xf32>
    %c4_126 = arith.constant 4 : index
    %c0_127 = arith.constant 0 : index
    %336 = vector.load %arg16[%c4_126, %c0_127] : memref<16x128xf32, #tpu.memory_space<vmem>>, vector<2x128xf32>
    %cst_128 = arith.constant dense<0.000000e+00> : vector<2x128xf32>
    %337 = tpu.matmul %330, %34, %cst_128 {dimension_numbers = #tpu.dot_dimension_numbers<[1], [0], [0], [1], [0, 0, 1, 1], [], []>} : vector<2x32xf32>, vector<32x128xf32>, vector<2x128xf32> -> vector<2x128xf32>
    %338 = arith.addf %336, %337 : vector<2x128xf32>
    %339 = vector.extract_strided_slice %335 {offsets = [0, 0], sizes = [2, 32], strides = [1, 1]} : vector<2x128xf32> to vector<2x32xf32>
    %340 = arith.negf %339 : vector<2x32xf32>
    %341 = math.exp %340 : vector<2x32xf32>
    %cst_129 = arith.constant 1.000000e+00 : f32
    %342 = vector.broadcast %cst_129 : f32 to vector<2x32xf32>
    %343 = arith.addf %342, %341 : vector<2x32xf32>
    %344 = arith.divf %342, %343 : vector<2x32xf32>
    %345 = vector.extract_strided_slice %335 {offsets = [0, 32], sizes = [2, 32], strides = [1, 1]} : vector<2x128xf32> to vector<2x32xf32>
    %346 = arith.negf %345 : vector<2x32xf32>
    %347 = math.exp %346 : vector<2x32xf32>
    %cst_130 = arith.constant 1.000000e+00 : f32
    %348 = vector.broadcast %cst_130 : f32 to vector<2x32xf32>
    %349 = arith.addf %348, %347 : vector<2x32xf32>
    %350 = arith.divf %348, %349 : vector<2x32xf32>
    %351 = vector.extract_strided_slice %335 {offsets = [0, 64], sizes = [2, 32], strides = [1, 1]} : vector<2x128xf32> to vector<2x32xf32>
    %352 = math.tanh %351 : vector<2x32xf32>
    %353 = vector.extract_strided_slice %335 {offsets = [0, 96], sizes = [2, 32], strides = [1, 1]} : vector<2x128xf32> to vector<2x32xf32>
    %354 = arith.negf %353 : vector<2x32xf32>
    %355 = math.exp %354 : vector<2x32xf32>
    %cst_131 = arith.constant 1.000000e+00 : f32
    %356 = vector.broadcast %cst_131 : f32 to vector<2x32xf32>
    %357 = arith.addf %356, %355 : vector<2x32xf32>
    %358 = arith.divf %356, %357 : vector<2x32xf32>
    %359 = vector.extract_strided_slice %338 {offsets = [0, 0], sizes = [2, 32], strides = [1, 1]} : vector<2x128xf32> to vector<2x32xf32>
    %360 = arith.negf %359 : vector<2x32xf32>
    %361 = math.exp %360 : vector<2x32xf32>
    %cst_132 = arith.constant 1.000000e+00 : f32
    %362 = vector.broadcast %cst_132 : f32 to vector<2x32xf32>
    %363 = arith.addf %362, %361 : vector<2x32xf32>
    %364 = arith.divf %362, %363 : vector<2x32xf32>
    %365 = vector.extract_strided_slice %338 {offsets = [0, 32], sizes = [2, 32], strides = [1, 1]} : vector<2x128xf32> to vector<2x32xf32>
    %366 = arith.negf %365 : vector<2x32xf32>
    %367 = math.exp %366 : vector<2x32xf32>
    %cst_133 = arith.constant 1.000000e+00 : f32
    %368 = vector.broadcast %cst_133 : f32 to vector<2x32xf32>
    %369 = arith.addf %368, %367 : vector<2x32xf32>
    %370 = arith.divf %368, %369 : vector<2x32xf32>
    %371 = vector.extract_strided_slice %338 {offsets = [0, 64], sizes = [2, 32], strides = [1, 1]} : vector<2x128xf32> to vector<2x32xf32>
    %372 = math.tanh %371 : vector<2x32xf32>
    %373 = vector.extract_strided_slice %338 {offsets = [0, 96], sizes = [2, 32], strides = [1, 1]} : vector<2x128xf32> to vector<2x32xf32>
    %374 = arith.negf %373 : vector<2x32xf32>
    %375 = math.exp %374 : vector<2x32xf32>
    %cst_134 = arith.constant 1.000000e+00 : f32
    %376 = vector.broadcast %cst_134 : f32 to vector<2x32xf32>
    %377 = arith.addf %376, %375 : vector<2x32xf32>
    %378 = arith.divf %376, %377 : vector<2x32xf32>
    %379 = arith.mulf %350, %323 : vector<2x32xf32>
    %380 = arith.mulf %344, %352 : vector<2x32xf32>
    %381 = arith.addf %379, %380 : vector<2x32xf32>
    %382 = arith.mulf %370, %326 : vector<2x32xf32>
    %383 = arith.mulf %364, %372 : vector<2x32xf32>
    %384 = arith.addf %382, %383 : vector<2x32xf32>
    %385 = math.tanh %381 : vector<2x32xf32>
    %386 = arith.mulf %358, %385 : vector<2x32xf32>
    %387 = math.tanh %384 : vector<2x32xf32>
    %388 = arith.mulf %378, %387 : vector<2x32xf32>
    %c10_135 = arith.constant 10 : index
    %c0_136 = arith.constant 0 : index
    %389 = vector.load %arg11[%c10_135, %c0_136] : memref<16x32xf32, #tpu.memory_space<vmem>>, vector<2x32xf32>
    tpu.vector_store %arg11[%c10_135, %c0_136], %386 {strides = array<i32>} : memref<16x32xf32, #tpu.memory_space<vmem>>, vector<2x32xf32>,
    %c4_137 = arith.constant 4 : index
    %c0_138 = arith.constant 0 : index
    %390 = vector.load %arg12[%c4_137, %c0_138] : memref<16x32xf32, #tpu.memory_space<vmem>>, vector<2x32xf32>
    tpu.vector_store %arg12[%c4_137, %c0_138], %388 {strides = array<i32>} : memref<16x32xf32, #tpu.memory_space<vmem>>, vector<2x32xf32>,
    %c12_139 = arith.constant 12 : index
    %c0_140 = arith.constant 0 : index
    %391 = vector.load %arg15[%c12_139, %c0_140] : memref<16x128xf32, #tpu.memory_space<vmem>>, vector<2x128xf32>
    %cst_141 = arith.constant dense<0.000000e+00> : vector<2x128xf32>
    %392 = tpu.matmul %386, %32, %cst_141 {dimension_numbers = #tpu.dot_dimension_numbers<[1], [0], [0], [1], [0, 0, 1, 1], [], []>} : vector<2x32xf32>, vector<32x128xf32>, vector<2x128xf32> -> vector<2x128xf32>
    %393 = arith.addf %391, %392 : vector<2x128xf32>
    %c2_142 = arith.constant 2 : index
    %c0_143 = arith.constant 0 : index
    %394 = vector.load %arg16[%c2_142, %c0_143] : memref<16x128xf32, #tpu.memory_space<vmem>>, vector<2x128xf32>
    %cst_144 = arith.constant dense<0.000000e+00> : vector<2x128xf32>
    %395 = tpu.matmul %388, %34, %cst_144 {dimension_numbers = #tpu.dot_dimension_numbers<[1], [0], [0], [1], [0, 0, 1, 1], [], []>} : vector<2x32xf32>, vector<32x128xf32>, vector<2x128xf32> -> vector<2x128xf32>
    %396 = arith.addf %394, %395 : vector<2x128xf32>
    %397 = vector.extract_strided_slice %393 {offsets = [0, 0], sizes = [2, 32], strides = [1, 1]} : vector<2x128xf32> to vector<2x32xf32>
    %398 = arith.negf %397 : vector<2x32xf32>
    %399 = math.exp %398 : vector<2x32xf32>
    %cst_145 = arith.constant 1.000000e+00 : f32
    %400 = vector.broadcast %cst_145 : f32 to vector<2x32xf32>
    %401 = arith.addf %400, %399 : vector<2x32xf32>
    %402 = arith.divf %400, %401 : vector<2x32xf32>
    %403 = vector.extract_strided_slice %393 {offsets = [0, 32], sizes = [2, 32], strides = [1, 1]} : vector<2x128xf32> to vector<2x32xf32>
    %404 = arith.negf %403 : vector<2x32xf32>
    %405 = math.exp %404 : vector<2x32xf32>
    %cst_146 = arith.constant 1.000000e+00 : f32
    %406 = vector.broadcast %cst_146 : f32 to vector<2x32xf32>
    %407 = arith.addf %406, %405 : vector<2x32xf32>
    %408 = arith.divf %406, %407 : vector<2x32xf32>
    %409 = vector.extract_strided_slice %393 {offsets = [0, 64], sizes = [2, 32], strides = [1, 1]} : vector<2x128xf32> to vector<2x32xf32>
    %410 = math.tanh %409 : vector<2x32xf32>
    %411 = vector.extract_strided_slice %393 {offsets = [0, 96], sizes = [2, 32], strides = [1, 1]} : vector<2x128xf32> to vector<2x32xf32>
    %412 = arith.negf %411 : vector<2x32xf32>
    %413 = math.exp %412 : vector<2x32xf32>
    %cst_147 = arith.constant 1.000000e+00 : f32
    %414 = vector.broadcast %cst_147 : f32 to vector<2x32xf32>
    %415 = arith.addf %414, %413 : vector<2x32xf32>
    %416 = arith.divf %414, %415 : vector<2x32xf32>
    %417 = vector.extract_strided_slice %396 {offsets = [0, 0], sizes = [2, 32], strides = [1, 1]} : vector<2x128xf32> to vector<2x32xf32>
    %418 = arith.negf %417 : vector<2x32xf32>
    %419 = math.exp %418 : vector<2x32xf32>
    %cst_148 = arith.constant 1.000000e+00 : f32
    %420 = vector.broadcast %cst_148 : f32 to vector<2x32xf32>
    %421 = arith.addf %420, %419 : vector<2x32xf32>
    %422 = arith.divf %420, %421 : vector<2x32xf32>
    %423 = vector.extract_strided_slice %396 {offsets = [0, 32], sizes = [2, 32], strides = [1, 1]} : vector<2x128xf32> to vector<2x32xf32>
    %424 = arith.negf %423 : vector<2x32xf32>
    %425 = math.exp %424 : vector<2x32xf32>
    %cst_149 = arith.constant 1.000000e+00 : f32
    %426 = vector.broadcast %cst_149 : f32 to vector<2x32xf32>
    %427 = arith.addf %426, %425 : vector<2x32xf32>
    %428 = arith.divf %426, %427 : vector<2x32xf32>
    %429 = vector.extract_strided_slice %396 {offsets = [0, 64], sizes = [2, 32], strides = [1, 1]} : vector<2x128xf32> to vector<2x32xf32>
    %430 = math.tanh %429 : vector<2x32xf32>
    %431 = vector.extract_strided_slice %396 {offsets = [0, 96], sizes = [2, 32], strides = [1, 1]} : vector<2x128xf32> to vector<2x32xf32>
    %432 = arith.negf %431 : vector<2x32xf32>
    %433 = math.exp %432 : vector<2x32xf32>
    %cst_150 = arith.constant 1.000000e+00 : f32
    %434 = vector.broadcast %cst_150 : f32 to vector<2x32xf32>
    %435 = arith.addf %434, %433 : vector<2x32xf32>
    %436 = arith.divf %434, %435 : vector<2x32xf32>
    %437 = arith.mulf %408, %381 : vector<2x32xf32>
    %438 = arith.mulf %402, %410 : vector<2x32xf32>
    %439 = arith.addf %437, %438 : vector<2x32xf32>
    %440 = arith.mulf %428, %384 : vector<2x32xf32>
    %441 = arith.mulf %422, %430 : vector<2x32xf32>
    %442 = arith.addf %440, %441 : vector<2x32xf32>
    %443 = math.tanh %439 : vector<2x32xf32>
    %444 = arith.mulf %416, %443 : vector<2x32xf32>
    %445 = math.tanh %442 : vector<2x32xf32>
    %446 = arith.mulf %436, %445 : vector<2x32xf32>
    %c12_151 = arith.constant 12 : index
    %c0_152 = arith.constant 0 : index
    %447 = vector.load %arg11[%c12_151, %c0_152] : memref<16x32xf32, #tpu.memory_space<vmem>>, vector<2x32xf32>
    tpu.vector_store %arg11[%c12_151, %c0_152], %444 {strides = array<i32>} : memref<16x32xf32, #tpu.memory_space<vmem>>, vector<2x32xf32>,
    %c2_153 = arith.constant 2 : index
    %c0_154 = arith.constant 0 : index
    %448 = vector.load %arg12[%c2_153, %c0_154] : memref<16x32xf32, #tpu.memory_space<vmem>>, vector<2x32xf32>
    tpu.vector_store %arg12[%c2_153, %c0_154], %446 {strides = array<i32>} : memref<16x32xf32, #tpu.memory_space<vmem>>, vector<2x32xf32>,
    %c14_155 = arith.constant 14 : index
    %c0_156 = arith.constant 0 : index
    %449 = vector.load %arg15[%c14_155, %c0_156] : memref<16x128xf32, #tpu.memory_space<vmem>>, vector<2x128xf32>
    %cst_157 = arith.constant dense<0.000000e+00> : vector<2x128xf32>
    %450 = tpu.matmul %444, %32, %cst_157 {dimension_numbers = #tpu.dot_dimension_numbers<[1], [0], [0], [1], [0, 0, 1, 1], [], []>} : vector<2x32xf32>, vector<32x128xf32>, vector<2x128xf32> -> vector<2x128xf32>
    %451 = arith.addf %449, %450 : vector<2x128xf32>
    %c0_158 = arith.constant 0 : index
    %c0_159 = arith.constant 0 : index
    %452 = vector.load %arg16[%c0_158, %c0_159] : memref<16x128xf32, #tpu.memory_space<vmem>>, vector<2x128xf32>
    %cst_160 = arith.constant dense<0.000000e+00> : vector<2x128xf32>
    %453 = tpu.matmul %446, %34, %cst_160 {dimension_numbers = #tpu.dot_dimension_numbers<[1], [0], [0], [1], [0, 0, 1, 1], [], []>} : vector<2x32xf32>, vector<32x128xf32>, vector<2x128xf32> -> vector<2x128xf32>
    %454 = arith.addf %452, %453 : vector<2x128xf32>
    %455 = vector.extract_strided_slice %451 {offsets = [0, 0], sizes = [2, 32], strides = [1, 1]} : vector<2x128xf32> to vector<2x32xf32>
    %456 = arith.negf %455 : vector<2x32xf32>
    %457 = math.exp %456 : vector<2x32xf32>
    %cst_161 = arith.constant 1.000000e+00 : f32
    %458 = vector.broadcast %cst_161 : f32 to vector<2x32xf32>
    %459 = arith.addf %458, %457 : vector<2x32xf32>
    %460 = arith.divf %458, %459 : vector<2x32xf32>
    %461 = vector.extract_strided_slice %451 {offsets = [0, 32], sizes = [2, 32], strides = [1, 1]} : vector<2x128xf32> to vector<2x32xf32>
    %462 = arith.negf %461 : vector<2x32xf32>
    %463 = math.exp %462 : vector<2x32xf32>
    %cst_162 = arith.constant 1.000000e+00 : f32
    %464 = vector.broadcast %cst_162 : f32 to vector<2x32xf32>
    %465 = arith.addf %464, %463 : vector<2x32xf32>
    %466 = arith.divf %464, %465 : vector<2x32xf32>
    %467 = vector.extract_strided_slice %451 {offsets = [0, 64], sizes = [2, 32], strides = [1, 1]} : vector<2x128xf32> to vector<2x32xf32>
    %468 = math.tanh %467 : vector<2x32xf32>
    %469 = vector.extract_strided_slice %451 {offsets = [0, 96], sizes = [2, 32], strides = [1, 1]} : vector<2x128xf32> to vector<2x32xf32>
    %470 = arith.negf %469 : vector<2x32xf32>
    %471 = math.exp %470 : vector<2x32xf32>
    %cst_163 = arith.constant 1.000000e+00 : f32
    %472 = vector.broadcast %cst_163 : f32 to vector<2x32xf32>
    %473 = arith.addf %472, %471 : vector<2x32xf32>
    %474 = arith.divf %472, %473 : vector<2x32xf32>
    %475 = vector.extract_strided_slice %454 {offsets = [0, 0], sizes = [2, 32], strides = [1, 1]} : vector<2x128xf32> to vector<2x32xf32>
    %476 = arith.negf %475 : vector<2x32xf32>
    %477 = math.exp %476 : vector<2x32xf32>
    %cst_164 = arith.constant 1.000000e+00 : f32
    %478 = vector.broadcast %cst_164 : f32 to vector<2x32xf32>
    %479 = arith.addf %478, %477 : vector<2x32xf32>
    %480 = arith.divf %478, %479 : vector<2x32xf32>
    %481 = vector.extract_strided_slice %454 {offsets = [0, 32], sizes = [2, 32], strides = [1, 1]} : vector<2x128xf32> to vector<2x32xf32>
    %482 = arith.negf %481 : vector<2x32xf32>
    %483 = math.exp %482 : vector<2x32xf32>
    %cst_165 = arith.constant 1.000000e+00 : f32
    %484 = vector.broadcast %cst_165 : f32 to vector<2x32xf32>
    %485 = arith.addf %484, %483 : vector<2x32xf32>
    %486 = arith.divf %484, %485 : vector<2x32xf32>
    %487 = vector.extract_strided_slice %454 {offsets = [0, 64], sizes = [2, 32], strides = [1, 1]} : vector<2x128xf32> to vector<2x32xf32>
    %488 = math.tanh %487 : vector<2x32xf32>
    %489 = vector.extract_strided_slice %454 {offsets = [0, 96], sizes = [2, 32], strides = [1, 1]} : vector<2x128xf32> to vector<2x32xf32>
    %490 = arith.negf %489 : vector<2x32xf32>
    %491 = math.exp %490 : vector<2x32xf32>
    %cst_166 = arith.constant 1.000000e+00 : f32
    %492 = vector.broadcast %cst_166 : f32 to vector<2x32xf32>
    %493 = arith.addf %492, %491 : vector<2x32xf32>
    %494 = arith.divf %492, %493 : vector<2x32xf32>
    %495 = arith.mulf %466, %439 : vector<2x32xf32>
    %496 = arith.mulf %460, %468 : vector<2x32xf32>
    %497 = arith.addf %495, %496 : vector<2x32xf32>
    %498 = arith.mulf %486, %442 : vector<2x32xf32>
    %499 = arith.mulf %480, %488 : vector<2x32xf32>
    %500 = arith.addf %498, %499 : vector<2x32xf32>
    %501 = math.tanh %497 : vector<2x32xf32>
    %502 = arith.mulf %474, %501 : vector<2x32xf32>
    %503 = math.tanh %500 : vector<2x32xf32>
    %504 = arith.mulf %494, %503 : vector<2x32xf32>
    %c14_167 = arith.constant 14 : index
    %c0_168 = arith.constant 0 : index
    %505 = vector.load %arg11[%c14_167, %c0_168] : memref<16x32xf32, #tpu.memory_space<vmem>>, vector<2x32xf32>
    tpu.vector_store %arg11[%c14_167, %c0_168], %502 {strides = array<i32>} : memref<16x32xf32, #tpu.memory_space<vmem>>, vector<2x32xf32>,
    %c0_169 = arith.constant 0 : index
    %c0_170 = arith.constant 0 : index
    %506 = vector.load %arg12[%c0_169, %c0_170] : memref<16x32xf32, #tpu.memory_space<vmem>>, vector<2x32xf32>
    tpu.vector_store %arg12[%c0_169, %c0_170], %504 {strides = array<i32>} : memref<16x32xf32, #tpu.memory_space<vmem>>, vector<2x32xf32>,
    %c0_171 = arith.constant 0 : index
    %c0_172 = arith.constant 0 : index
    %c0_173 = arith.constant 0 : index
    %507 = vector.load %arg13[%c0_171, %c0_172, %c0_173] : memref<2x2x32xf32, #tpu.memory_space<vmem>>, vector<1x2x32xf32>
    %508 = vector.shape_cast %507 : vector<1x2x32xf32> to vector<2x32xf32>
    %509 = vector.shape_cast %502 : vector<2x32xf32> to vector<1x2x32xf32>
    tpu.vector_store %arg13[%c0_171, %c0_172, %c0_173], %509 {strides = array<i32>} : memref<2x2x32xf32, #tpu.memory_space<vmem>>, vector<1x2x32xf32>,
    %c1_174 = arith.constant 1 : index
    %c0_175 = arith.constant 0 : index
    %c0_176 = arith.constant 0 : index
    %510 = vector.load %arg13[%c1_174, %c0_175, %c0_176] : memref<2x2x32xf32, #tpu.memory_space<vmem>>, vector<1x2x32xf32>
    %511 = vector.shape_cast %510 : vector<1x2x32xf32> to vector<2x32xf32>
    %512 = vector.shape_cast %504 : vector<2x32xf32> to vector<1x2x32xf32>
    tpu.vector_store %arg13[%c1_174, %c0_175, %c0_176], %512 {strides = array<i32>} : memref<2x2x32xf32, #tpu.memory_space<vmem>>, vector<1x2x32xf32>,
    %c0_177 = arith.constant 0 : index
    %c0_178 = arith.constant 0 : index
    %c0_179 = arith.constant 0 : index
    %513 = vector.load %arg14[%c0_177, %c0_178, %c0_179] : memref<2x2x32xf32, #tpu.memory_space<vmem>>, vector<1x2x32xf32>
    %514 = vector.shape_cast %513 : vector<1x2x32xf32> to vector<2x32xf32>
    %515 = vector.shape_cast %497 : vector<2x32xf32> to vector<1x2x32xf32>
    tpu.vector_store %arg14[%c0_177, %c0_178, %c0_179], %515 {strides = array<i32>} : memref<2x2x32xf32, #tpu.memory_space<vmem>>, vector<1x2x32xf32>,
    %c1_180 = arith.constant 1 : index
    %c0_181 = arith.constant 0 : index
    %c0_182 = arith.constant 0 : index
    %516 = vector.load %arg14[%c1_180, %c0_181, %c0_182] : memref<2x2x32xf32, #tpu.memory_space<vmem>>, vector<1x2x32xf32>
    %517 = vector.shape_cast %516 : vector<1x2x32xf32> to vector<2x32xf32>
    %518 = vector.shape_cast %500 : vector<2x32xf32> to vector<1x2x32xf32>
    tpu.vector_store %arg14[%c1_180, %c0_181, %c0_182], %518 {strides = array<i32>} : memref<2x2x32xf32, #tpu.memory_space<vmem>>, vector<1x2x32xf32>,
    return
  }
  func.func @transform_0(%arg0: i32) -> (i32, i32) {
    %c0_i32 = arith.constant 0 : i32
    %c0_i32_0 = arith.constant 0 : i32
    return %arg0, %c0_i32 : i32, i32
  }
  func.func @transform_1(%arg0: i32) -> (i32, i32) {
    %c0_i32 = arith.constant 0 : i32
    %c0_i32_0 = arith.constant 0 : i32
    return %arg0, %c0_i32 : i32, i32
  }
  func.func @transform_2(%arg0: i32) -> (i32, i32) {
    %c0_i32 = arith.constant 0 : i32
    %0 = arith.subi %c0_i32, %arg0 : i32
    %c0_i32_0 = arith.constant 0 : i32
    %c0_i32_1 = arith.constant 0 : i32
    return %0, %c0_i32_0 : i32, i32
  }
  func.func @transform_3(%arg0: i32) -> (i32, i32) {
    %c0_i32 = arith.constant 0 : i32
    %0 = arith.subi %c0_i32, %arg0 : i32
    %c0_i32_0 = arith.constant 0 : i32
    %c0_i32_1 = arith.constant 0 : i32
    return %0, %c0_i32_0 : i32, i32
  }
  func.func @transform_4(%arg0: i32) -> (i32, i32, i32) {
    %c0_i32 = arith.constant 0 : i32
    %c0_i32_0 = arith.constant 0 : i32
    %c0_i32_1 = arith.constant 0 : i32
    %c0_i32_2 = arith.constant 0 : i32
    return %c0_i32, %c0_i32_0, %c0_i32_1 : i32, i32, i32
  }
  func.func @transform_5(%arg0: i32) -> (i32, i32, i32) {
    %c0_i32 = arith.constant 0 : i32
    %c0_i32_0 = arith.constant 0 : i32
    %c0_i32_1 = arith.constant 0 : i32
    %c0_i32_2 = arith.constant 0 : i32
    return %c0_i32, %c0_i32_0, %c0_i32_1 : i32, i32, i32
  }
  func.func @transform_6(%arg0: i32) -> (i32, i32, i32) {
    %c0_i32 = arith.constant 0 : i32
    %c0_i32_0 = arith.constant 0 : i32
    %c0_i32_1 = arith.constant 0 : i32
    %c0_i32_2 = arith.constant 0 : i32
    return %c0_i32, %c0_i32_0, %c0_i32_1 : i32, i32, i32
  }
  func.func @transform_7(%arg0: i32) -> (i32, i32, i32) {
    %c0_i32 = arith.constant 0 : i32
    %c0_i32_0 = arith.constant 0 : i32
    %c0_i32_1 = arith.constant 0 : i32
    %c0_i32_2 = arith.constant 0 : i32
    return %c0_i32, %c0_i32_0, %c0_i32_1 : i32, i32, i32
  }
  func.func @transform_8(%arg0: i32) -> (i32, i32, i32) {
    %c0_i32 = arith.constant 0 : i32
    %c0_i32_0 = arith.constant 0 : i32
    %c0_i32_1 = arith.constant 0 : i32
    %c0_i32_2 = arith.constant 0 : i32
    return %c0_i32, %c0_i32_0, %c0_i32_1 : i32, i32, i32
  }
  func.func @transform_9(%arg0: i32) -> (i32, i32, i32) {
    %c0_i32 = arith.constant 0 : i32
    %c0_i32_0 = arith.constant 0 : i32
    %c0_i32_1 = arith.constant 0 : i32
    %c0_i32_2 = arith.constant 0 : i32
    return %c0_i32, %c0_i32_0, %c0_i32_1 : i32, i32, i32
  }
  func.func @transform_10(%arg0: i32) -> (i32, i32) {
    %c0_i32 = arith.constant 0 : i32
    %c0_i32_0 = arith.constant 0 : i32
    return %arg0, %c0_i32 : i32, i32
  }
  func.func @transform_11(%arg0: i32) -> (i32, i32) {
    %c0_i32 = arith.constant 0 : i32
    %0 = arith.subi %c0_i32, %arg0 : i32
    %c0_i32_0 = arith.constant 0 : i32
    %c0_i32_1 = arith.constant 0 : i32
    return %0, %c0_i32_0 : i32, i32
  }
  func.func @transform_12(%arg0: i32) -> (i32, i32, i32) {
    %c0_i32 = arith.constant 0 : i32
    %c0_i32_0 = arith.constant 0 : i32
    %c0_i32_1 = arith.constant 0 : i32
    %c0_i32_2 = arith.constant 0 : i32
    return %c0_i32, %c0_i32_0, %c0_i32_1 : i32, i32, i32
  }
  func.func @transform_13(%arg0: i32) -> (i32, i32, i32) {
    %c0_i32 = arith.constant 0 : i32
    %c0_i32_0 = arith.constant 0 : i32
    %c0_i32_1 = arith.constant 0 : i32
    %c0_i32_2 = arith.constant 0 : i32
    return %c0_i32, %c0_i32_0, %c0_i32_1 : i32, i32, i32
  }
}

module attributes {stable_mosaic.version = 11 : i64} {
  func.func @_bilstm_chunk_kernel(%arg0: i32, %arg1: memref<16x32xf32, #tpu.memory_space<vmem>>, %arg2: memref<16x32xf32, #tpu.memory_space<vmem>>, %arg3: memref<2x32x128xf32, #tpu.memory_space<vmem>>, %arg4: memref<2x32x128xf32, #tpu.memory_space<vmem>>, %arg5: memref<2x1x128xf32, #tpu.memory_space<vmem>>, %arg6: memref<2x2x32xf32, #tpu.memory_space<vmem>>, %arg7: memref<2x2x32xf32, #tpu.memory_space<vmem>>, %arg8: memref<16x32xf32, #tpu.memory_space<vmem>>, %arg9: memref<16x32xf32, #tpu.memory_space<vmem>>, %arg10: memref<2x2x32xf32, #tpu.memory_space<vmem>>, %arg11: memref<2x2x32xf32, #tpu.memory_space<vmem>>, %arg12: memref<16x128xf32, #tpu.memory_space<vmem>>, %arg13: memref<16x128xf32, #tpu.memory_space<vmem>>) attributes {dimension_semantics = [#tpu.dimension_semantics<arbitrary>], iteration_bounds = array<i64: 1>, scalar_prefetch = 0 : i64, scratch_operands = 2 : i64, tpu.core_type = #tpu.core_type<tc>, window_params = [{transform_indices = @transform_0, window_bounds = array<i64: 16, 32>}, {transform_indices = @transform_1, window_bounds = array<i64: 16, 32>}, {pipeline_mode = #tpu.pipeline_mode<synchronous>, transform_indices = @transform_2, window_bounds = array<i64: 2, 32, 128>}, {pipeline_mode = #tpu.pipeline_mode<synchronous>, transform_indices = @transform_3, window_bounds = array<i64: 2, 32, 128>}, {pipeline_mode = #tpu.pipeline_mode<synchronous>, transform_indices = @transform_4, window_bounds = array<i64: 2, 1, 128>}, {pipeline_mode = #tpu.pipeline_mode<synchronous>, transform_indices = @transform_5, window_bounds = array<i64: 2, 2, 32>}, {pipeline_mode = #tpu.pipeline_mode<synchronous>, transform_indices = @transform_6, window_bounds = array<i64: 2, 2, 32>}, {transform_indices = @transform_7, window_bounds = array<i64: 16, 32>}, {transform_indices = @transform_8, window_bounds = array<i64: 16, 32>}, {pipeline_mode = #tpu.pipeline_mode<synchronous>, transform_indices = @transform_9, window_bounds = array<i64: 2, 2, 32>}, {pipeline_mode = #tpu.pipeline_mode<synchronous>, transform_indices = @transform_10, window_bounds = array<i64: 2, 2, 32>}]} {
    %c0_i32 = arith.constant 0 : i32
    %0 = arith.cmpi eq, %arg0, %c0_i32 : i32
    %1 = arith.extui %0 : i1 to i32
    %c0_i32_0 = arith.constant 0 : i32
    %2 = arith.cmpi ne, %1, %c0_i32_0 : i32
    scf.if %2 {
      %c0_171 = arith.constant 0 : index
      %c0_172 = arith.constant 0 : index
      %c0_173 = arith.constant 0 : index
      %509 = vector.load %arg6[%c0_171, %c0_172, %c0_173] : memref<2x2x32xf32, #tpu.memory_space<vmem>>, vector<2x2x32xf32>
      %c0_174 = arith.constant 0 : index
      %c0_175 = arith.constant 0 : index
      %c0_176 = arith.constant 0 : index
      %510 = vector.load %arg10[%c0_174, %c0_175, %c0_176] : memref<2x2x32xf32, #tpu.memory_space<vmem>>, vector<2x2x32xf32>
      tpu.vector_store %arg10[%c0_174, %c0_175, %c0_176], %509 {strides = array<i32>} : memref<2x2x32xf32, #tpu.memory_space<vmem>>, vector<2x2x32xf32>,
      %c0_177 = arith.constant 0 : index
      %c0_178 = arith.constant 0 : index
      %c0_179 = arith.constant 0 : index
      %511 = vector.load %arg7[%c0_177, %c0_178, %c0_179] : memref<2x2x32xf32, #tpu.memory_space<vmem>>, vector<2x2x32xf32>
      %c0_180 = arith.constant 0 : index
      %c0_181 = arith.constant 0 : index
      %c0_182 = arith.constant 0 : index
      %512 = vector.load %arg11[%c0_180, %c0_181, %c0_182] : memref<2x2x32xf32, #tpu.memory_space<vmem>>, vector<2x2x32xf32>
      tpu.vector_store %arg11[%c0_180, %c0_181, %c0_182], %511 {strides = array<i32>} : memref<2x2x32xf32, #tpu.memory_space<vmem>>, vector<2x2x32xf32>,
    } else {
    }
    %c0 = arith.constant 0 : index
    %c0_1 = arith.constant 0 : index
    %3 = vector.load %arg1[%c0, %c0_1] : memref<16x32xf32, #tpu.memory_space<vmem>>, vector<16x32xf32>
    %c0_2 = arith.constant 0 : index
    %c0_3 = arith.constant 0 : index
    %c0_4 = arith.constant 0 : index
    %4 = vector.load %arg3[%c0_2, %c0_3, %c0_4] : memref<2x32x128xf32, #tpu.memory_space<vmem>>, vector<1x32x128xf32>
    %5 = vector.shape_cast %4 : vector<1x32x128xf32> to vector<32x128xf32>
    %cst = arith.constant dense<0.000000e+00> : vector<16x128xf32>
    %6 = tpu.matmul %3, %5, %cst {dimension_numbers = #tpu.dot_dimension_numbers<[1], [0], [0], [1], [0, 0, 1, 1], [], []>} : vector<16x32xf32>, vector<32x128xf32>, vector<16x128xf32> -> vector<16x128xf32>
    %c0_5 = arith.constant 0 : index
    %c0_6 = arith.constant 0 : index
    %7 = vector.load %arg2[%c0_5, %c0_6] : memref<16x32xf32, #tpu.memory_space<vmem>>, vector<16x32xf32>
    %c1 = arith.constant 1 : index
    %c0_7 = arith.constant 0 : index
    %c0_8 = arith.constant 0 : index
    %8 = vector.load %arg3[%c1, %c0_7, %c0_8] : memref<2x32x128xf32, #tpu.memory_space<vmem>>, vector<1x32x128xf32>
    %9 = vector.shape_cast %8 : vector<1x32x128xf32> to vector<32x128xf32>
    %cst_9 = arith.constant dense<0.000000e+00> : vector<16x128xf32>
    %10 = tpu.matmul %7, %9, %cst_9 {dimension_numbers = #tpu.dot_dimension_numbers<[1], [0], [0], [1], [0, 0, 1, 1], [], []>} : vector<16x32xf32>, vector<32x128xf32>, vector<16x128xf32> -> vector<16x128xf32>
    %c0_10 = arith.constant 0 : index
    %c0_11 = arith.constant 0 : index
    %c0_12 = arith.constant 0 : index
    %11 = vector.load %arg5[%c0_10, %c0_11, %c0_12] : memref<2x1x128xf32, #tpu.memory_space<vmem>>, vector<1x1x128xf32>
    %12 = vector.shape_cast %11 : vector<1x1x128xf32> to vector<1x128xf32>
    %13 = vector.broadcast %12 : vector<1x128xf32> to vector<16x128xf32>
    %14 = arith.addf %6, %13 : vector<16x128xf32>
    %c0_13 = arith.constant 0 : index
    %c0_14 = arith.constant 0 : index
    %15 = vector.load %arg12[%c0_13, %c0_14] : memref<16x128xf32, #tpu.memory_space<vmem>>, vector<16x128xf32>
    tpu.vector_store %arg12[%c0_13, %c0_14], %14 {strides = array<i32>} : memref<16x128xf32, #tpu.memory_space<vmem>>, vector<16x128xf32>,
    %c1_15 = arith.constant 1 : index
    %c0_16 = arith.constant 0 : index
    %c0_17 = arith.constant 0 : index
    %16 = vector.load %arg5[%c1_15, %c0_16, %c0_17] : memref<2x1x128xf32, #tpu.memory_space<vmem>>, vector<1x1x128xf32>
    %17 = vector.shape_cast %16 : vector<1x1x128xf32> to vector<1x128xf32>
    %18 = vector.broadcast %17 : vector<1x128xf32> to vector<16x128xf32>
    %19 = arith.addf %10, %18 : vector<16x128xf32>
    %c0_18 = arith.constant 0 : index
    %c0_19 = arith.constant 0 : index
    %20 = vector.load %arg13[%c0_18, %c0_19] : memref<16x128xf32, #tpu.memory_space<vmem>>, vector<16x128xf32>
    tpu.vector_store %arg13[%c0_18, %c0_19], %19 {strides = array<i32>} : memref<16x128xf32, #tpu.memory_space<vmem>>, vector<16x128xf32>,
    %c0_20 = arith.constant 0 : index
    %c0_21 = arith.constant 0 : index
    %c0_22 = arith.constant 0 : index
    %21 = vector.load %arg4[%c0_20, %c0_21, %c0_22] : memref<2x32x128xf32, #tpu.memory_space<vmem>>, vector<1x32x128xf32>
    %22 = vector.shape_cast %21 : vector<1x32x128xf32> to vector<32x128xf32>
    %c1_23 = arith.constant 1 : index
    %c0_24 = arith.constant 0 : index
    %c0_25 = arith.constant 0 : index
    %23 = vector.load %arg4[%c1_23, %c0_24, %c0_25] : memref<2x32x128xf32, #tpu.memory_space<vmem>>, vector<1x32x128xf32>
    %24 = vector.shape_cast %23 : vector<1x32x128xf32> to vector<32x128xf32>
    %c0_26 = arith.constant 0 : index
    %c0_27 = arith.constant 0 : index
    %c0_28 = arith.constant 0 : index
    %25 = vector.load %arg10[%c0_26, %c0_27, %c0_28] : memref<2x2x32xf32, #tpu.memory_space<vmem>>, vector<1x2x32xf32>
    %26 = vector.shape_cast %25 : vector<1x2x32xf32> to vector<2x32xf32>
    %c1_29 = arith.constant 1 : index
    %c0_30 = arith.constant 0 : index
    %c0_31 = arith.constant 0 : index
    %27 = vector.load %arg10[%c1_29, %c0_30, %c0_31] : memref<2x2x32xf32, #tpu.memory_space<vmem>>, vector<1x2x32xf32>
    %28 = vector.shape_cast %27 : vector<1x2x32xf32> to vector<2x32xf32>
    %c0_32 = arith.constant 0 : index
    %c0_33 = arith.constant 0 : index
    %c0_34 = arith.constant 0 : index
    %29 = vector.load %arg11[%c0_32, %c0_33, %c0_34] : memref<2x2x32xf32, #tpu.memory_space<vmem>>, vector<1x2x32xf32>
    %30 = vector.shape_cast %29 : vector<1x2x32xf32> to vector<2x32xf32>
    %c1_35 = arith.constant 1 : index
    %c0_36 = arith.constant 0 : index
    %c0_37 = arith.constant 0 : index
    %31 = vector.load %arg11[%c1_35, %c0_36, %c0_37] : memref<2x2x32xf32, #tpu.memory_space<vmem>>, vector<1x2x32xf32>
    %32 = vector.shape_cast %31 : vector<1x2x32xf32> to vector<2x32xf32>
    %c0_38 = arith.constant 0 : index
    %c0_39 = arith.constant 0 : index
    %33 = vector.load %arg12[%c0_38, %c0_39] : memref<16x128xf32, #tpu.memory_space<vmem>>, vector<2x128xf32>
    %cst_40 = arith.constant dense<0.000000e+00> : vector<2x128xf32>
    %34 = tpu.matmul %26, %22, %cst_40 {dimension_numbers = #tpu.dot_dimension_numbers<[1], [0], [0], [1], [0, 0, 1, 1], [], []>} : vector<2x32xf32>, vector<32x128xf32>, vector<2x128xf32> -> vector<2x128xf32>
    %35 = arith.addf %33, %34 : vector<2x128xf32>
    %c14 = arith.constant 14 : index
    %c0_41 = arith.constant 0 : index
    %36 = vector.load %arg13[%c14, %c0_41] : memref<16x128xf32, #tpu.memory_space<vmem>>, vector<2x128xf32>
    %cst_42 = arith.constant dense<0.000000e+00> : vector<2x128xf32>
    %37 = tpu.matmul %28, %24, %cst_42 {dimension_numbers = #tpu.dot_dimension_numbers<[1], [0], [0], [1], [0, 0, 1, 1], [], []>} : vector<2x32xf32>, vector<32x128xf32>, vector<2x128xf32> -> vector<2x128xf32>
    %38 = arith.addf %36, %37 : vector<2x128xf32>
    %39 = vector.extract_strided_slice %35 {offsets = [0, 0], sizes = [2, 32], strides = [1, 1]} : vector<2x128xf32> to vector<2x32xf32>
    %40 = arith.negf %39 : vector<2x32xf32>
    %41 = math.exp %40 : vector<2x32xf32>
    %cst_43 = arith.constant 1.000000e+00 : f32
    %42 = vector.broadcast %cst_43 : f32 to vector<2x32xf32>
    %43 = arith.addf %42, %41 : vector<2x32xf32>
    %44 = arith.divf %42, %43 : vector<2x32xf32>
    %45 = vector.extract_strided_slice %35 {offsets = [0, 32], sizes = [2, 32], strides = [1, 1]} : vector<2x128xf32> to vector<2x32xf32>
    %46 = arith.negf %45 : vector<2x32xf32>
    %47 = math.exp %46 : vector<2x32xf32>
    %cst_44 = arith.constant 1.000000e+00 : f32
    %48 = vector.broadcast %cst_44 : f32 to vector<2x32xf32>
    %49 = arith.addf %48, %47 : vector<2x32xf32>
    %50 = arith.divf %48, %49 : vector<2x32xf32>
    %51 = vector.extract_strided_slice %35 {offsets = [0, 64], sizes = [2, 32], strides = [1, 1]} : vector<2x128xf32> to vector<2x32xf32>
    %52 = math.tanh %51 : vector<2x32xf32>
    %53 = vector.extract_strided_slice %35 {offsets = [0, 96], sizes = [2, 32], strides = [1, 1]} : vector<2x128xf32> to vector<2x32xf32>
    %54 = arith.negf %53 : vector<2x32xf32>
    %55 = math.exp %54 : vector<2x32xf32>
    %cst_45 = arith.constant 1.000000e+00 : f32
    %56 = vector.broadcast %cst_45 : f32 to vector<2x32xf32>
    %57 = arith.addf %56, %55 : vector<2x32xf32>
    %58 = arith.divf %56, %57 : vector<2x32xf32>
    %59 = vector.extract_strided_slice %38 {offsets = [0, 0], sizes = [2, 32], strides = [1, 1]} : vector<2x128xf32> to vector<2x32xf32>
    %60 = arith.negf %59 : vector<2x32xf32>
    %61 = math.exp %60 : vector<2x32xf32>
    %cst_46 = arith.constant 1.000000e+00 : f32
    %62 = vector.broadcast %cst_46 : f32 to vector<2x32xf32>
    %63 = arith.addf %62, %61 : vector<2x32xf32>
    %64 = arith.divf %62, %63 : vector<2x32xf32>
    %65 = vector.extract_strided_slice %38 {offsets = [0, 32], sizes = [2, 32], strides = [1, 1]} : vector<2x128xf32> to vector<2x32xf32>
    %66 = arith.negf %65 : vector<2x32xf32>
    %67 = math.exp %66 : vector<2x32xf32>
    %cst_47 = arith.constant 1.000000e+00 : f32
    %68 = vector.broadcast %cst_47 : f32 to vector<2x32xf32>
    %69 = arith.addf %68, %67 : vector<2x32xf32>
    %70 = arith.divf %68, %69 : vector<2x32xf32>
    %71 = vector.extract_strided_slice %38 {offsets = [0, 64], sizes = [2, 32], strides = [1, 1]} : vector<2x128xf32> to vector<2x32xf32>
    %72 = math.tanh %71 : vector<2x32xf32>
    %73 = vector.extract_strided_slice %38 {offsets = [0, 96], sizes = [2, 32], strides = [1, 1]} : vector<2x128xf32> to vector<2x32xf32>
    %74 = arith.negf %73 : vector<2x32xf32>
    %75 = math.exp %74 : vector<2x32xf32>
    %cst_48 = arith.constant 1.000000e+00 : f32
    %76 = vector.broadcast %cst_48 : f32 to vector<2x32xf32>
    %77 = arith.addf %76, %75 : vector<2x32xf32>
    %78 = arith.divf %76, %77 : vector<2x32xf32>
    %79 = arith.mulf %50, %30 : vector<2x32xf32>
    %80 = arith.mulf %44, %52 : vector<2x32xf32>
    %81 = arith.addf %79, %80 : vector<2x32xf32>
    %82 = arith.mulf %70, %32 : vector<2x32xf32>
    %83 = arith.mulf %64, %72 : vector<2x32xf32>
    %84 = arith.addf %82, %83 : vector<2x32xf32>
    %85 = math.tanh %81 : vector<2x32xf32>
    %86 = arith.mulf %58, %85 : vector<2x32xf32>
    %87 = math.tanh %84 : vector<2x32xf32>
    %88 = arith.mulf %78, %87 : vector<2x32xf32>
    %c0_49 = arith.constant 0 : index
    %c0_50 = arith.constant 0 : index
    %89 = vector.load %arg8[%c0_49, %c0_50] : memref<16x32xf32, #tpu.memory_space<vmem>>, vector<2x32xf32>
    tpu.vector_store %arg8[%c0_49, %c0_50], %86 {strides = array<i32>} : memref<16x32xf32, #tpu.memory_space<vmem>>, vector<2x32xf32>,
    %c14_51 = arith.constant 14 : index
    %c0_52 = arith.constant 0 : index
    %90 = vector.load %arg9[%c14_51, %c0_52] : memref<16x32xf32, #tpu.memory_space<vmem>>, vector<2x32xf32>
    tpu.vector_store %arg9[%c14_51, %c0_52], %88 {strides = array<i32>} : memref<16x32xf32, #tpu.memory_space<vmem>>, vector<2x32xf32>,
    %c2 = arith.constant 2 : index
    %c0_53 = arith.constant 0 : index
    %91 = vector.load %arg12[%c2, %c0_53] : memref<16x128xf32, #tpu.memory_space<vmem>>, vector<2x128xf32>
    %cst_54 = arith.constant dense<0.000000e+00> : vector<2x128xf32>
    %92 = tpu.matmul %86, %22, %cst_54 {dimension_numbers = #tpu.dot_dimension_numbers<[1], [0], [0], [1], [0, 0, 1, 1], [], []>} : vector<2x32xf32>, vector<32x128xf32>, vector<2x128xf32> -> vector<2x128xf32>
    %93 = arith.addf %91, %92 : vector<2x128xf32>
    %c12 = arith.constant 12 : index
    %c0_55 = arith.constant 0 : index
    %94 = vector.load %arg13[%c12, %c0_55] : memref<16x128xf32, #tpu.memory_space<vmem>>, vector<2x128xf32>
    %cst_56 = arith.constant dense<0.000000e+00> : vector<2x128xf32>
    %95 = tpu.matmul %88, %24, %cst_56 {dimension_numbers = #tpu.dot_dimension_numbers<[1], [0], [0], [1], [0, 0, 1, 1], [], []>} : vector<2x32xf32>, vector<32x128xf32>, vector<2x128xf32> -> vector<2x128xf32>
    %96 = arith.addf %94, %95 : vector<2x128xf32>
    %97 = vector.extract_strided_slice %93 {offsets = [0, 0], sizes = [2, 32], strides = [1, 1]} : vector<2x128xf32> to vector<2x32xf32>
    %98 = arith.negf %97 : vector<2x32xf32>
    %99 = math.exp %98 : vector<2x32xf32>
    %cst_57 = arith.constant 1.000000e+00 : f32
    %100 = vector.broadcast %cst_57 : f32 to vector<2x32xf32>
    %101 = arith.addf %100, %99 : vector<2x32xf32>
    %102 = arith.divf %100, %101 : vector<2x32xf32>
    %103 = vector.extract_strided_slice %93 {offsets = [0, 32], sizes = [2, 32], strides = [1, 1]} : vector<2x128xf32> to vector<2x32xf32>
    %104 = arith.negf %103 : vector<2x32xf32>
    %105 = math.exp %104 : vector<2x32xf32>
    %cst_58 = arith.constant 1.000000e+00 : f32
    %106 = vector.broadcast %cst_58 : f32 to vector<2x32xf32>
    %107 = arith.addf %106, %105 : vector<2x32xf32>
    %108 = arith.divf %106, %107 : vector<2x32xf32>
    %109 = vector.extract_strided_slice %93 {offsets = [0, 64], sizes = [2, 32], strides = [1, 1]} : vector<2x128xf32> to vector<2x32xf32>
    %110 = math.tanh %109 : vector<2x32xf32>
    %111 = vector.extract_strided_slice %93 {offsets = [0, 96], sizes = [2, 32], strides = [1, 1]} : vector<2x128xf32> to vector<2x32xf32>
    %112 = arith.negf %111 : vector<2x32xf32>
    %113 = math.exp %112 : vector<2x32xf32>
    %cst_59 = arith.constant 1.000000e+00 : f32
    %114 = vector.broadcast %cst_59 : f32 to vector<2x32xf32>
    %115 = arith.addf %114, %113 : vector<2x32xf32>
    %116 = arith.divf %114, %115 : vector<2x32xf32>
    %117 = vector.extract_strided_slice %96 {offsets = [0, 0], sizes = [2, 32], strides = [1, 1]} : vector<2x128xf32> to vector<2x32xf32>
    %118 = arith.negf %117 : vector<2x32xf32>
    %119 = math.exp %118 : vector<2x32xf32>
    %cst_60 = arith.constant 1.000000e+00 : f32
    %120 = vector.broadcast %cst_60 : f32 to vector<2x32xf32>
    %121 = arith.addf %120, %119 : vector<2x32xf32>
    %122 = arith.divf %120, %121 : vector<2x32xf32>
    %123 = vector.extract_strided_slice %96 {offsets = [0, 32], sizes = [2, 32], strides = [1, 1]} : vector<2x128xf32> to vector<2x32xf32>
    %124 = arith.negf %123 : vector<2x32xf32>
    %125 = math.exp %124 : vector<2x32xf32>
    %cst_61 = arith.constant 1.000000e+00 : f32
    %126 = vector.broadcast %cst_61 : f32 to vector<2x32xf32>
    %127 = arith.addf %126, %125 : vector<2x32xf32>
    %128 = arith.divf %126, %127 : vector<2x32xf32>
    %129 = vector.extract_strided_slice %96 {offsets = [0, 64], sizes = [2, 32], strides = [1, 1]} : vector<2x128xf32> to vector<2x32xf32>
    %130 = math.tanh %129 : vector<2x32xf32>
    %131 = vector.extract_strided_slice %96 {offsets = [0, 96], sizes = [2, 32], strides = [1, 1]} : vector<2x128xf32> to vector<2x32xf32>
    %132 = arith.negf %131 : vector<2x32xf32>
    %133 = math.exp %132 : vector<2x32xf32>
    %cst_62 = arith.constant 1.000000e+00 : f32
    %134 = vector.broadcast %cst_62 : f32 to vector<2x32xf32>
    %135 = arith.addf %134, %133 : vector<2x32xf32>
    %136 = arith.divf %134, %135 : vector<2x32xf32>
    %137 = arith.mulf %108, %81 : vector<2x32xf32>
    %138 = arith.mulf %102, %110 : vector<2x32xf32>
    %139 = arith.addf %137, %138 : vector<2x32xf32>
    %140 = arith.mulf %128, %84 : vector<2x32xf32>
    %141 = arith.mulf %122, %130 : vector<2x32xf32>
    %142 = arith.addf %140, %141 : vector<2x32xf32>
    %143 = math.tanh %139 : vector<2x32xf32>
    %144 = arith.mulf %116, %143 : vector<2x32xf32>
    %145 = math.tanh %142 : vector<2x32xf32>
    %146 = arith.mulf %136, %145 : vector<2x32xf32>
    %c2_63 = arith.constant 2 : index
    %c0_64 = arith.constant 0 : index
    %147 = vector.load %arg8[%c2_63, %c0_64] : memref<16x32xf32, #tpu.memory_space<vmem>>, vector<2x32xf32>
    tpu.vector_store %arg8[%c2_63, %c0_64], %144 {strides = array<i32>} : memref<16x32xf32, #tpu.memory_space<vmem>>, vector<2x32xf32>,
    %c12_65 = arith.constant 12 : index
    %c0_66 = arith.constant 0 : index
    %148 = vector.load %arg9[%c12_65, %c0_66] : memref<16x32xf32, #tpu.memory_space<vmem>>, vector<2x32xf32>
    tpu.vector_store %arg9[%c12_65, %c0_66], %146 {strides = array<i32>} : memref<16x32xf32, #tpu.memory_space<vmem>>, vector<2x32xf32>,
    %c4 = arith.constant 4 : index
    %c0_67 = arith.constant 0 : index
    %149 = vector.load %arg12[%c4, %c0_67] : memref<16x128xf32, #tpu.memory_space<vmem>>, vector<2x128xf32>
    %cst_68 = arith.constant dense<0.000000e+00> : vector<2x128xf32>
    %150 = tpu.matmul %144, %22, %cst_68 {dimension_numbers = #tpu.dot_dimension_numbers<[1], [0], [0], [1], [0, 0, 1, 1], [], []>} : vector<2x32xf32>, vector<32x128xf32>, vector<2x128xf32> -> vector<2x128xf32>
    %151 = arith.addf %149, %150 : vector<2x128xf32>
    %c10 = arith.constant 10 : index
    %c0_69 = arith.constant 0 : index
    %152 = vector.load %arg13[%c10, %c0_69] : memref<16x128xf32, #tpu.memory_space<vmem>>, vector<2x128xf32>
    %cst_70 = arith.constant dense<0.000000e+00> : vector<2x128xf32>
    %153 = tpu.matmul %146, %24, %cst_70 {dimension_numbers = #tpu.dot_dimension_numbers<[1], [0], [0], [1], [0, 0, 1, 1], [], []>} : vector<2x32xf32>, vector<32x128xf32>, vector<2x128xf32> -> vector<2x128xf32>
    %154 = arith.addf %152, %153 : vector<2x128xf32>
    %155 = vector.extract_strided_slice %151 {offsets = [0, 0], sizes = [2, 32], strides = [1, 1]} : vector<2x128xf32> to vector<2x32xf32>
    %156 = arith.negf %155 : vector<2x32xf32>
    %157 = math.exp %156 : vector<2x32xf32>
    %cst_71 = arith.constant 1.000000e+00 : f32
    %158 = vector.broadcast %cst_71 : f32 to vector<2x32xf32>
    %159 = arith.addf %158, %157 : vector<2x32xf32>
    %160 = arith.divf %158, %159 : vector<2x32xf32>
    %161 = vector.extract_strided_slice %151 {offsets = [0, 32], sizes = [2, 32], strides = [1, 1]} : vector<2x128xf32> to vector<2x32xf32>
    %162 = arith.negf %161 : vector<2x32xf32>
    %163 = math.exp %162 : vector<2x32xf32>
    %cst_72 = arith.constant 1.000000e+00 : f32
    %164 = vector.broadcast %cst_72 : f32 to vector<2x32xf32>
    %165 = arith.addf %164, %163 : vector<2x32xf32>
    %166 = arith.divf %164, %165 : vector<2x32xf32>
    %167 = vector.extract_strided_slice %151 {offsets = [0, 64], sizes = [2, 32], strides = [1, 1]} : vector<2x128xf32> to vector<2x32xf32>
    %168 = math.tanh %167 : vector<2x32xf32>
    %169 = vector.extract_strided_slice %151 {offsets = [0, 96], sizes = [2, 32], strides = [1, 1]} : vector<2x128xf32> to vector<2x32xf32>
    %170 = arith.negf %169 : vector<2x32xf32>
    %171 = math.exp %170 : vector<2x32xf32>
    %cst_73 = arith.constant 1.000000e+00 : f32
    %172 = vector.broadcast %cst_73 : f32 to vector<2x32xf32>
    %173 = arith.addf %172, %171 : vector<2x32xf32>
    %174 = arith.divf %172, %173 : vector<2x32xf32>
    %175 = vector.extract_strided_slice %154 {offsets = [0, 0], sizes = [2, 32], strides = [1, 1]} : vector<2x128xf32> to vector<2x32xf32>
    %176 = arith.negf %175 : vector<2x32xf32>
    %177 = math.exp %176 : vector<2x32xf32>
    %cst_74 = arith.constant 1.000000e+00 : f32
    %178 = vector.broadcast %cst_74 : f32 to vector<2x32xf32>
    %179 = arith.addf %178, %177 : vector<2x32xf32>
    %180 = arith.divf %178, %179 : vector<2x32xf32>
    %181 = vector.extract_strided_slice %154 {offsets = [0, 32], sizes = [2, 32], strides = [1, 1]} : vector<2x128xf32> to vector<2x32xf32>
    %182 = arith.negf %181 : vector<2x32xf32>
    %183 = math.exp %182 : vector<2x32xf32>
    %cst_75 = arith.constant 1.000000e+00 : f32
    %184 = vector.broadcast %cst_75 : f32 to vector<2x32xf32>
    %185 = arith.addf %184, %183 : vector<2x32xf32>
    %186 = arith.divf %184, %185 : vector<2x32xf32>
    %187 = vector.extract_strided_slice %154 {offsets = [0, 64], sizes = [2, 32], strides = [1, 1]} : vector<2x128xf32> to vector<2x32xf32>
    %188 = math.tanh %187 : vector<2x32xf32>
    %189 = vector.extract_strided_slice %154 {offsets = [0, 96], sizes = [2, 32], strides = [1, 1]} : vector<2x128xf32> to vector<2x32xf32>
    %190 = arith.negf %189 : vector<2x32xf32>
    %191 = math.exp %190 : vector<2x32xf32>
    %cst_76 = arith.constant 1.000000e+00 : f32
    %192 = vector.broadcast %cst_76 : f32 to vector<2x32xf32>
    %193 = arith.addf %192, %191 : vector<2x32xf32>
    %194 = arith.divf %192, %193 : vector<2x32xf32>
    %195 = arith.mulf %166, %139 : vector<2x32xf32>
    %196 = arith.mulf %160, %168 : vector<2x32xf32>
    %197 = arith.addf %195, %196 : vector<2x32xf32>
    %198 = arith.mulf %186, %142 : vector<2x32xf32>
    %199 = arith.mulf %180, %188 : vector<2x32xf32>
    %200 = arith.addf %198, %199 : vector<2x32xf32>
    %201 = math.tanh %197 : vector<2x32xf32>
    %202 = arith.mulf %174, %201 : vector<2x32xf32>
    %203 = math.tanh %200 : vector<2x32xf32>
    %204 = arith.mulf %194, %203 : vector<2x32xf32>
    %c4_77 = arith.constant 4 : index
    %c0_78 = arith.constant 0 : index
    %205 = vector.load %arg8[%c4_77, %c0_78] : memref<16x32xf32, #tpu.memory_space<vmem>>, vector<2x32xf32>
    tpu.vector_store %arg8[%c4_77, %c0_78], %202 {strides = array<i32>} : memref<16x32xf32, #tpu.memory_space<vmem>>, vector<2x32xf32>,
    %c10_79 = arith.constant 10 : index
    %c0_80 = arith.constant 0 : index
    %206 = vector.load %arg9[%c10_79, %c0_80] : memref<16x32xf32, #tpu.memory_space<vmem>>, vector<2x32xf32>
    tpu.vector_store %arg9[%c10_79, %c0_80], %204 {strides = array<i32>} : memref<16x32xf32, #tpu.memory_space<vmem>>, vector<2x32xf32>,
    %c6 = arith.constant 6 : index
    %c0_81 = arith.constant 0 : index
    %207 = vector.load %arg12[%c6, %c0_81] : memref<16x128xf32, #tpu.memory_space<vmem>>, vector<2x128xf32>
    %cst_82 = arith.constant dense<0.000000e+00> : vector<2x128xf32>
    %208 = tpu.matmul %202, %22, %cst_82 {dimension_numbers = #tpu.dot_dimension_numbers<[1], [0], [0], [1], [0, 0, 1, 1], [], []>} : vector<2x32xf32>, vector<32x128xf32>, vector<2x128xf32> -> vector<2x128xf32>
    %209 = arith.addf %207, %208 : vector<2x128xf32>
    %c8 = arith.constant 8 : index
    %c0_83 = arith.constant 0 : index
    %210 = vector.load %arg13[%c8, %c0_83] : memref<16x128xf32, #tpu.memory_space<vmem>>, vector<2x128xf32>
    %cst_84 = arith.constant dense<0.000000e+00> : vector<2x128xf32>
    %211 = tpu.matmul %204, %24, %cst_84 {dimension_numbers = #tpu.dot_dimension_numbers<[1], [0], [0], [1], [0, 0, 1, 1], [], []>} : vector<2x32xf32>, vector<32x128xf32>, vector<2x128xf32> -> vector<2x128xf32>
    %212 = arith.addf %210, %211 : vector<2x128xf32>
    %213 = vector.extract_strided_slice %209 {offsets = [0, 0], sizes = [2, 32], strides = [1, 1]} : vector<2x128xf32> to vector<2x32xf32>
    %214 = arith.negf %213 : vector<2x32xf32>
    %215 = math.exp %214 : vector<2x32xf32>
    %cst_85 = arith.constant 1.000000e+00 : f32
    %216 = vector.broadcast %cst_85 : f32 to vector<2x32xf32>
    %217 = arith.addf %216, %215 : vector<2x32xf32>
    %218 = arith.divf %216, %217 : vector<2x32xf32>
    %219 = vector.extract_strided_slice %209 {offsets = [0, 32], sizes = [2, 32], strides = [1, 1]} : vector<2x128xf32> to vector<2x32xf32>
    %220 = arith.negf %219 : vector<2x32xf32>
    %221 = math.exp %220 : vector<2x32xf32>
    %cst_86 = arith.constant 1.000000e+00 : f32
    %222 = vector.broadcast %cst_86 : f32 to vector<2x32xf32>
    %223 = arith.addf %222, %221 : vector<2x32xf32>
    %224 = arith.divf %222, %223 : vector<2x32xf32>
    %225 = vector.extract_strided_slice %209 {offsets = [0, 64], sizes = [2, 32], strides = [1, 1]} : vector<2x128xf32> to vector<2x32xf32>
    %226 = math.tanh %225 : vector<2x32xf32>
    %227 = vector.extract_strided_slice %209 {offsets = [0, 96], sizes = [2, 32], strides = [1, 1]} : vector<2x128xf32> to vector<2x32xf32>
    %228 = arith.negf %227 : vector<2x32xf32>
    %229 = math.exp %228 : vector<2x32xf32>
    %cst_87 = arith.constant 1.000000e+00 : f32
    %230 = vector.broadcast %cst_87 : f32 to vector<2x32xf32>
    %231 = arith.addf %230, %229 : vector<2x32xf32>
    %232 = arith.divf %230, %231 : vector<2x32xf32>
    %233 = vector.extract_strided_slice %212 {offsets = [0, 0], sizes = [2, 32], strides = [1, 1]} : vector<2x128xf32> to vector<2x32xf32>
    %234 = arith.negf %233 : vector<2x32xf32>
    %235 = math.exp %234 : vector<2x32xf32>
    %cst_88 = arith.constant 1.000000e+00 : f32
    %236 = vector.broadcast %cst_88 : f32 to vector<2x32xf32>
    %237 = arith.addf %236, %235 : vector<2x32xf32>
    %238 = arith.divf %236, %237 : vector<2x32xf32>
    %239 = vector.extract_strided_slice %212 {offsets = [0, 32], sizes = [2, 32], strides = [1, 1]} : vector<2x128xf32> to vector<2x32xf32>
    %240 = arith.negf %239 : vector<2x32xf32>
    %241 = math.exp %240 : vector<2x32xf32>
    %cst_89 = arith.constant 1.000000e+00 : f32
    %242 = vector.broadcast %cst_89 : f32 to vector<2x32xf32>
    %243 = arith.addf %242, %241 : vector<2x32xf32>
    %244 = arith.divf %242, %243 : vector<2x32xf32>
    %245 = vector.extract_strided_slice %212 {offsets = [0, 64], sizes = [2, 32], strides = [1, 1]} : vector<2x128xf32> to vector<2x32xf32>
    %246 = math.tanh %245 : vector<2x32xf32>
    %247 = vector.extract_strided_slice %212 {offsets = [0, 96], sizes = [2, 32], strides = [1, 1]} : vector<2x128xf32> to vector<2x32xf32>
    %248 = arith.negf %247 : vector<2x32xf32>
    %249 = math.exp %248 : vector<2x32xf32>
    %cst_90 = arith.constant 1.000000e+00 : f32
    %250 = vector.broadcast %cst_90 : f32 to vector<2x32xf32>
    %251 = arith.addf %250, %249 : vector<2x32xf32>
    %252 = arith.divf %250, %251 : vector<2x32xf32>
    %253 = arith.mulf %224, %197 : vector<2x32xf32>
    %254 = arith.mulf %218, %226 : vector<2x32xf32>
    %255 = arith.addf %253, %254 : vector<2x32xf32>
    %256 = arith.mulf %244, %200 : vector<2x32xf32>
    %257 = arith.mulf %238, %246 : vector<2x32xf32>
    %258 = arith.addf %256, %257 : vector<2x32xf32>
    %259 = math.tanh %255 : vector<2x32xf32>
    %260 = arith.mulf %232, %259 : vector<2x32xf32>
    %261 = math.tanh %258 : vector<2x32xf32>
    %262 = arith.mulf %252, %261 : vector<2x32xf32>
    %c6_91 = arith.constant 6 : index
    %c0_92 = arith.constant 0 : index
    %263 = vector.load %arg8[%c6_91, %c0_92] : memref<16x32xf32, #tpu.memory_space<vmem>>, vector<2x32xf32>
    tpu.vector_store %arg8[%c6_91, %c0_92], %260 {strides = array<i32>} : memref<16x32xf32, #tpu.memory_space<vmem>>, vector<2x32xf32>,
    %c8_93 = arith.constant 8 : index
    %c0_94 = arith.constant 0 : index
    %264 = vector.load %arg9[%c8_93, %c0_94] : memref<16x32xf32, #tpu.memory_space<vmem>>, vector<2x32xf32>
    tpu.vector_store %arg9[%c8_93, %c0_94], %262 {strides = array<i32>} : memref<16x32xf32, #tpu.memory_space<vmem>>, vector<2x32xf32>,
    %c8_95 = arith.constant 8 : index
    %c0_96 = arith.constant 0 : index
    %265 = vector.load %arg12[%c8_95, %c0_96] : memref<16x128xf32, #tpu.memory_space<vmem>>, vector<2x128xf32>
    %cst_97 = arith.constant dense<0.000000e+00> : vector<2x128xf32>
    %266 = tpu.matmul %260, %22, %cst_97 {dimension_numbers = #tpu.dot_dimension_numbers<[1], [0], [0], [1], [0, 0, 1, 1], [], []>} : vector<2x32xf32>, vector<32x128xf32>, vector<2x128xf32> -> vector<2x128xf32>
    %267 = arith.addf %265, %266 : vector<2x128xf32>
    %c6_98 = arith.constant 6 : index
    %c0_99 = arith.constant 0 : index
    %268 = vector.load %arg13[%c6_98, %c0_99] : memref<16x128xf32, #tpu.memory_space<vmem>>, vector<2x128xf32>
    %cst_100 = arith.constant dense<0.000000e+00> : vector<2x128xf32>
    %269 = tpu.matmul %262, %24, %cst_100 {dimension_numbers = #tpu.dot_dimension_numbers<[1], [0], [0], [1], [0, 0, 1, 1], [], []>} : vector<2x32xf32>, vector<32x128xf32>, vector<2x128xf32> -> vector<2x128xf32>
    %270 = arith.addf %268, %269 : vector<2x128xf32>
    %271 = vector.extract_strided_slice %267 {offsets = [0, 0], sizes = [2, 32], strides = [1, 1]} : vector<2x128xf32> to vector<2x32xf32>
    %272 = arith.negf %271 : vector<2x32xf32>
    %273 = math.exp %272 : vector<2x32xf32>
    %cst_101 = arith.constant 1.000000e+00 : f32
    %274 = vector.broadcast %cst_101 : f32 to vector<2x32xf32>
    %275 = arith.addf %274, %273 : vector<2x32xf32>
    %276 = arith.divf %274, %275 : vector<2x32xf32>
    %277 = vector.extract_strided_slice %267 {offsets = [0, 32], sizes = [2, 32], strides = [1, 1]} : vector<2x128xf32> to vector<2x32xf32>
    %278 = arith.negf %277 : vector<2x32xf32>
    %279 = math.exp %278 : vector<2x32xf32>
    %cst_102 = arith.constant 1.000000e+00 : f32
    %280 = vector.broadcast %cst_102 : f32 to vector<2x32xf32>
    %281 = arith.addf %280, %279 : vector<2x32xf32>
    %282 = arith.divf %280, %281 : vector<2x32xf32>
    %283 = vector.extract_strided_slice %267 {offsets = [0, 64], sizes = [2, 32], strides = [1, 1]} : vector<2x128xf32> to vector<2x32xf32>
    %284 = math.tanh %283 : vector<2x32xf32>
    %285 = vector.extract_strided_slice %267 {offsets = [0, 96], sizes = [2, 32], strides = [1, 1]} : vector<2x128xf32> to vector<2x32xf32>
    %286 = arith.negf %285 : vector<2x32xf32>
    %287 = math.exp %286 : vector<2x32xf32>
    %cst_103 = arith.constant 1.000000e+00 : f32
    %288 = vector.broadcast %cst_103 : f32 to vector<2x32xf32>
    %289 = arith.addf %288, %287 : vector<2x32xf32>
    %290 = arith.divf %288, %289 : vector<2x32xf32>
    %291 = vector.extract_strided_slice %270 {offsets = [0, 0], sizes = [2, 32], strides = [1, 1]} : vector<2x128xf32> to vector<2x32xf32>
    %292 = arith.negf %291 : vector<2x32xf32>
    %293 = math.exp %292 : vector<2x32xf32>
    %cst_104 = arith.constant 1.000000e+00 : f32
    %294 = vector.broadcast %cst_104 : f32 to vector<2x32xf32>
    %295 = arith.addf %294, %293 : vector<2x32xf32>
    %296 = arith.divf %294, %295 : vector<2x32xf32>
    %297 = vector.extract_strided_slice %270 {offsets = [0, 32], sizes = [2, 32], strides = [1, 1]} : vector<2x128xf32> to vector<2x32xf32>
    %298 = arith.negf %297 : vector<2x32xf32>
    %299 = math.exp %298 : vector<2x32xf32>
    %cst_105 = arith.constant 1.000000e+00 : f32
    %300 = vector.broadcast %cst_105 : f32 to vector<2x32xf32>
    %301 = arith.addf %300, %299 : vector<2x32xf32>
    %302 = arith.divf %300, %301 : vector<2x32xf32>
    %303 = vector.extract_strided_slice %270 {offsets = [0, 64], sizes = [2, 32], strides = [1, 1]} : vector<2x128xf32> to vector<2x32xf32>
    %304 = math.tanh %303 : vector<2x32xf32>
    %305 = vector.extract_strided_slice %270 {offsets = [0, 96], sizes = [2, 32], strides = [1, 1]} : vector<2x128xf32> to vector<2x32xf32>
    %306 = arith.negf %305 : vector<2x32xf32>
    %307 = math.exp %306 : vector<2x32xf32>
    %cst_106 = arith.constant 1.000000e+00 : f32
    %308 = vector.broadcast %cst_106 : f32 to vector<2x32xf32>
    %309 = arith.addf %308, %307 : vector<2x32xf32>
    %310 = arith.divf %308, %309 : vector<2x32xf32>
    %311 = arith.mulf %282, %255 : vector<2x32xf32>
    %312 = arith.mulf %276, %284 : vector<2x32xf32>
    %313 = arith.addf %311, %312 : vector<2x32xf32>
    %314 = arith.mulf %302, %258 : vector<2x32xf32>
    %315 = arith.mulf %296, %304 : vector<2x32xf32>
    %316 = arith.addf %314, %315 : vector<2x32xf32>
    %317 = math.tanh %313 : vector<2x32xf32>
    %318 = arith.mulf %290, %317 : vector<2x32xf32>
    %319 = math.tanh %316 : vector<2x32xf32>
    %320 = arith.mulf %310, %319 : vector<2x32xf32>
    %c8_107 = arith.constant 8 : index
    %c0_108 = arith.constant 0 : index
    %321 = vector.load %arg8[%c8_107, %c0_108] : memref<16x32xf32, #tpu.memory_space<vmem>>, vector<2x32xf32>
    tpu.vector_store %arg8[%c8_107, %c0_108], %318 {strides = array<i32>} : memref<16x32xf32, #tpu.memory_space<vmem>>, vector<2x32xf32>,
    %c6_109 = arith.constant 6 : index
    %c0_110 = arith.constant 0 : index
    %322 = vector.load %arg9[%c6_109, %c0_110] : memref<16x32xf32, #tpu.memory_space<vmem>>, vector<2x32xf32>
    tpu.vector_store %arg9[%c6_109, %c0_110], %320 {strides = array<i32>} : memref<16x32xf32, #tpu.memory_space<vmem>>, vector<2x32xf32>,
    %c10_111 = arith.constant 10 : index
    %c0_112 = arith.constant 0 : index
    %323 = vector.load %arg12[%c10_111, %c0_112] : memref<16x128xf32, #tpu.memory_space<vmem>>, vector<2x128xf32>
    %cst_113 = arith.constant dense<0.000000e+00> : vector<2x128xf32>
    %324 = tpu.matmul %318, %22, %cst_113 {dimension_numbers = #tpu.dot_dimension_numbers<[1], [0], [0], [1], [0, 0, 1, 1], [], []>} : vector<2x32xf32>, vector<32x128xf32>, vector<2x128xf32> -> vector<2x128xf32>
    %325 = arith.addf %323, %324 : vector<2x128xf32>
    %c4_114 = arith.constant 4 : index
    %c0_115 = arith.constant 0 : index
    %326 = vector.load %arg13[%c4_114, %c0_115] : memref<16x128xf32, #tpu.memory_space<vmem>>, vector<2x128xf32>
    %cst_116 = arith.constant dense<0.000000e+00> : vector<2x128xf32>
    %327 = tpu.matmul %320, %24, %cst_116 {dimension_numbers = #tpu.dot_dimension_numbers<[1], [0], [0], [1], [0, 0, 1, 1], [], []>} : vector<2x32xf32>, vector<32x128xf32>, vector<2x128xf32> -> vector<2x128xf32>
    %328 = arith.addf %326, %327 : vector<2x128xf32>
    %329 = vector.extract_strided_slice %325 {offsets = [0, 0], sizes = [2, 32], strides = [1, 1]} : vector<2x128xf32> to vector<2x32xf32>
    %330 = arith.negf %329 : vector<2x32xf32>
    %331 = math.exp %330 : vector<2x32xf32>
    %cst_117 = arith.constant 1.000000e+00 : f32
    %332 = vector.broadcast %cst_117 : f32 to vector<2x32xf32>
    %333 = arith.addf %332, %331 : vector<2x32xf32>
    %334 = arith.divf %332, %333 : vector<2x32xf32>
    %335 = vector.extract_strided_slice %325 {offsets = [0, 32], sizes = [2, 32], strides = [1, 1]} : vector<2x128xf32> to vector<2x32xf32>
    %336 = arith.negf %335 : vector<2x32xf32>
    %337 = math.exp %336 : vector<2x32xf32>
    %cst_118 = arith.constant 1.000000e+00 : f32
    %338 = vector.broadcast %cst_118 : f32 to vector<2x32xf32>
    %339 = arith.addf %338, %337 : vector<2x32xf32>
    %340 = arith.divf %338, %339 : vector<2x32xf32>
    %341 = vector.extract_strided_slice %325 {offsets = [0, 64], sizes = [2, 32], strides = [1, 1]} : vector<2x128xf32> to vector<2x32xf32>
    %342 = math.tanh %341 : vector<2x32xf32>
    %343 = vector.extract_strided_slice %325 {offsets = [0, 96], sizes = [2, 32], strides = [1, 1]} : vector<2x128xf32> to vector<2x32xf32>
    %344 = arith.negf %343 : vector<2x32xf32>
    %345 = math.exp %344 : vector<2x32xf32>
    %cst_119 = arith.constant 1.000000e+00 : f32
    %346 = vector.broadcast %cst_119 : f32 to vector<2x32xf32>
    %347 = arith.addf %346, %345 : vector<2x32xf32>
    %348 = arith.divf %346, %347 : vector<2x32xf32>
    %349 = vector.extract_strided_slice %328 {offsets = [0, 0], sizes = [2, 32], strides = [1, 1]} : vector<2x128xf32> to vector<2x32xf32>
    %350 = arith.negf %349 : vector<2x32xf32>
    %351 = math.exp %350 : vector<2x32xf32>
    %cst_120 = arith.constant 1.000000e+00 : f32
    %352 = vector.broadcast %cst_120 : f32 to vector<2x32xf32>
    %353 = arith.addf %352, %351 : vector<2x32xf32>
    %354 = arith.divf %352, %353 : vector<2x32xf32>
    %355 = vector.extract_strided_slice %328 {offsets = [0, 32], sizes = [2, 32], strides = [1, 1]} : vector<2x128xf32> to vector<2x32xf32>
    %356 = arith.negf %355 : vector<2x32xf32>
    %357 = math.exp %356 : vector<2x32xf32>
    %cst_121 = arith.constant 1.000000e+00 : f32
    %358 = vector.broadcast %cst_121 : f32 to vector<2x32xf32>
    %359 = arith.addf %358, %357 : vector<2x32xf32>
    %360 = arith.divf %358, %359 : vector<2x32xf32>
    %361 = vector.extract_strided_slice %328 {offsets = [0, 64], sizes = [2, 32], strides = [1, 1]} : vector<2x128xf32> to vector<2x32xf32>
    %362 = math.tanh %361 : vector<2x32xf32>
    %363 = vector.extract_strided_slice %328 {offsets = [0, 96], sizes = [2, 32], strides = [1, 1]} : vector<2x128xf32> to vector<2x32xf32>
    %364 = arith.negf %363 : vector<2x32xf32>
    %365 = math.exp %364 : vector<2x32xf32>
    %cst_122 = arith.constant 1.000000e+00 : f32
    %366 = vector.broadcast %cst_122 : f32 to vector<2x32xf32>
    %367 = arith.addf %366, %365 : vector<2x32xf32>
    %368 = arith.divf %366, %367 : vector<2x32xf32>
    %369 = arith.mulf %340, %313 : vector<2x32xf32>
    %370 = arith.mulf %334, %342 : vector<2x32xf32>
    %371 = arith.addf %369, %370 : vector<2x32xf32>
    %372 = arith.mulf %360, %316 : vector<2x32xf32>
    %373 = arith.mulf %354, %362 : vector<2x32xf32>
    %374 = arith.addf %372, %373 : vector<2x32xf32>
    %375 = math.tanh %371 : vector<2x32xf32>
    %376 = arith.mulf %348, %375 : vector<2x32xf32>
    %377 = math.tanh %374 : vector<2x32xf32>
    %378 = arith.mulf %368, %377 : vector<2x32xf32>
    %c10_123 = arith.constant 10 : index
    %c0_124 = arith.constant 0 : index
    %379 = vector.load %arg8[%c10_123, %c0_124] : memref<16x32xf32, #tpu.memory_space<vmem>>, vector<2x32xf32>
    tpu.vector_store %arg8[%c10_123, %c0_124], %376 {strides = array<i32>} : memref<16x32xf32, #tpu.memory_space<vmem>>, vector<2x32xf32>,
    %c4_125 = arith.constant 4 : index
    %c0_126 = arith.constant 0 : index
    %380 = vector.load %arg9[%c4_125, %c0_126] : memref<16x32xf32, #tpu.memory_space<vmem>>, vector<2x32xf32>
    tpu.vector_store %arg9[%c4_125, %c0_126], %378 {strides = array<i32>} : memref<16x32xf32, #tpu.memory_space<vmem>>, vector<2x32xf32>,
    %c12_127 = arith.constant 12 : index
    %c0_128 = arith.constant 0 : index
    %381 = vector.load %arg12[%c12_127, %c0_128] : memref<16x128xf32, #tpu.memory_space<vmem>>, vector<2x128xf32>
    %cst_129 = arith.constant dense<0.000000e+00> : vector<2x128xf32>
    %382 = tpu.matmul %376, %22, %cst_129 {dimension_numbers = #tpu.dot_dimension_numbers<[1], [0], [0], [1], [0, 0, 1, 1], [], []>} : vector<2x32xf32>, vector<32x128xf32>, vector<2x128xf32> -> vector<2x128xf32>
    %383 = arith.addf %381, %382 : vector<2x128xf32>
    %c2_130 = arith.constant 2 : index
    %c0_131 = arith.constant 0 : index
    %384 = vector.load %arg13[%c2_130, %c0_131] : memref<16x128xf32, #tpu.memory_space<vmem>>, vector<2x128xf32>
    %cst_132 = arith.constant dense<0.000000e+00> : vector<2x128xf32>
    %385 = tpu.matmul %378, %24, %cst_132 {dimension_numbers = #tpu.dot_dimension_numbers<[1], [0], [0], [1], [0, 0, 1, 1], [], []>} : vector<2x32xf32>, vector<32x128xf32>, vector<2x128xf32> -> vector<2x128xf32>
    %386 = arith.addf %384, %385 : vector<2x128xf32>
    %387 = vector.extract_strided_slice %383 {offsets = [0, 0], sizes = [2, 32], strides = [1, 1]} : vector<2x128xf32> to vector<2x32xf32>
    %388 = arith.negf %387 : vector<2x32xf32>
    %389 = math.exp %388 : vector<2x32xf32>
    %cst_133 = arith.constant 1.000000e+00 : f32
    %390 = vector.broadcast %cst_133 : f32 to vector<2x32xf32>
    %391 = arith.addf %390, %389 : vector<2x32xf32>
    %392 = arith.divf %390, %391 : vector<2x32xf32>
    %393 = vector.extract_strided_slice %383 {offsets = [0, 32], sizes = [2, 32], strides = [1, 1]} : vector<2x128xf32> to vector<2x32xf32>
    %394 = arith.negf %393 : vector<2x32xf32>
    %395 = math.exp %394 : vector<2x32xf32>
    %cst_134 = arith.constant 1.000000e+00 : f32
    %396 = vector.broadcast %cst_134 : f32 to vector<2x32xf32>
    %397 = arith.addf %396, %395 : vector<2x32xf32>
    %398 = arith.divf %396, %397 : vector<2x32xf32>
    %399 = vector.extract_strided_slice %383 {offsets = [0, 64], sizes = [2, 32], strides = [1, 1]} : vector<2x128xf32> to vector<2x32xf32>
    %400 = math.tanh %399 : vector<2x32xf32>
    %401 = vector.extract_strided_slice %383 {offsets = [0, 96], sizes = [2, 32], strides = [1, 1]} : vector<2x128xf32> to vector<2x32xf32>
    %402 = arith.negf %401 : vector<2x32xf32>
    %403 = math.exp %402 : vector<2x32xf32>
    %cst_135 = arith.constant 1.000000e+00 : f32
    %404 = vector.broadcast %cst_135 : f32 to vector<2x32xf32>
    %405 = arith.addf %404, %403 : vector<2x32xf32>
    %406 = arith.divf %404, %405 : vector<2x32xf32>
    %407 = vector.extract_strided_slice %386 {offsets = [0, 0], sizes = [2, 32], strides = [1, 1]} : vector<2x128xf32> to vector<2x32xf32>
    %408 = arith.negf %407 : vector<2x32xf32>
    %409 = math.exp %408 : vector<2x32xf32>
    %cst_136 = arith.constant 1.000000e+00 : f32
    %410 = vector.broadcast %cst_136 : f32 to vector<2x32xf32>
    %411 = arith.addf %410, %409 : vector<2x32xf32>
    %412 = arith.divf %410, %411 : vector<2x32xf32>
    %413 = vector.extract_strided_slice %386 {offsets = [0, 32], sizes = [2, 32], strides = [1, 1]} : vector<2x128xf32> to vector<2x32xf32>
    %414 = arith.negf %413 : vector<2x32xf32>
    %415 = math.exp %414 : vector<2x32xf32>
    %cst_137 = arith.constant 1.000000e+00 : f32
    %416 = vector.broadcast %cst_137 : f32 to vector<2x32xf32>
    %417 = arith.addf %416, %415 : vector<2x32xf32>
    %418 = arith.divf %416, %417 : vector<2x32xf32>
    %419 = vector.extract_strided_slice %386 {offsets = [0, 64], sizes = [2, 32], strides = [1, 1]} : vector<2x128xf32> to vector<2x32xf32>
    %420 = math.tanh %419 : vector<2x32xf32>
    %421 = vector.extract_strided_slice %386 {offsets = [0, 96], sizes = [2, 32], strides = [1, 1]} : vector<2x128xf32> to vector<2x32xf32>
    %422 = arith.negf %421 : vector<2x32xf32>
    %423 = math.exp %422 : vector<2x32xf32>
    %cst_138 = arith.constant 1.000000e+00 : f32
    %424 = vector.broadcast %cst_138 : f32 to vector<2x32xf32>
    %425 = arith.addf %424, %423 : vector<2x32xf32>
    %426 = arith.divf %424, %425 : vector<2x32xf32>
    %427 = arith.mulf %398, %371 : vector<2x32xf32>
    %428 = arith.mulf %392, %400 : vector<2x32xf32>
    %429 = arith.addf %427, %428 : vector<2x32xf32>
    %430 = arith.mulf %418, %374 : vector<2x32xf32>
    %431 = arith.mulf %412, %420 : vector<2x32xf32>
    %432 = arith.addf %430, %431 : vector<2x32xf32>
    %433 = math.tanh %429 : vector<2x32xf32>
    %434 = arith.mulf %406, %433 : vector<2x32xf32>
    %435 = math.tanh %432 : vector<2x32xf32>
    %436 = arith.mulf %426, %435 : vector<2x32xf32>
    %c12_139 = arith.constant 12 : index
    %c0_140 = arith.constant 0 : index
    %437 = vector.load %arg8[%c12_139, %c0_140] : memref<16x32xf32, #tpu.memory_space<vmem>>, vector<2x32xf32>
    tpu.vector_store %arg8[%c12_139, %c0_140], %434 {strides = array<i32>} : memref<16x32xf32, #tpu.memory_space<vmem>>, vector<2x32xf32>,
    %c2_141 = arith.constant 2 : index
    %c0_142 = arith.constant 0 : index
    %438 = vector.load %arg9[%c2_141, %c0_142] : memref<16x32xf32, #tpu.memory_space<vmem>>, vector<2x32xf32>
    tpu.vector_store %arg9[%c2_141, %c0_142], %436 {strides = array<i32>} : memref<16x32xf32, #tpu.memory_space<vmem>>, vector<2x32xf32>,
    %c14_143 = arith.constant 14 : index
    %c0_144 = arith.constant 0 : index
    %439 = vector.load %arg12[%c14_143, %c0_144] : memref<16x128xf32, #tpu.memory_space<vmem>>, vector<2x128xf32>
    %cst_145 = arith.constant dense<0.000000e+00> : vector<2x128xf32>
    %440 = tpu.matmul %434, %22, %cst_145 {dimension_numbers = #tpu.dot_dimension_numbers<[1], [0], [0], [1], [0, 0, 1, 1], [], []>} : vector<2x32xf32>, vector<32x128xf32>, vector<2x128xf32> -> vector<2x128xf32>
    %441 = arith.addf %439, %440 : vector<2x128xf32>
    %c0_146 = arith.constant 0 : index
    %c0_147 = arith.constant 0 : index
    %442 = vector.load %arg13[%c0_146, %c0_147] : memref<16x128xf32, #tpu.memory_space<vmem>>, vector<2x128xf32>
    %cst_148 = arith.constant dense<0.000000e+00> : vector<2x128xf32>
    %443 = tpu.matmul %436, %24, %cst_148 {dimension_numbers = #tpu.dot_dimension_numbers<[1], [0], [0], [1], [0, 0, 1, 1], [], []>} : vector<2x32xf32>, vector<32x128xf32>, vector<2x128xf32> -> vector<2x128xf32>
    %444 = arith.addf %442, %443 : vector<2x128xf32>
    %445 = vector.extract_strided_slice %441 {offsets = [0, 0], sizes = [2, 32], strides = [1, 1]} : vector<2x128xf32> to vector<2x32xf32>
    %446 = arith.negf %445 : vector<2x32xf32>
    %447 = math.exp %446 : vector<2x32xf32>
    %cst_149 = arith.constant 1.000000e+00 : f32
    %448 = vector.broadcast %cst_149 : f32 to vector<2x32xf32>
    %449 = arith.addf %448, %447 : vector<2x32xf32>
    %450 = arith.divf %448, %449 : vector<2x32xf32>
    %451 = vector.extract_strided_slice %441 {offsets = [0, 32], sizes = [2, 32], strides = [1, 1]} : vector<2x128xf32> to vector<2x32xf32>
    %452 = arith.negf %451 : vector<2x32xf32>
    %453 = math.exp %452 : vector<2x32xf32>
    %cst_150 = arith.constant 1.000000e+00 : f32
    %454 = vector.broadcast %cst_150 : f32 to vector<2x32xf32>
    %455 = arith.addf %454, %453 : vector<2x32xf32>
    %456 = arith.divf %454, %455 : vector<2x32xf32>
    %457 = vector.extract_strided_slice %441 {offsets = [0, 64], sizes = [2, 32], strides = [1, 1]} : vector<2x128xf32> to vector<2x32xf32>
    %458 = math.tanh %457 : vector<2x32xf32>
    %459 = vector.extract_strided_slice %441 {offsets = [0, 96], sizes = [2, 32], strides = [1, 1]} : vector<2x128xf32> to vector<2x32xf32>
    %460 = arith.negf %459 : vector<2x32xf32>
    %461 = math.exp %460 : vector<2x32xf32>
    %cst_151 = arith.constant 1.000000e+00 : f32
    %462 = vector.broadcast %cst_151 : f32 to vector<2x32xf32>
    %463 = arith.addf %462, %461 : vector<2x32xf32>
    %464 = arith.divf %462, %463 : vector<2x32xf32>
    %465 = vector.extract_strided_slice %444 {offsets = [0, 0], sizes = [2, 32], strides = [1, 1]} : vector<2x128xf32> to vector<2x32xf32>
    %466 = arith.negf %465 : vector<2x32xf32>
    %467 = math.exp %466 : vector<2x32xf32>
    %cst_152 = arith.constant 1.000000e+00 : f32
    %468 = vector.broadcast %cst_152 : f32 to vector<2x32xf32>
    %469 = arith.addf %468, %467 : vector<2x32xf32>
    %470 = arith.divf %468, %469 : vector<2x32xf32>
    %471 = vector.extract_strided_slice %444 {offsets = [0, 32], sizes = [2, 32], strides = [1, 1]} : vector<2x128xf32> to vector<2x32xf32>
    %472 = arith.negf %471 : vector<2x32xf32>
    %473 = math.exp %472 : vector<2x32xf32>
    %cst_153 = arith.constant 1.000000e+00 : f32
    %474 = vector.broadcast %cst_153 : f32 to vector<2x32xf32>
    %475 = arith.addf %474, %473 : vector<2x32xf32>
    %476 = arith.divf %474, %475 : vector<2x32xf32>
    %477 = vector.extract_strided_slice %444 {offsets = [0, 64], sizes = [2, 32], strides = [1, 1]} : vector<2x128xf32> to vector<2x32xf32>
    %478 = math.tanh %477 : vector<2x32xf32>
    %479 = vector.extract_strided_slice %444 {offsets = [0, 96], sizes = [2, 32], strides = [1, 1]} : vector<2x128xf32> to vector<2x32xf32>
    %480 = arith.negf %479 : vector<2x32xf32>
    %481 = math.exp %480 : vector<2x32xf32>
    %cst_154 = arith.constant 1.000000e+00 : f32
    %482 = vector.broadcast %cst_154 : f32 to vector<2x32xf32>
    %483 = arith.addf %482, %481 : vector<2x32xf32>
    %484 = arith.divf %482, %483 : vector<2x32xf32>
    %485 = arith.mulf %456, %429 : vector<2x32xf32>
    %486 = arith.mulf %450, %458 : vector<2x32xf32>
    %487 = arith.addf %485, %486 : vector<2x32xf32>
    %488 = arith.mulf %476, %432 : vector<2x32xf32>
    %489 = arith.mulf %470, %478 : vector<2x32xf32>
    %490 = arith.addf %488, %489 : vector<2x32xf32>
    %491 = math.tanh %487 : vector<2x32xf32>
    %492 = arith.mulf %464, %491 : vector<2x32xf32>
    %493 = math.tanh %490 : vector<2x32xf32>
    %494 = arith.mulf %484, %493 : vector<2x32xf32>
    %c14_155 = arith.constant 14 : index
    %c0_156 = arith.constant 0 : index
    %495 = vector.load %arg8[%c14_155, %c0_156] : memref<16x32xf32, #tpu.memory_space<vmem>>, vector<2x32xf32>
    tpu.vector_store %arg8[%c14_155, %c0_156], %492 {strides = array<i32>} : memref<16x32xf32, #tpu.memory_space<vmem>>, vector<2x32xf32>,
    %c0_157 = arith.constant 0 : index
    %c0_158 = arith.constant 0 : index
    %496 = vector.load %arg9[%c0_157, %c0_158] : memref<16x32xf32, #tpu.memory_space<vmem>>, vector<2x32xf32>
    tpu.vector_store %arg9[%c0_157, %c0_158], %494 {strides = array<i32>} : memref<16x32xf32, #tpu.memory_space<vmem>>, vector<2x32xf32>,
    %c0_159 = arith.constant 0 : index
    %c0_160 = arith.constant 0 : index
    %c0_161 = arith.constant 0 : index
    %497 = vector.load %arg10[%c0_159, %c0_160, %c0_161] : memref<2x2x32xf32, #tpu.memory_space<vmem>>, vector<1x2x32xf32>
    %498 = vector.shape_cast %497 : vector<1x2x32xf32> to vector<2x32xf32>
    %499 = vector.shape_cast %492 : vector<2x32xf32> to vector<1x2x32xf32>
    tpu.vector_store %arg10[%c0_159, %c0_160, %c0_161], %499 {strides = array<i32>} : memref<2x2x32xf32, #tpu.memory_space<vmem>>, vector<1x2x32xf32>,
    %c1_162 = arith.constant 1 : index
    %c0_163 = arith.constant 0 : index
    %c0_164 = arith.constant 0 : index
    %500 = vector.load %arg10[%c1_162, %c0_163, %c0_164] : memref<2x2x32xf32, #tpu.memory_space<vmem>>, vector<1x2x32xf32>
    %501 = vector.shape_cast %500 : vector<1x2x32xf32> to vector<2x32xf32>
    %502 = vector.shape_cast %494 : vector<2x32xf32> to vector<1x2x32xf32>
    tpu.vector_store %arg10[%c1_162, %c0_163, %c0_164], %502 {strides = array<i32>} : memref<2x2x32xf32, #tpu.memory_space<vmem>>, vector<1x2x32xf32>,
    %c0_165 = arith.constant 0 : index
    %c0_166 = arith.constant 0 : index
    %c0_167 = arith.constant 0 : index
    %503 = vector.load %arg11[%c0_165, %c0_166, %c0_167] : memref<2x2x32xf32, #tpu.memory_space<vmem>>, vector<1x2x32xf32>
    %504 = vector.shape_cast %503 : vector<1x2x32xf32> to vector<2x32xf32>
    %505 = vector.shape_cast %487 : vector<2x32xf32> to vector<1x2x32xf32>
    tpu.vector_store %arg11[%c0_165, %c0_166, %c0_167], %505 {strides = array<i32>} : memref<2x2x32xf32, #tpu.memory_space<vmem>>, vector<1x2x32xf32>,
    %c1_168 = arith.constant 1 : index
    %c0_169 = arith.constant 0 : index
    %c0_170 = arith.constant 0 : index
    %506 = vector.load %arg11[%c1_168, %c0_169, %c0_170] : memref<2x2x32xf32, #tpu.memory_space<vmem>>, vector<1x2x32xf32>
    %507 = vector.shape_cast %506 : vector<1x2x32xf32> to vector<2x32xf32>
    %508 = vector.shape_cast %490 : vector<2x32xf32> to vector<1x2x32xf32>
    tpu.vector_store %arg11[%c1_168, %c0_169, %c0_170], %508 {strides = array<i32>} : memref<2x2x32xf32, #tpu.memory_space<vmem>>, vector<1x2x32xf32>,
    return
  }
  func.func @transform_0(%arg0: i32) -> (i32, i32) {
    %c0_i32 = arith.constant 0 : i32
    %c0_i32_0 = arith.constant 0 : i32
    return %arg0, %c0_i32 : i32, i32
  }
  func.func @transform_1(%arg0: i32) -> (i32, i32) {
    %c0_i32 = arith.constant 0 : i32
    %0 = arith.subi %c0_i32, %arg0 : i32
    %c0_i32_0 = arith.constant 0 : i32
    %c0_i32_1 = arith.constant 0 : i32
    return %0, %c0_i32_0 : i32, i32
  }
  func.func @transform_2(%arg0: i32) -> (i32, i32, i32) {
    %c0_i32 = arith.constant 0 : i32
    %c0_i32_0 = arith.constant 0 : i32
    %c0_i32_1 = arith.constant 0 : i32
    %c0_i32_2 = arith.constant 0 : i32
    return %c0_i32, %c0_i32_0, %c0_i32_1 : i32, i32, i32
  }
  func.func @transform_3(%arg0: i32) -> (i32, i32, i32) {
    %c0_i32 = arith.constant 0 : i32
    %c0_i32_0 = arith.constant 0 : i32
    %c0_i32_1 = arith.constant 0 : i32
    %c0_i32_2 = arith.constant 0 : i32
    return %c0_i32, %c0_i32_0, %c0_i32_1 : i32, i32, i32
  }
  func.func @transform_4(%arg0: i32) -> (i32, i32, i32) {
    %c0_i32 = arith.constant 0 : i32
    %c0_i32_0 = arith.constant 0 : i32
    %c0_i32_1 = arith.constant 0 : i32
    %c0_i32_2 = arith.constant 0 : i32
    return %c0_i32, %c0_i32_0, %c0_i32_1 : i32, i32, i32
  }
  func.func @transform_5(%arg0: i32) -> (i32, i32, i32) {
    %c0_i32 = arith.constant 0 : i32
    %c0_i32_0 = arith.constant 0 : i32
    %c0_i32_1 = arith.constant 0 : i32
    %c0_i32_2 = arith.constant 0 : i32
    return %c0_i32, %c0_i32_0, %c0_i32_1 : i32, i32, i32
  }
  func.func @transform_6(%arg0: i32) -> (i32, i32, i32) {
    %c0_i32 = arith.constant 0 : i32
    %c0_i32_0 = arith.constant 0 : i32
    %c0_i32_1 = arith.constant 0 : i32
    %c0_i32_2 = arith.constant 0 : i32
    return %c0_i32, %c0_i32_0, %c0_i32_1 : i32, i32, i32
  }
  func.func @transform_7(%arg0: i32) -> (i32, i32) {
    %c0_i32 = arith.constant 0 : i32
    %c0_i32_0 = arith.constant 0 : i32
    return %arg0, %c0_i32 : i32, i32
  }
  func.func @transform_8(%arg0: i32) -> (i32, i32) {
    %c0_i32 = arith.constant 0 : i32
    %0 = arith.subi %c0_i32, %arg0 : i32
    %c0_i32_0 = arith.constant 0 : i32
    %c0_i32_1 = arith.constant 0 : i32
    return %0, %c0_i32_0 : i32, i32
  }
  func.func @transform_9(%arg0: i32) -> (i32, i32, i32) {
    %c0_i32 = arith.constant 0 : i32
    %c0_i32_0 = arith.constant 0 : i32
    %c0_i32_1 = arith.constant 0 : i32
    %c0_i32_2 = arith.constant 0 : i32
    return %c0_i32, %c0_i32_0, %c0_i32_1 : i32, i32, i32
  }
  func.func @transform_10(%arg0: i32) -> (i32, i32, i32) {
    %c0_i32 = arith.constant 0 : i32
    %c0_i32_0 = arith.constant 0 : i32
    %c0_i32_1 = arith.constant 0 : i32
    %c0_i32_2 = arith.constant 0 : i32
    return %c0_i32, %c0_i32_0, %c0_i32_1 : i32, i32, i32
  }
}

</mosaic_0001>

<llo_original>
// kernel: _lambda_.5
$region0: #{_lambda_.5}
  #allocation0 [shape = 'u32[]', space=smem, size = 0x4, offset = 0x4, fixed_abs, tag = 'smem constant byte address 0x4 - core index']
  #allocation1 [shape = 'u32[72,128]{1,0:T(1,128)}', space=vmem, size = 0x9000, scoped, tag = 'internal scratch']
  %s0 = inlined_call_operand.vmem [shape: f32[16,32], index: 0, kind: input, shape index: {}]
  %s1 = inlined_call_operand.vmem [shape: f32[16,32], index: 1, kind: input, shape index: {}]
  %s2 = inlined_call_operand.hbm [shape: f32[32,32], index: 2, kind: input, shape index: {}]
  %s3 = inlined_call_operand.hbm [shape: f32[32,32], index: 3, kind: input, shape index: {}]
  %s4 = inlined_call_operand.vmem [shape: f32[1,32], index: 4, kind: input, shape index: {}]
  %s5 = inlined_call_operand.hbm [shape: f32[16,32], index: 5, kind: output, shape index: {}]
  %s6 = sld [smem:[#allocation0]]
  $region38: #{_lambda_.5} parent=0
    _
  %s8 = ssub.s32 1, %s6
  %s9 = scalar_select 0, %s8, %s6
  $region1: #{_lambda_.5} parent=0
    #allocation2 [shape = 'u8[16384]{0}', space=vmem, size = 0x4000, scoped, tag = 'input window, operand 2, single buffered']
    #allocation3 [shape = 's32[1]{0}', space=sflag, size = 0x4, scoped, tag = 'scoped memory for _lambda_.5']
    #allocation4 [shape = 's32[1]{0}', space=sflag, size = 0x4, scoped, tag = 'scoped memory for _lambda_.5']
    #allocation5 [shape = 'u8[16384]{0}', space=vmem, size = 0x4000, scoped, tag = 'input window, operand 3, single buffered']
    #allocation6 [shape = 's32[1]{0}', space=sflag, size = 0x4, scoped, tag = 'scoped memory for _lambda_.5']
    #allocation7 [shape = 'u8[8192]{0}', space=vmem, size = 0x2000, scoped, tag = 'output window, operand 0, single buffered']
    %10 = vsyncpa [#allocation3], 0
    %11 = vsyncpa [#allocation6], 0
    %12 = vsyncpa [#allocation4], 0
    // Predicated region
    $region2: #{_lambda_.5} parent=1 // pred_check
      _
    $region3: #{_lambda_.5} parent=1 // pred_check_branch
      %14 = sbr.rel (0) target = $region5
    $region4: #{_lambda_.5} parent=1 // pred_region
      _
    $region5: #{_lambda_.5} parent=1 // pred_fallthru
      _
    // Predicated region
    $region6: #{_lambda_.5} parent=1 // pred_check
      _
    $region7: #{_lambda_.5} parent=1 // pred_check_branch
      %16 = sbr.rel (0) target = $region9
    $region8: #{_lambda_.5} parent=1 // pred_region
      _
    $region9: #{_lambda_.5} parent=1 // pred_fallthru
      _
    // Predicated region
    $region10: #{_lambda_.5} parent=1 // pred_check
      _
    $region11: #{_lambda_.5} parent=1 // pred_check_branch
      %18 = sbr.rel (0) target = $region13
    $region12: #{_lambda_.5} parent=1 // pred_region
      %20 = vsyncadd [#allocation3], 0
      %s21 = sshll.u32 %s2, 4
      %s22 = int_to_ptr.hbm [resolvable:$true] %s21
      %s23 = sshll.u32 [#allocation2], 4
      %s24 = int_to_ptr.vmem [resolvable:$true] %s23
      %29 = dma.hbm_to_vmem [thread:$0]  %s22, 512, %s24, [#allocation3], 128, 128, 8
    $region13: #{_lambda_.5} parent=1 // pred_fallthru
      _
    // Predicated region
    $region14: #{_lambda_.5} parent=1 // pred_check
      _
    $region15: #{_lambda_.5} parent=1 // pred_check_branch
      %31 = sbr.rel (0) target = $region17
    $region16: #{_lambda_.5} parent=1 // pred_region
      %33 = vsyncadd [#allocation6], 0
      %s34 = sshll.u32 %s3, 4
      %s35 = int_to_ptr.hbm [resolvable:$true] %s34
      %s36 = sshll.u32 [#allocation5], 4
      %s37 = int_to_ptr.vmem [resolvable:$true] %s36
      %42 = dma.hbm_to_vmem [thread:$0]  %s35, 512, %s37, [#allocation6], 128, 128, 8
    $region17: #{_lambda_.5} parent=1 // pred_fallthru
      _
    // Predicated region
    $region18: #{_lambda_.5} parent=1 // pred_check
      _
    $region19: #{_lambda_.5} parent=1 // pred_check_branch
      %44 = sbr.rel (0) target = $region21
    $region20: #{_lambda_.5} parent=1 // pred_region
      _
    $region21: #{_lambda_.5} parent=1 // pred_fallthru
      _
    // Predicated region
    $region22: #{_lambda_.5} parent=1 // pred_check
      _
    $region23: #{_lambda_.5} parent=1 // pred_check_branch
      %46 = sbr.rel (0) target = $region25
    $region24: #{_lambda_.5} parent=1 // pred_region
      %48 = dma.done [#allocation3], 512
    $region25: #{_lambda_.5} parent=1 // pred_fallthru
      _
    // Predicated region
    $region26: #{_lambda_.5} parent=1 // pred_check
      _
    $region27: #{_lambda_.5} parent=1 // pred_check_branch
      %50 = sbr.rel (0) target = $region29
    $region28: #{_lambda_.5} parent=1 // pred_region
      %52 = dma.done [#allocation6], 512
    $region29: #{_lambda_.5} parent=1 // pred_fallthru
      _
    %v53 = vld [vmem:[%s0] sm:$0xff]
    %v54 = vld [vmem:[%s0 + $0x8] sm:$0xff]
    %v55 = vld [vmem:[#allocation2] sm:$0xff]
    %v56 = vld [vmem:[#allocation2 + $0x8] sm:$0xff]
    %v57 = vld [vmem:[#allocation2 + $0x10] sm:$0xff]
    %v58 = vld [vmem:[#allocation2 + $0x18] sm:$0xff]
    %v59 = vld [vmem:[%s1] sm:$0xff]
    %v60 = vld [vmem:[%s1 + $0x8] sm:$0xff]
    %v61 = vld [vmem:[#allocation5] sm:$0xff]
    %v62 = vld [vmem:[#allocation5 + $0x8] sm:$0xff]
    %v63 = vld [vmem:[#allocation5 + $0x10] sm:$0xff]
    %v64 = vld [vmem:[#allocation5 + $0x18] sm:$0xff]
    %vm65 = vcmask 261120
    %v67 = vsel %vm65, %v59, 0
    %v70 = vsel %vm65, %v60, 0
    %72 = vmatpush.msra.mxu0 0.0
    %73 = vmatpush.msra.mxu0 0.0
    %74 = vmatpush.msra.mxu0 0.0
    %75 = vmatpush.msra.mxu0 0.0
    %76 = vmatpush.msra.mxu0 0.0
    %77 = vmatpush.msra.mxu0 0.0
    %78 = vmatpush.msra.mxu0 0.0
    %79 = vmatpush.msra.mxu0 0.0
    %80 = vmatpush.msra.mxu0 0.0
    %81 = vmatpush.msra.mxu0 0.0
    %82 = vmatpush.msra.mxu0 0.0
    %83 = vmatpush.msra.mxu0 0.0
    %84 = vmatpush.msra.mxu0 %v64
    %85 = vmatpush.msra.mxu0 %v63
    %86 = vmatpush.msra.mxu0 %v62
    %87 = vmatpush.msra.mxu0 %v61
    %88 = vmatmul.f32.gmra.mxu0 %v67
    %v89 = vpop.f32.mrf.mxu0
    %v90 = vadd.f32 0.0, %v89
    %91 = vmatmul.f32.gmra.mxu0 %v70
    %v92 = vpop.f32.mrf.mxu0
    %v93 = vadd.f32 0.0, %v92
    %94 = vdwg.mxu0
    %v96 = vsel %vm65, %v53, 0
    %v99 = vsel %vm65, %v54, 0
    %101 = vmatpush.msra.mxu0 0.0
    %102 = vmatpush.msra.mxu0 0.0
    %103 = vmatpush.msra.mxu0 0.0
    %104 = vmatpush.msra.mxu0 0.0
    %105 = vmatpush.msra.mxu0 0.0
    %106 = vmatpush.msra.mxu0 0.0
    %107 = vmatpush.msra.mxu0 0.0
    %108 = vmatpush.msra.mxu0 0.0
    %109 = vmatpush.msra.mxu0 0.0
    %110 = vmatpush.msra.mxu0 0.0
    %111 = vmatpush.msra.mxu0 0.0
    %112 = vmatpush.msra.mxu0 0.0
    %113 = vmatpush.msra.mxu0 %v58
    %114 = vmatpush.msra.mxu0 %v57
    %115 = vmatpush.msra.mxu0 %v56
    %116 = vmatpush.msra.mxu0 %v55
    %117 = vmatmul.f32.gmra.mxu0 %v96
    %v118 = vpop.f32.mrf.mxu0
    %v119 = vadd.f32 %v90, %v118
    %120 = vmatmul.f32.gmra.mxu0 %v99
    %v121 = vpop.f32.mrf.mxu0
    %v122 = vadd.f32 %v93, %v121
    %123 = vdwg.mxu0
    %v124 = vld [vmem:[%s4] sm:$0x1]
    %v126 = vperm.slane %v124, 0
    %v128 = vadd.f32 %v119, %v126
    %v129 = vadd.f32 %v122, %v126
    %130 = vst.msk [vmem:[#allocation7] sm:$0xff] %vm65, %v128
    %131 = vst.msk [vmem:[#allocation7 + $0x8] sm:$0xff] %vm65, %v129
    // Predicated region
    $region30: #{_lambda_.5} parent=1 // pred_check
      _
    $region31: #{_lambda_.5} parent=1 // pred_check_branch
      %133 = sbr.rel (0) target = $region33
    $region32: #{_lambda_.5} parent=1 // pred_region
      %135 = vsyncadd [#allocation4], 0
      %s136 = sshll.u32 [#allocation7], 4
      %s137 = int_to_ptr.vmem [resolvable:$true] %s136
      %s138 = sshll.u32 %s5, 4
      %s139 = int_to_ptr.hbm [resolvable:$true] %s138
      %144 = dma.vmem_to_hbm [thread:$0]  %s137, 256, %s139, [#allocation4], 128, 128, 8
    $region33: #{_lambda_.5} parent=1 // pred_fallthru
      _
    // Predicated region
    $region34: #{_lambda_.5} parent=1 // pred_check
      _
    $region35: #{_lambda_.5} parent=1 // pred_check_branch
      %146 = sbr.rel (0) target = $region37
    $region36: #{_lambda_.5} parent=1 // pred_region
      %148 = dma.done [#allocation4], 256
    $region37: #{_lambda_.5} parent=1 // pred_fallthru
      _
    %149 = vsyncpa [#allocation3], 1
    %150 = vsyncpa [#allocation6], 1
    %151 = vsyncpa [#allocation4], 1

// kernel: _lambda_.3
$region0: #{_lambda_.3}
  #allocation0 [shape = 'u32[]', space=smem, size = 0x4, offset = 0x4, fixed_abs, tag = 'smem constant byte address 0x4 - core index']
  #allocation1 [shape = 'u32[72,128]{1,0:T(1,128)}', space=vmem, size = 0x9000, scoped, tag = 'internal scratch']
  #allocation2 [shape = 'f32[16,128]{1,0:T(8,128)}', space=vmem, size = 0x2000, scoped, tag = 'scratch operand']
  #allocation3 [shape = 'f32[16,128]{1,0:T(8,128)}', space=vmem, size = 0x2000, scoped, tag = 'scratch operand']
  %s0 = inlined_call_operand.hbm [shape: f32[16,32], index: 0, kind: input, shape index: {}, may-alias: {0,1}]
  %s1 = inlined_call_operand.hbm [shape: f32[16,32], index: 1, kind: input, shape index: {}, may-alias: {0,1}]
  %s2 = inlined_call_operand.hbm [shape: f32[2,32,128], index: 2, kind: input, shape index: {}]
  %s3 = inlined_call_operand.hbm [shape: f32[2,32,128], index: 3, kind: input, shape index: {}]
  %s4 = inlined_call_operand.vmem [shape: f32[2,1,128], index: 4, kind: input, shape index: {}]
  %s5 = inlined_call_operand.vmem [shape: f32[2,2,32], index: 5, kind: input, shape index: {}, may-alias: {5,6}]
  %s6 = inlined_call_operand.vmem [shape: f32[2,2,32], index: 6, kind: input, shape index: {}, may-alias: {5,6}]
  %s7 = inlined_call_operand.vmem [shape: f32[16,32], index: 7, kind: output, shape index: {0}]
  %s8 = inlined_call_operand.vmem [shape: f32[16,32], index: 8, kind: output, shape index: {1}]
  %s9 = inlined_call_operand.vmem [shape: f32[2,2,32], index: 9, kind: output, shape index: {2}]
  %s10 = inlined_call_operand.vmem [shape: f32[2,2,32], index: 10, kind: output, shape index: {3}]
  %11 = xla_tuple %s7, %s8, %s9, %s10
  %s12 = sld [smem:[#allocation0]]
  $region82: #{_lambda_.3} parent=0
    _
  %s14 = ssub.s32 1, %s12
  %s15 = scalar_select 0, %s14, %s12
  $region1: #{_lambda_.3} parent=0
    #allocation4 [shape = 'u8[8192]{0}', space=vmem, size = 0x2000, scoped, tag = 'input window, operand 0, single buffered']
    #allocation5 [shape = 's32[1]{0}', space=sflag, size = 0x4, scoped, tag = 'scoped memory for _lambda_.3']
    #allocation6 [shape = 'u8[8192]{0}', space=vmem, size = 0x2000, scoped, tag = 'input window, operand 1, single buffered']
    #allocation7 [shape = 's32[1]{0}', space=sflag, size = 0x4, scoped, tag = 'scoped memory for _lambda_.3']
    #allocation8 [shape = 'u8[32768]{0}', space=vmem, size = 0x8000, scoped, tag = 'input window, operand 2, single buffered']
    #allocation9 [shape = 'u8[32768]{0}', space=vmem, size = 0x8000, scoped, tag = 'input window, operand 3, single buffered']
    #allocation10 [shape = 's32[1]{0}', space=sflag, size = 0x4, scoped, tag = 'scoped memory for _lambda_.3']
    %16 = vsyncpa [#allocation5], 0
    %17 = vsyncpa [#allocation7], 0
    %18 = vsyncpa [#allocation10], 0
    // Predicated region
    $region2: #{_lambda_.3} parent=1 // pred_check
      _
    $region3: #{_lambda_.3} parent=1 // pred_check_branch
      %20 = sbr.rel (0) target = $region5
    $region4: #{_lambda_.3} parent=1 // pred_region
      %22 = vsyncadd [#allocation5], 0
      %s23 = sshll.u32 %s0, 4
      %s24 = int_to_ptr.hbm [resolvable:$true] %s23
      %s25 = sshll.u32 [#allocation4], 4
      %s26 = int_to_ptr.vmem [resolvable:$true] %s25
      %31 = dma.hbm_to_vmem [thread:$0]  %s24, 256, %s26, [#allocation5], 128, 128, 8
    $region5: #{_lambda_.3} parent=1 // pred_fallthru
      _
    // Predicated region
    $region6: #{_lambda_.3} parent=1 // pred_check
      _
    $region7: #{_lambda_.3} parent=1 // pred_check_branch
      %33 = sbr.rel (0) target = $region9
    $region8: #{_lambda_.3} parent=1 // pred_region
      %s34 = ssub.s32 0, 0
      %s35 = smul.u32 2, %s34
      %37 = vsyncadd [#allocation7], 0
      %s38 = smul.addr %s35, 8
      %s39 = scalar_lea.hbm %s1, %s38
      %s40 = sshll.u32 %s39, 4
      %s41 = int_to_ptr.hbm [resolvable:$true] %s40
      %s42 = sshll.u32 [#allocation6], 4
      %s43 = int_to_ptr.vmem [resolvable:$true] %s42
      %48 = dma.hbm_to_vmem [thread:$0]  %s41, 256, %s43, [#allocation7], 128, 128, 8
    $region9: #{_lambda_.3} parent=1 // pred_fallthru
      _
    // Predicated region
    $region10: #{_lambda_.3} parent=1 // pred_check
      _
    $region11: #{_lambda_.3} parent=1 // pred_check_branch
      %50 = sbr.rel (0) target = $region13
    $region12: #{_lambda_.3} parent=1 // pred_region
      %52 = vsyncadd [#allocation7], 0
      %s53 = sshll.u32 %s2, 4
      %s54 = int_to_ptr.hbm [resolvable:$true] %s53
      %s55 = sshll.u32 [#allocation8], 4
      %s56 = int_to_ptr.vmem [resolvable:$true] %s55
      %61 = dma.hbm_to_vmem [thread:$0]  %s54, 1024, %s56, [#allocation7], 128, 128, 8
    $region13: #{_lambda_.3} parent=1 // pred_fallthru
      _
    // Predicated region
    $region14: #{_lambda_.3} parent=1 // pred_check
      _
    $region15: #{_lambda_.3} parent=1 // pred_check_branch
      %63 = sbr.rel (0) target = $region17
    $region16: #{_lambda_.3} parent=1 // pred_region
      %65 = vsyncadd [#allocation10], 0
      %s66 = sshll.u32 %s3, 4
      %s67 = int_to_ptr.hbm [resolvable:$true] %s66
      %s68 = sshll.u32 [#allocation9], 4
      %s69 = int_to_ptr.vmem [resolvable:$true] %s68
      %74 = dma.hbm_to_vmem [thread:$0]  %s67, 1024, %s69, [#allocation10], 128, 128, 8
    $region17: #{_lambda_.3} parent=1 // pred_fallthru
      _
    // Predicated region
    $region18: #{_lambda_.3} parent=1 // pred_check
      _
    $region19: #{_lambda_.3} parent=1 // pred_check_branch
      %76 = sbr.rel (0) target = $region21
    $region20: #{_lambda_.3} parent=1 // pred_region
      _
    $region21: #{_lambda_.3} parent=1 // pred_fallthru
      _
    // Predicated region
    $region22: #{_lambda_.3} parent=1 // pred_check
      _
    $region23: #{_lambda_.3} parent=1 // pred_check_branch
      %78 = sbr.rel (0) target = $region25
    $region24: #{_lambda_.3} parent=1 // pred_region
      _
    $region25: #{_lambda_.3} parent=1 // pred_fallthru
      _
    // Predicated region
    $region26: #{_lambda_.3} parent=1 // pred_check
      _
    $region27: #{_lambda_.3} parent=1 // pred_check_branch
      %80 = sbr.rel (0) target = $region29
    $region28: #{_lambda_.3} parent=1 // pred_region
      _
    $region29: #{_lambda_.3} parent=1 // pred_fallthru
      _
    // Predicated region
    $region30: #{_lambda_.3} parent=1 // pred_check
      _
    $region31: #{_lambda_.3} parent=1 // pred_check_branch
      %82 = sbr.rel (0) target = $region33
    $region32: #{_lambda_.3} parent=1 // pred_region
      %84 = dma.done [#allocation5], 256
    $region33: #{_lambda_.3} parent=1 // pred_fallthru
      _
    // Predicated region
    $region34: #{_lambda_.3} parent=1 // pred_check
      _
    $region35: #{_lambda_.3} parent=1 // pred_check_branch
      %86 = sbr.rel (0) target = $region37
    $region36: #{_lambda_.3} parent=1 // pred_region
      %88 = dma.done [#allocation7], 256
    $region37: #{_lambda_.3} parent=1 // pred_fallthru
      _
    // Predicated region
    $region38: #{_lambda_.3} parent=1 // pred_check
      _
    $region39: #{_lambda_.3} parent=1 // pred_check_branch
      %90 = sbr.rel (0) target = $region41
    $region40: #{_lambda_.3} parent=1 // pred_region
      %92 = dma.done [#allocation7], 1024
    $region41: #{_lambda_.3} parent=1 // pred_fallthru
      _
    // Predicated region
    $region42: #{_lambda_.3} parent=1 // pred_check
      _
    $region43: #{_lambda_.3} parent=1 // pred_check_branch
      %94 = sbr.rel (0) target = $region45
    $region44: #{_lambda_.3} parent=1 // pred_region
      %96 = dma.done [#allocation10], 1024
    $region45: #{_lambda_.3} parent=1 // pred_fallthru
      _
    %s97 = ssub.s32 0, 0
    %s98 = smul.u32 2, %s97
    %p99 = scmp.lt.s32.totalorder %s98, 1
    %s100 = scalar_select %p99, %s98, 1
    %s101 = smul.addr %s100, 8
    %s102 = scalar_lea.vmem %s8, %s101
    %s103 = ssub.s32 0, 0
    %s104 = smul.u32 2, %s103
    %s105 = ssub.s32 0, 0
    %s106 = smul.u32 2, %s105
    %p107 = scmp.lt.s32.totalorder %s106, 1
    %s108 = scalar_select %p107, %s106, 1
    %s109 = smul.addr %s108, 8
    %s110 = scalar_lea.vmem %s8, %s109
    %s111 = ssub.s32 0, 0
    %s112 = smul.u32 2, %s111
    %p113 = scmp.eq.s32.totalorder 0, 0
    // Predicated region
    $region46: #{_lambda_.3} parent=1 // pred_check
      %p114 = pneg %p113
    $region47: #{_lambda_.3} parent=1 // pred_check_branch
      %116 = sbr.rel (%p114) target = $region49
    $region48: #{_lambda_.3} parent=1 // pred_region
      %v117 = vld [vmem:[%s5] sm:$0x3]
      %v118 = vld [vmem:[%s5 + $0x2] sm:$0x3]
      %vm119 = vcmask 254976
      %120 = vst.msk [vmem:[%s9] sm:$0x3] %vm119, %v117
      %121 = vst.msk [vmem:[%s9 + $0x2] sm:$0x3] %vm119, %v118
      %v122 = vld [vmem:[%s6] sm:$0x3]
      %v123 = vld [vmem:[%s6 + $0x2] sm:$0x3]
      %124 = vst.msk [vmem:[%s10] sm:$0x3] %vm119, %v122
      %125 = vst.msk [vmem:[%s10 + $0x2] sm:$0x3] %vm119, %v123
    $region49: #{_lambda_.3} parent=1 // pred_fallthru
      _
    %v126 = vld [vmem:[#allocation4] sm:$0xff]
    %v127 = vld [vmem:[#allocation4 + $0x8] sm:$0xff]
    %v128 = vld [vmem:[#allocation8] sm:$0xff]
    %v129 = vld [vmem:[#allocation8 + $0x8] sm:$0xff]
    %v130 = vld [vmem:[#allocation8 + $0x10] sm:$0xff]
    %v131 = vld [vmem:[#allocation8 + $0x18] sm:$0xff]
    %v132 = vld [vmem:[#allocation6] sm:$0xff]
    %v133 = vld [vmem:[#allocation6 + $0x8] sm:$0xff]
    %s134 = scalar_lea.vmem [#allocation8], 32
    %v135 = vld [vmem:[%s134] sm:$0xff]
    %v136 = vld [vmem:[%s134 + $0x8] sm:$0xff]
    %v137 = vld [vmem:[%s134 + $0x10] sm:$0xff]
    %v138 = vld [vmem:[%s134 + $0x18] sm:$0xff]
    %v139 = vld [vmem:[%s4] sm:$0x1]
    %v141 = vperm.slane %v139, 0
    %vm143 = vcmask 261120
    %v145 = vsel %vm143, %v126, 0
    %v148 = vsel %vm143, %v127, 0
    %150 = vmatpush.msra.mxu0 0.0
    %151 = vmatpush.msra.mxu0 0.0
    %152 = vmatpush.msra.mxu0 0.0
    %153 = vmatpush.msra.mxu0 0.0
    %154 = vmatpush.msra.mxu0 0.0
    %155 = vmatpush.msra.mxu0 0.0
    %156 = vmatpush.msra.mxu0 0.0
    %157 = vmatpush.msra.mxu0 0.0
    %158 = vmatpush.msra.mxu0 0.0
    %159 = vmatpush.msra.mxu0 0.0
    %160 = vmatpush.msra.mxu0 0.0
    %161 = vmatpush.msra.mxu0 0.0
    %162 = vmatpush.msra.mxu0 %v131
    %163 = vmatpush.msra.mxu0 %v130
    %164 = vmatpush.msra.mxu0 %v129
    %165 = vmatpush.msra.mxu0 %v128
    %166 = vmatmul.f32.gmra.mxu0 %v145
    %v167 = vpop.f32.mrf.mxu0
    %v168 = vadd.f32 %v141, %v167
    %169 = vmatmul.f32.gmra.mxu0 %v148
    %v170 = vpop.f32.mrf.mxu0
    %v171 = vadd.f32 %v141, %v170
    %172 = vdwg.mxu0
    %173 = vst [vmem:[#allocation2] sm:$0xff] %v168
    %174 = vst [vmem:[#allocation2 + $0x8] sm:$0xff] %v171
    %s175 = scalar_lea.vmem %s4, 1
    %v176 = vld [vmem:[%s175] sm:$0x1]
    %v178 = vperm.slane %v176, 0
    %v181 = vsel %vm143, %v132, 0
    %v184 = vsel %vm143, %v133, 0
    %186 = vmatpush.msra.mxu0 0.0
    %187 = vmatpush.msra.mxu0 0.0
    %188 = vmatpush.msra.mxu0 0.0
    %189 = vmatpush.msra.mxu0 0.0
    %190 = vmatpush.msra.mxu0 0.0
    %191 = vmatpush.msra.mxu0 0.0
    %192 = vmatpush.msra.mxu0 0.0
    %193 = vmatpush.msra.mxu0 0.0
    %194 = vmatpush.msra.mxu0 0.0
    %195 = vmatpush.msra.mxu0 0.0
    %196 = vmatpush.msra.mxu0 0.0
    %197 = vmatpush.msra.mxu0 0.0
    %198 = vmatpush.msra.mxu0 %v138
    %199 = vmatpush.msra.mxu0 %v137
    %200 = vmatpush.msra.mxu0 %v136
    %201 = vmatpush.msra.mxu0 %v135
    %202 = vmatmul.f32.gmra.mxu0 %v181
    %v203 = vpop.f32.mrf.mxu0
    %v204 = vadd.f32 %v178, %v203
    %205 = vmatmul.f32.gmra.mxu0 %v184
    %v206 = vpop.f32.mrf.mxu0
    %v207 = vadd.f32 %v178, %v206
    %208 = vdwg.mxu0
    %209 = vst [vmem:[#allocation3] sm:$0xff] %v204
    %210 = vst [vmem:[#allocation3 + $0x8] sm:$0xff] %v207
    %v211 = vld [vmem:[#allocation9] sm:$0xff]
    %v212 = vld [vmem:[#allocation9 + $0x8] sm:$0xff]
    %v213 = vld [vmem:[#allocation9 + $0x10] sm:$0xff]
    %v214 = vld [vmem:[#allocation9 + $0x18] sm:$0xff]
    %s215 = scalar_lea.vmem [#allocation9], 32
    %v216 = vld [vmem:[%s215] sm:$0xff]
    %v217 = vld [vmem:[%s215 + $0x8] sm:$0xff]
    %v218 = vld [vmem:[%s215 + $0x10] sm:$0xff]
    %v219 = vld [vmem:[%s215 + $0x18] sm:$0xff]
    %v220 = vld [vmem:[%s9] sm:$0x3]
    %s221 = scalar_lea.vmem %s9, 2
    %v222 = vld [vmem:[%s221] sm:$0x3]
    %v223 = vld [vmem:[%s10] sm:$0x3]
    %s224 = scalar_lea.vmem %s10, 2
    %v225 = vld [vmem:[%s224] sm:$0x3]
    %v226 = vld [vmem:[#allocation2] sm:$0x3]
    %v228 = vsel %vm143, %v220, 0
    %230 = vmatpush.msra.mxu0 0.0
    %231 = vmatpush.msra.mxu0 0.0
    %232 = vmatpush.msra.mxu0 0.0
    %233 = vmatpush.msra.mxu0 0.0
    %234 = vmatpush.msra.mxu0 0.0
    %235 = vmatpush.msra.mxu0 0.0
    %236 = vmatpush.msra.mxu0 0.0
    %237 = vmatpush.msra.mxu0 0.0
    %238 = vmatpush.msra.mxu0 0.0
    %239 = vmatpush.msra.mxu0 0.0
    %240 = vmatpush.msra.mxu0 0.0
    %241 = vmatpush.msra.mxu0 0.0
    %242 = vmatpush.msra.mxu0 %v214
    %243 = vmatpush.msra.mxu0 %v213
    %244 = vmatpush.msra.mxu0 %v212
    %245 = vmatpush.msra.mxu0 %v211
    %246 = vmatmul.f32.gmra.mxu0 %v228
    %v247 = vpop.f32.mrf.mxu0
    %v248 = vadd.f32 0.0, %v247
    %249 = vdwg.mxu0
    %v250 = vadd.f32 %v226, %v248
    %v251 = vld [vmem:[#allocation3 + $0xe] sm:$0x3]
    %v253 = vsel %vm143, %v222, 0
    %255 = vmatpush.msra.mxu0 0.0
    %256 = vmatpush.msra.mxu0 0.0
    %257 = vmatpush.msra.mxu0 0.0
    %258 = vmatpush.msra.mxu0 0.0
    %259 = vmatpush.msra.mxu0 0.0
    %260 = vmatpush.msra.mxu0 0.0
    %261 = vmatpush.msra.mxu0 0.0
    %262 = vmatpush.msra.mxu0 0.0
    %263 = vmatpush.msra.mxu0 0.0
    %264 = vmatpush.msra.mxu0 0.0
    %265 = vmatpush.msra.mxu0 0.0
    %266 = vmatpush.msra.mxu0 0.0
    %267 = vmatpush.msra.mxu0 %v219
    %268 = vmatpush.msra.mxu0 %v218
    %269 = vmatpush.msra.mxu0 %v217
    %270 = vmatpush.msra.mxu0 %v216
    %271 = vmatmul.f32.gmra.mxu0 %v253
    %v272 = vpop.f32.mrf.mxu0
    %v273 = vadd.f32 0.0, %v272
    %274 = vdwg.mxu0
    %v275 = vadd.f32 %v251, %v273
    %v276 = vxor.u32 %v250, 2147483648
    %v277 = vmul.f32 %v276, 1.442695
    %v278 = vpow.pop %v277
    %v279 = vadd.f32 %v278, 1.0
    %v280 = vrcp.pop %v279
    %v281 = vmul.f32 %v279, %v280
    %v282 = vsub.f32 1.0, %v281
    %v283 = vmul.f32 %v280, %v282
    %v284 = vadd.f32 %v280, %v283
    %vm285 = vweird.f32 %v279
    %vm286 = vweird.f32 %v280
    %vm287 = vmor %vm285, %vm286
    %v288 = vsel %vm287, %v280, %v284
    %v289 = vand.u32 2147483647, %v279
    %vm290 = vcmp.eq.f32.partialorder %v289, 8.507059e+37
    %v291 = vand.u32 %v279, 2147483648
    %v292 = vor.u32 1.1754944e-38, %v291
    %v293 = vsel %vm290, %v292, %v288
    %v294 = vmul.f32 1.0, %v293
    %v295 = vtanh.pop %v250
    %v296 = vxor.u32 %v275, 2147483648
    %v297 = vmul.f32 %v296, 1.442695
    %v298 = vpow.pop %v297
    %v299 = vadd.f32 %v298, 1.0
    %v300 = vrcp.pop %v299
    %v301 = vmul.f32 %v299, %v300
    %v302 = vsub.f32 1.0, %v301
    %v303 = vmul.f32 %v300, %v302
    %v304 = vadd.f32 %v300, %v303
    %vm305 = vweird.f32 %v299
    %vm306 = vweird.f32 %v300
    %vm307 = vmor %vm305, %vm306
    %v308 = vsel %vm307, %v300, %v304
    %v309 = vand.u32 2147483647, %v299
    %vm310 = vcmp.eq.f32.partialorder %v309, 8.507059e+37
    %v311 = vand.u32 %v299, 2147483648
    %v312 = vor.u32 1.1754944e-38, %v311
    %v313 = vsel %vm310, %v312, %v308
    %v314 = vmul.f32 1.0, %v313
    %v315 = vtanh.pop %v275
    %317 = vrot.lane.b32.xlu0 %v223, 32
    %v318 = vpop.permute.xlu0 %317
    %v320 = vmul.f32 %v294, %v318
    %322 = vrot.lane.b32.xlu0 %v295, 64
    %v323 = vpop.permute.xlu0 %322
    %v325 = vmul.f32 %v294, %v323
    %327 = vrot.lane.b32.xlu0 %v325, 32
    %v328 = vpop.permute.xlu0 %327
    %v330 = vadd.f32 %v320, %v328
    %332 = vrot.lane.b32.xlu0 %v225, 32
    %v333 = vpop.permute.xlu0 %332
    %v335 = vmul.f32 %v314, %v333
    %337 = vrot.lane.b32.xlu0 %v315, 64
    %v338 = vpop.permute.xlu0 %337
    %v340 = vmul.f32 %v314, %v338
    %342 = vrot.lane.b32.xlu0 %v340, 32
    %v343 = vpop.permute.xlu0 %342
    %v345 = vadd.f32 %v335, %v343
    %v346 = vtanh.pop %v330
    %348 = vrot.lane.b32.xlu0 %v346, 64
    %v349 = vpop.permute.xlu0 %348
    %v351 = vmul.f32 %v294, %v349
    %v352 = vtanh.pop %v345
    %354 = vrot.lane.b32.xlu0 %v352, 64
    %v355 = vpop.permute.xlu0 %354
    %v357 = vmul.f32 %v314, %v355
    %359 = vrot.lane.b32.xlu0 %v351, 32
    %v360 = vpop.permute.xlu0 %359
    %vm362 = vcmask 254976
    %363 = vst.msk [vmem:[%s7] sm:$0x3] %vm362, %v360
    %365 = vrot.lane.b32.xlu0 %v357, 32
    %v366 = vpop.permute.xlu0 %365
    %368 = vst.msk [vmem:[%s110 + $0xe] sm:$0x3] %vm362, %v366
    %v369 = vld [vmem:[#allocation2 + $0x2] sm:$0x3]
    %v370 = vsel %vm143, %v360, 0
    %372 = vmatpush.msra.mxu0 0.0
    %373 = vmatpush.msra.mxu0 0.0
    %374 = vmatpush.msra.mxu0 0.0
    %375 = vmatpush.msra.mxu0 0.0
    %376 = vmatpush.msra.mxu0 0.0
    %377 = vmatpush.msra.mxu0 0.0
    %378 = vmatpush.msra.mxu0 0.0
    %379 = vmatpush.msra.mxu0 0.0
    %380 = vmatpush.msra.mxu0 0.0
    %381 = vmatpush.msra.mxu0 0.0
    %382 = vmatpush.msra.mxu0 0.0
    %383 = vmatpush.msra.mxu0 0.0
    %384 = vmatpush.msra.mxu0 %v214
    %385 = vmatpush.msra.mxu0 %v213
    %386 = vmatpush.msra.mxu0 %v212
    %387 = vmatpush.msra.mxu0 %v211
    %388 = vmatmul.f32.gmra.mxu0 %v370
    %v389 = vpop.f32.mrf.mxu0
    %v390 = vadd.f32 0.0, %v389
    %391 = vdwg.mxu0
    %v392 = vadd.f32 %v369, %v390
    %v393 = vld [vmem:[#allocation3 + $0xc] sm:$0x3]
    %v394 = vsel %vm143, %v366, 0
    %396 = vmatpush.msra.mxu0 0.0
    %397 = vmatpush.msra.mxu0 0.0
    %398 = vmatpush.msra.mxu0 0.0
    %399 = vmatpush.msra.mxu0 0.0
    %400 = vmatpush.msra.mxu0 0.0
    %401 = vmatpush.msra.mxu0 0.0
    %402 = vmatpush.msra.mxu0 0.0
    %403 = vmatpush.msra.mxu0 0.0
    %404 = vmatpush.msra.mxu0 0.0
    %405 = vmatpush.msra.mxu0 0.0
    %406 = vmatpush.msra.mxu0 0.0
    %407 = vmatpush.msra.mxu0 0.0
    %408 = vmatpush.msra.mxu0 %v219
    %409 = vmatpush.msra.mxu0 %v218
    %410 = vmatpush.msra.mxu0 %v217
    %411 = vmatpush.msra.mxu0 %v216
    %412 = vmatmul.f32.gmra.mxu0 %v394
    %v413 = vpop.f32.mrf.mxu0
    %v414 = vadd.f32 0.0, %v413
    %415 = vdwg.mxu0
    %v416 = vadd.f32 %v393, %v414
    %v417 = vxor.u32 %v392, 2147483648
    %v418 = vmul.f32 %v417, 1.442695
    %v419 = vpow.pop %v418
    %v420 = vadd.f32 %v419, 1.0
    %v421 = vrcp.pop %v420
    %v422 = vmul.f32 %v420, %v421
    %v423 = vsub.f32 1.0, %v422
    %v424 = vmul.f32 %v421, %v423
    %v425 = vadd.f32 %v421, %v424
    %vm426 = vweird.f32 %v420
    %vm427 = vweird.f32 %v421
    %vm428 = vmor %vm426, %vm427
    %v429 = vsel %vm428, %v421, %v425
    %v430 = vand.u32 2147483647, %v420
    %vm431 = vcmp.eq.f32.partialorder %v430, 8.507059e+37
    %v432 = vand.u32 %v420, 2147483648
    %v433 = vor.u32 1.1754944e-38, %v432
    %v434 = vsel %vm431, %v433, %v429
    %v435 = vmul.f32 1.0, %v434
    %v436 = vtanh.pop %v392
    %v437 = vxor.u32 %v416, 2147483648
    %v438 = vmul.f32 %v437, 1.442695
    %v439 = vpow.pop %v438
    %v440 = vadd.f32 %v439, 1.0
    %v441 = vrcp.pop %v440
    %v442 = vmul.f32 %v440, %v441
    %v443 = vsub.f32 1.0, %v442
    %v444 = vmul.f32 %v441, %v443
    %v445 = vadd.f32 %v441, %v444
    %vm446 = vweird.f32 %v440
    %vm447 = vweird.f32 %v441
    %vm448 = vmor %vm446, %vm447
    %v449 = vsel %vm448, %v441, %v445
    %v450 = vand.u32 2147483647, %v440
    %vm451 = vcmp.eq.f32.partialorder %v450, 8.507059e+37
    %v452 = vand.u32 %v440, 2147483648
    %v453 = vor.u32 1.1754944e-38, %v452
    %v454 = vsel %vm451, %v453, %v449
    %v455 = vmul.f32 1.0, %v454
    %v456 = vtanh.pop %v416
    %v457 = vmul.f32 %v435, %v330
    %459 = vrot.lane.b32.xlu0 %v436, 64
    %v460 = vpop.permute.xlu0 %459
    %v462 = vmul.f32 %v435, %v460
    %464 = vrot.lane.b32.xlu0 %v462, 32
    %v465 = vpop.permute.xlu0 %464
    %v467 = vadd.f32 %v457, %v465
    %v468 = vmul.f32 %v455, %v345
    %470 = vrot.lane.b32.xlu0 %v456, 64
    %v471 = vpop.permute.xlu0 %470
    %v473 = vmul.f32 %v455, %v471
    %475 = vrot.lane.b32.xlu0 %v473, 32
    %v476 = vpop.permute.xlu0 %475
    %v478 = vadd.f32 %v468, %v476
    %v479 = vtanh.pop %v467
    %481 = vrot.lane.b32.xlu0 %v479, 64
    %v482 = vpop.permute.xlu0 %481
    %v484 = vmul.f32 %v435, %v482
    %v485 = vtanh.pop %v478
    %487 = vrot.lane.b32.xlu0 %v485, 64
    %v488 = vpop.permute.xlu0 %487
    %v490 = vmul.f32 %v455, %v488
    %492 = vrot.lane.b32.xlu0 %v484, 32
    %v493 = vpop.permute.xlu0 %492
    %495 = vst.msk [vmem:[%s7 + $0x2] sm:$0x3] %vm362, %v493
    %497 = vrot.lane.b32.xlu0 %v490, 32
    %v498 = vpop.permute.xlu0 %497
    %500 = vst.msk [vmem:[%s110 + $0xc] sm:$0x3] %vm362, %v498
    %v501 = vld [vmem:[#allocation2 + $0x4] sm:$0x3]
    %v502 = vsel %vm143, %v493, 0
    %504 = vmatpush.msra.mxu0 0.0
    %505 = vmatpush.msra.mxu0 0.0
    %506 = vmatpush.msra.mxu0 0.0
    %507 = vmatpush.msra.mxu0 0.0
    %508 = vmatpush.msra.mxu0 0.0
    %509 = vmatpush.msra.mxu0 0.0
    %510 = vmatpush.msra.mxu0 0.0
    %511 = vmatpush.msra.mxu0 0.0
    %512 = vmatpush.msra.mxu0 0.0
    %513 = vmatpush.msra.mxu0 0.0
    %514 = vmatpush.msra.mxu0 0.0
    %515 = vmatpush.msra.mxu0 0.0
    %516 = vmatpush.msra.mxu0 %v214
    %517 = vmatpush.msra.mxu0 %v213
    %518 = vmatpush.msra.mxu0 %v212
    %519 = vmatpush.msra.mxu0 %v211
    %520 = vmatmul.f32.gmra.mxu0 %v502
    %v521 = vpop.f32.mrf.mxu0
    %v522 = vadd.f32 0.0, %v521
    %523 = vdwg.mxu0
    %v524 = vadd.f32 %v501, %v522
    %v525 = vld [vmem:[#allocation3 + $0xa] sm:$0x3]
    %v526 = vsel %vm143, %v498, 0
    %528 = vmatpush.msra.mxu0 0.0
    %529 = vmatpush.msra.mxu0 0.0
    %530 = vmatpush.msra.mxu0 0.0
    %531 = vmatpush.msra.mxu0 0.0
    %532 = vmatpush.msra.mxu0 0.0
    %533 = vmatpush.msra.mxu0 0.0
    %534 = vmatpush.msra.mxu0 0.0
    %535 = vmatpush.msra.mxu0 0.0
    %536 = vmatpush.msra.mxu0 0.0
    %537 = vmatpush.msra.mxu0 0.0
    %538 = vmatpush.msra.mxu0 0.0
    %539 = vmatpush.msra.mxu0 0.0
    %540 = vmatpush.msra.mxu0 %v219
    %541 = vmatpush.msra.mxu0 %v218
    %542 = vmatpush.msra.mxu0 %v217
    %543 = vmatpush.msra.mxu0 %v216
    %544 = vmatmul.f32.gmra.mxu0 %v526
    %v545 = vpop.f32.mrf.mxu0
    %v546 = vadd.f32 0.0, %v545
    %547 = vdwg.mxu0
    %v548 = vadd.f32 %v525, %v546
    %v549 = vxor.u32 %v524, 2147483648
    %v550 = vmul.f32 %v549, 1.442695
    %v551 = vpow.pop %v550
    %v552 = vadd.f32 %v551, 1.0
    %v553 = vrcp.pop %v552
    %v554 = vmul.f32 %v552, %v553
    %v555 = vsub.f32 1.0, %v554
    %v556 = vmul.f32 %v553, %v555
    %v557 = vadd.f32 %v553, %v556
    %vm558 = vweird.f32 %v552
    %vm559 = vweird.f32 %v553
    %vm560 = vmor %vm558, %vm559
    %v561 = vsel %vm560, %v553, %v557
    %v562 = vand.u32 2147483647, %v552
    %vm563 = vcmp.eq.f32.partialorder %v562, 8.507059e+37
    %v564 = vand.u32 %v552, 2147483648
    %v565 = vor.u32 1.1754944e-38, %v564
    %v566 = vsel %vm563, %v565, %v561
    %v567 = vmul.f32 1.0, %v566
    %v568 = vtanh.pop %v524
    %v569 = vxor.u32 %v548, 2147483648
    %v570 = vmul.f32 %v569, 1.442695
    %v571 = vpow.pop %v570
    %v572 = vadd.f32 %v571, 1.0
    %v573 = vrcp.pop %v572
    %v574 = vmul.f32 %v572, %v573
    %v575 = vsub.f32 1.0, %v574
    %v576 = vmul.f32 %v573, %v575
    %v577 = vadd.f32 %v573, %v576
    %vm578 = vweird.f32 %v572
    %vm579 = vweird.f32 %v573
    %vm580 = vmor %vm578, %vm579
    %v581 = vsel %vm580, %v573, %v577
    %v582 = vand.u32 2147483647, %v572
    %vm583 = vcmp.eq.f32.partialorder %v582, 8.507059e+37
    %v584 = vand.u32 %v572, 2147483648
    %v585 = vor.u32 1.1754944e-38, %v584
    %v586 = vsel %vm583, %v585, %v581
    %v587 = vmul.f32 1.0, %v586
    %v588 = vtanh.pop %v548
    %v589 = vmul.f32 %v567, %v467
    %591 = vrot.lane.b32.xlu0 %v568, 64
    %v592 = vpop.permute.xlu0 %591
    %v594 = vmul.f32 %v567, %v592
    %596 = vrot.lane.b32.xlu0 %v594, 32
    %v597 = vpop.permute.xlu0 %596
    %v599 = vadd.f32 %v589, %v597
    %v600 = vmul.f32 %v587, %v478
    %602 = vrot.lane.b32.xlu0 %v588, 64
    %v603 = vpop.permute.xlu0 %602
    %v605 = vmul.f32 %v587, %v603
    %607 = vrot.lane.b32.xlu0 %v605, 32
    %v608 = vpop.permute.xlu0 %607
    %v610 = vadd.f32 %v600, %v608
    %v611 = vtanh.pop %v599
    %613 = vrot.lane.b32.xlu0 %v611, 64
    %v614 = vpop.permute.xlu0 %613
    %v616 = vmul.f32 %v567, %v614
    %v617 = vtanh.pop %v610
    %619 = vrot.lane.b32.xlu0 %v617, 64
    %v620 = vpop.permute.xlu0 %619
    %v622 = vmul.f32 %v587, %v620
    %624 = vrot.lane.b32.xlu0 %v616, 32
    %v625 = vpop.permute.xlu0 %624
    %627 = vst.msk [vmem:[%s7 + $0x4] sm:$0x3] %vm362, %v625
    %629 = vrot.lane.b32.xlu0 %v622, 32
    %v630 = vpop.permute.xlu0 %629
    %632 = vst.msk [vmem:[%s110 + $0xa] sm:$0x3] %vm362, %v630
    %v633 = vld [vmem:[#allocation2 + $0x6] sm:$0x3]
    %v634 = vsel %vm143, %v625, 0
    %636 = vmatpush.msra.mxu0 0.0
    %637 = vmatpush.msra.mxu0 0.0
    %638 = vmatpush.msra.mxu0 0.0
    %639 = vmatpush.msra.mxu0 0.0
    %640 = vmatpush.msra.mxu0 0.0
    %641 = vmatpush.msra.mxu0 0.0
    %642 = vmatpush.msra.mxu0 0.0
    %643 = vmatpush.msra.mxu0 0.0
    %644 = vmatpush.msra.mxu0 0.0
    %645 = vmatpush.msra.mxu0 0.0
    %646 = vmatpush.msra.mxu0 0.0
    %647 = vmatpush.msra.mxu0 0.0
    %648 = vmatpush.msra.mxu0 %v214
    %649 = vmatpush.msra.mxu0 %v213
    %650 = vmatpush.msra.mxu0 %v212
    %651 = vmatpush.msra.mxu0 %v211
    %652 = vmatmul.f32.gmra.mxu0 %v634
    %v653 = vpop.f32.mrf.mxu0
    %v654 = vadd.f32 0.0, %v653
    %655 = vdwg.mxu0
    %v656 = vadd.f32 %v633, %v654
    %v657 = vld [vmem:[#allocation3 + $0x8] sm:$0x3]
    %v658 = vsel %vm143, %v630, 0
    %660 = vmatpush.msra.mxu0 0.0
    %661 = vmatpush.msra.mxu0 0.0
    %662 = vmatpush.msra.mxu0 0.0
    %663 = vmatpush.msra.mxu0 0.0
    %664 = vmatpush.msra.mxu0 0.0
    %665 = vmatpush.msra.mxu0 0.0
    %666 = vmatpush.msra.mxu0 0.0
    %667 = vmatpush.msra.mxu0 0.0
    %668 = vmatpush.msra.mxu0 0.0
    %669 = vmatpush.msra.mxu0 0.0
    %670 = vmatpush.msra.mxu0 0.0
    %671 = vmatpush.msra.mxu0 0.0
    %672 = vmatpush.msra.mxu0 %v219
    %673 = vmatpush.msra.mxu0 %v218
    %674 = vmatpush.msra.mxu0 %v217
    %675 = vmatpush.msra.mxu0 %v216
    %676 = vmatmul.f32.gmra.mxu0 %v658
    %v677 = vpop.f32.mrf.mxu0
    %v678 = vadd.f32 0.0, %v677
    %679 = vdwg.mxu0
    %v680 = vadd.f32 %v657, %v678
    %v681 = vxor.u32 %v656, 2147483648
    %v682 = vmul.f32 %v681, 1.442695
    %v683 = vpow.pop %v682
    %v684 = vadd.f32 %v683, 1.0
    %v685 = vrcp.pop %v684
    %v686 = vmul.f32 %v684, %v685
    %v687 = vsub.f32 1.0, %v686
    %v688 = vmul.f32 %v685, %v687
    %v689 = vadd.f32 %v685, %v688
    %vm690 = vweird.f32 %v684
    %vm691 = vweird.f32 %v685
    %vm692 = vmor %vm690, %vm691
    %v693 = vsel %vm692, %v685, %v689
    %v694 = vand.u32 2147483647, %v684
    %vm695 = vcmp.eq.f32.partialorder %v694, 8.507059e+37
    %v696 = vand.u32 %v684, 2147483648
    %v697 = vor.u32 1.1754944e-38, %v696
    %v698 = vsel %vm695, %v697, %v693
    %v699 = vmul.f32 1.0, %v698
    %v700 = vtanh.pop %v656
    %v701 = vxor.u32 %v680, 2147483648
    %v702 = vmul.f32 %v701, 1.442695
    %v703 = vpow.pop %v702
    %v704 = vadd.f32 %v703, 1.0
    %v705 = vrcp.pop %v704
    %v706 = vmul.f32 %v704, %v705
    %v707 = vsub.f32 1.0, %v706
    %v708 = vmul.f32 %v705, %v707
    %v709 = vadd.f32 %v705, %v708
    %vm710 = vweird.f32 %v704
    %vm711 = vweird.f32 %v705
    %vm712 = vmor %vm710, %vm711
    %v713 = vsel %vm712, %v705, %v709
    %v714 = vand.u32 2147483647, %v704
    %vm715 = vcmp.eq.f32.partialorder %v714, 8.507059e+37
    %v716 = vand.u32 %v704, 2147483648
    %v717 = vor.u32 1.1754944e-38, %v716
    %v718 = vsel %vm715, %v717, %v713
    %v719 = vmul.f32 1.0, %v718
    %v720 = vtanh.pop %v680
    %v721 = vmul.f32 %v699, %v599
    %723 = vrot.lane.b32.xlu0 %v700, 64
    %v724 = vpop.permute.xlu0 %723
    %v726 = vmul.f32 %v699, %v724
    %728 = vrot.lane.b32.xlu0 %v726, 32
    %v729 = vpop.permute.xlu0 %728
    %v731 = vadd.f32 %v721, %v729
    %v732 = vmul.f32 %v719, %v610
    %734 = vrot.lane.b32.xlu0 %v720, 64
    %v735 = vpop.permute.xlu0 %734
    %v737 = vmul.f32 %v719, %v735
    %739 = vrot.lane.b32.xlu0 %v737, 32
    %v740 = vpop.permute.xlu0 %739
    %v742 = vadd.f32 %v732, %v740
    %v743 = vtanh.pop %v731
    %745 = vrot.lane.b32.xlu0 %v743, 64
    %v746 = vpop.permute.xlu0 %745
    %v748 = vmul.f32 %v699, %v746
    %v749 = vtanh.pop %v742
    %751 = vrot.lane.b32.xlu0 %v749, 64
    %v752 = vpop.permute.xlu0 %751
    %v754 = vmul.f32 %v719, %v752
    %756 = vrot.lane.b32.xlu0 %v748, 32
    %v757 = vpop.permute.xlu0 %756
    %759 = vst.msk [vmem:[%s7 + $0x6] sm:$0x3] %vm362, %v757
    %761 = vrot.lane.b32.xlu0 %v754, 32
    %v762 = vpop.permute.xlu0 %761
    %764 = vst.msk [vmem:[%s110 + $0x8] sm:$0x3] %vm362, %v762
    %v765 = vld [vmem:[#allocation2 + $0x8] sm:$0x3]
    %v766 = vsel %vm143, %v757, 0
    %768 = vmatpush.msra.mxu0 0.0
    %769 = vmatpush.msra.mxu0 0.0
    %770 = vmatpush.msra.mxu0 0.0
    %771 = vmatpush.msra.mxu0 0.0
    %772 = vmatpush.msra.mxu0 0.0
    %773 = vmatpush.msra.mxu0 0.0
    %774 = vmatpush.msra.mxu0 0.0
    %775 = vmatpush.msra.mxu0 0.0
    %776 = vmatpush.msra.mxu0 0.0
    %777 = vmatpush.msra.mxu0 0.0
    %778 = vmatpush.msra.mxu0 0.0
    %779 = vmatpush.msra.mxu0 0.0
    %780 = vmatpush.msra.mxu0 %v214
    %781 = vmatpush.msra.mxu0 %v213
    %782 = vmatpush.msra.mxu0 %v212
    %783 = vmatpush.msra.mxu0 %v211
    %784 = vmatmul.f32.gmra.mxu0 %v766
    %v785 = vpop.f32.mrf.mxu0
    %v786 = vadd.f32 0.0, %v785
    %787 = vdwg.mxu0
    %v788 = vadd.f32 %v765, %v786
    %v789 = vld [vmem:[#allocation3 + $0x6] sm:$0x3]
    %v790 = vsel %vm143, %v762, 0
    %792 = vmatpush.msra.mxu0 0.0
    %793 = vmatpush.msra.mxu0 0.0
    %794 = vmatpush.msra.mxu0 0.0
    %795 = vmatpush.msra.mxu0 0.0
    %796 = vmatpush.msra.mxu0 0.0
    %797 = vmatpush.msra.mxu0 0.0
    %798 = vmatpush.msra.mxu0 0.0
    %799 = vmatpush.msra.mxu0 0.0
    %800 = vmatpush.msra.mxu0 0.0
    %801 = vmatpush.msra.mxu0 0.0
    %802 = vmatpush.msra.mxu0 0.0
    %803 = vmatpush.msra.mxu0 0.0
    %804 = vmatpush.msra.mxu0 %v219
    %805 = vmatpush.msra.mxu0 %v218
    %806 = vmatpush.msra.mxu0 %v217
    %807 = vmatpush.msra.mxu0 %v216
    %808 = vmatmul.f32.gmra.mxu0 %v790
    %v809 = vpop.f32.mrf.mxu0
    %v810 = vadd.f32 0.0, %v809
    %811 = vdwg.mxu0
    %v812 = vadd.f32 %v789, %v810
    %v813 = vxor.u32 %v788, 2147483648
    %v814 = vmul.f32 %v813, 1.442695
    %v815 = vpow.pop %v814
    %v816 = vadd.f32 %v815, 1.0
    %v817 = vrcp.pop %v816
    %v818 = vmul.f32 %v816, %v817
    %v819 = vsub.f32 1.0, %v818
    %v820 = vmul.f32 %v817, %v819
    %v821 = vadd.f32 %v817, %v820
    %vm822 = vweird.f32 %v816
    %vm823 = vweird.f32 %v817
    %vm824 = vmor %vm822, %vm823
    %v825 = vsel %vm824, %v817, %v821
    %v826 = vand.u32 2147483647, %v816
    %vm827 = vcmp.eq.f32.partialorder %v826, 8.507059e+37
    %v828 = vand.u32 %v816, 2147483648
    %v829 = vor.u32 1.1754944e-38, %v828
    %v830 = vsel %vm827, %v829, %v825
    %v831 = vmul.f32 1.0, %v830
    %v832 = vtanh.pop %v788
    %v833 = vxor.u32 %v812, 2147483648
    %v834 = vmul.f32 %v833, 1.442695
    %v835 = vpow.pop %v834
    %v836 = vadd.f32 %v835, 1.0
    %v837 = vrcp.pop %v836
    %v838 = vmul.f32 %v836, %v837
    %v839 = vsub.f32 1.0, %v838
    %v840 = vmul.f32 %v837, %v839
    %v841 = vadd.f32 %v837, %v840
    %vm842 = vweird.f32 %v836
    %vm843 = vweird.f32 %v837
    %vm844 = vmor %vm842, %vm843
    %v845 = vsel %vm844, %v837, %v841
    %v846 = vand.u32 2147483647, %v836
    %vm847 = vcmp.eq.f32.partialorder %v846, 8.507059e+37
    %v848 = vand.u32 %v836, 2147483648
    %v849 = vor.u32 1.1754944e-38, %v848
    %v850 = vsel %vm847, %v849, %v845
    %v851 = vmul.f32 1.0, %v850
    %v852 = vtanh.pop %v812
    %v853 = vmul.f32 %v831, %v731
    %855 = vrot.lane.b32.xlu0 %v832, 64
    %v856 = vpop.permute.xlu0 %855
    %v858 = vmul.f32 %v831, %v856
    %860 = vrot.lane.b32.xlu0 %v858, 32
    %v861 = vpop.permute.xlu0 %860
    %v863 = vadd.f32 %v853, %v861
    %v864 = vmul.f32 %v851, %v742
    %866 = vrot.lane.b32.xlu0 %v852, 64
    %v867 = vpop.permute.xlu0 %866
    %v869 = vmul.f32 %v851, %v867
    %871 = vrot.lane.b32.xlu0 %v869, 32
    %v872 = vpop.permute.xlu0 %871
    %v874 = vadd.f32 %v864, %v872
    %v875 = vtanh.pop %v863
    %877 = vrot.lane.b32.xlu0 %v875, 64
    %v878 = vpop.permute.xlu0 %877
    %v880 = vmul.f32 %v831, %v878
    %v881 = vtanh.pop %v874
    %883 = vrot.lane.b32.xlu0 %v881, 64
    %v884 = vpop.permute.xlu0 %883
    %v886 = vmul.f32 %v851, %v884
    %888 = vrot.lane.b32.xlu0 %v880, 32
    %v889 = vpop.permute.xlu0 %888
    %891 = vst.msk [vmem:[%s7 + $0x8] sm:$0x3] %vm362, %v889
    %893 = vrot.lane.b32.xlu0 %v886, 32
    %v894 = vpop.permute.xlu0 %893
    %896 = vst.msk [vmem:[%s110 + $0x6] sm:$0x3] %vm362, %v894
    %v897 = vld [vmem:[#allocation2 + $0xa] sm:$0x3]
    %v898 = vsel %vm143, %v889, 0
    %900 = vmatpush.msra.mxu0 0.0
    %901 = vmatpush.msra.mxu0 0.0
    %902 = vmatpush.msra.mxu0 0.0
    %903 = vmatpush.msra.mxu0 0.0
    %904 = vmatpush.msra.mxu0 0.0
    %905 = vmatpush.msra.mxu0 0.0
    %906 = vmatpush.msra.mxu0 0.0
    %907 = vmatpush.msra.mxu0 0.0
    %908 = vmatpush.msra.mxu0 0.0
    %909 = vmatpush.msra.mxu0 0.0
    %910 = vmatpush.msra.mxu0 0.0
    %911 = vmatpush.msra.mxu0 0.0
    %912 = vmatpush.msra.mxu0 %v214
    %913 = vmatpush.msra.mxu0 %v213
    %914 = vmatpush.msra.mxu0 %v212
    %915 = vmatpush.msra.mxu0 %v211
    %916 = vmatmul.f32.gmra.mxu0 %v898
    %v917 = vpop.f32.mrf.mxu0
    %v918 = vadd.f32 0.0, %v917
    %919 = vdwg.mxu0
    %v920 = vadd.f32 %v897, %v918
    %v921 = vld [vmem:[#allocation3 + $0x4] sm:$0x3]
    %v922 = vsel %vm143, %v894, 0
    %924 = vmatpush.msra.mxu0 0.0
    %925 = vmatpush.msra.mxu0 0.0
    %926 = vmatpush.msra.mxu0 0.0
    %927 = vmatpush.msra.mxu0 0.0
    %928 = vmatpush.msra.mxu0 0.0
    %929 = vmatpush.msra.mxu0 0.0
    %930 = vmatpush.msra.mxu0 0.0
    %931 = vmatpush.msra.mxu0 0.0
    %932 = vmatpush.msra.mxu0 0.0
    %933 = vmatpush.msra.mxu0 0.0
    %934 = vmatpush.msra.mxu0 0.0
    %935 = vmatpush.msra.mxu0 0.0
    %936 = vmatpush.msra.mxu0 %v219
    %937 = vmatpush.msra.mxu0 %v218
    %938 = vmatpush.msra.mxu0 %v217
    %939 = vmatpush.msra.mxu0 %v216
    %940 = vmatmul.f32.gmra.mxu0 %v922
    %v941 = vpop.f32.mrf.mxu0
    %v942 = vadd.f32 0.0, %v941
    %943 = vdwg.mxu0
    %v944 = vadd.f32 %v921, %v942
    %v945 = vxor.u32 %v920, 2147483648
    %v946 = vmul.f32 %v945, 1.442695
    %v947 = vpow.pop %v946
    %v948 = vadd.f32 %v947, 1.0
    %v949 = vrcp.pop %v948
    %v950 = vmul.f32 %v948, %v949
    %v951 = vsub.f32 1.0, %v950
    %v952 = vmul.f32 %v949, %v951
    %v953 = vadd.f32 %v949, %v952
    %vm954 = vweird.f32 %v948
    %vm955 = vweird.f32 %v949
    %vm956 = vmor %vm954, %vm955
    %v957 = vsel %vm956, %v949, %v953
    %v958 = vand.u32 2147483647, %v948
    %vm959 = vcmp.eq.f32.partialorder %v958, 8.507059e+37
    %v960 = vand.u32 %v948, 2147483648
    %v961 = vor.u32 1.1754944e-38, %v960
    %v962 = vsel %vm959, %v961, %v957
    %v963 = vmul.f32 1.0, %v962
    %v964 = vtanh.pop %v920
    %v965 = vxor.u32 %v944, 2147483648
    %v966 = vmul.f32 %v965, 1.442695
    %v967 = vpow.pop %v966
    %v968 = vadd.f32 %v967, 1.0
    %v969 = vrcp.pop %v968
    %v970 = vmul.f32 %v968, %v969
    %v971 = vsub.f32 1.0, %v970
    %v972 = vmul.f32 %v969, %v971
    %v973 = vadd.f32 %v969, %v972
    %vm974 = vweird.f32 %v968
    %vm975 = vweird.f32 %v969
    %vm976 = vmor %vm974, %vm975
    %v977 = vsel %vm976, %v969, %v973
    %v978 = vand.u32 2147483647, %v968
    %vm979 = vcmp.eq.f32.partialorder %v978, 8.507059e+37
    %v980 = vand.u32 %v968, 2147483648
    %v981 = vor.u32 1.1754944e-38, %v980
    %v982 = vsel %vm979, %v981, %v977
    %v983 = vmul.f32 1.0, %v982
    %v984 = vtanh.pop %v944
    %v985 = vmul.f32 %v963, %v863
    %987 = vrot.lane.b32.xlu0 %v964, 64
    %v988 = vpop.permute.xlu0 %987
    %v990 = vmul.f32 %v963, %v988
    %992 = vrot.lane.b32.xlu0 %v990, 32
    %v993 = vpop.permute.xlu0 %992
    %v995 = vadd.f32 %v985, %v993
    %v996 = vmul.f32 %v983, %v874
    %998 = vrot.lane.b32.xlu0 %v984, 64
    %v999 = vpop.permute.xlu0 %998
    %v1001 = vmul.f32 %v983, %v999
    %1003 = vrot.lane.b32.xlu0 %v1001, 32
    %v1004 = vpop.permute.xlu0 %1003
    %v1006 = vadd.f32 %v996, %v1004
    %v1007 = vtanh.pop %v995
    %1009 = vrot.lane.b32.xlu0 %v1007, 64
    %v1010 = vpop.permute.xlu0 %1009
    %v1012 = vmul.f32 %v963, %v1010
    %v1013 = vtanh.pop %v1006
    %1015 = vrot.lane.b32.xlu0 %v1013, 64
    %v1016 = vpop.permute.xlu0 %1015
    %v1018 = vmul.f32 %v983, %v1016
    %1020 = vrot.lane.b32.xlu0 %v1012, 32
    %v1021 = vpop.permute.xlu0 %1020
    %1023 = vst.msk [vmem:[%s7 + $0xa] sm:$0x3] %vm362, %v1021
    %1025 = vrot.lane.b32.xlu0 %v1018, 32
    %v1026 = vpop.permute.xlu0 %1025
    %1028 = vst.msk [vmem:[%s110 + $0x4] sm:$0x3] %vm362, %v1026
    %v1029 = vld [vmem:[#allocation2 + $0xc] sm:$0x3]
    %v1030 = vsel %vm143, %v1021, 0
    %1032 = vmatpush.msra.mxu0 0.0
    %1033 = vmatpush.msra.mxu0 0.0
    %1034 = vmatpush.msra.mxu0 0.0
    %1035 = vmatpush.msra.mxu0 0.0
    %1036 = vmatpush.msra.mxu0 0.0
    %1037 = vmatpush.msra.mxu0 0.0
    %1038 = vmatpush.msra.mxu0 0.0
    %1039 = vmatpush.msra.mxu0 0.0
    %1040 = vmatpush.msra.mxu0 0.0
    %1041 = vmatpush.msra.mxu0 0.0
    %1042 = vmatpush.msra.mxu0 0.0
    %1043 = vmatpush.msra.mxu0 0.0
    %1044 = vmatpush.msra.mxu0 %v214
    %1045 = vmatpush.msra.mxu0 %v213
    %1046 = vmatpush.msra.mxu0 %v212
    %1047 = vmatpush.msra.mxu0 %v211
    %1048 = vmatmul.f32.gmra.mxu0 %v1030
    %v1049 = vpop.f32.mrf.mxu0
    %v1050 = vadd.f32 0.0, %v1049
    %1051 = vdwg.mxu0
    %v1052 = vadd.f32 %v1029, %v1050
    %v1053 = vld [vmem:[#allocation3 + $0x2] sm:$0x3]
    %v1054 = vsel %vm143, %v1026, 0
    %1056 = vmatpush.msra.mxu0 0.0
    %1057 = vmatpush.msra.mxu0 0.0
    %1058 = vmatpush.msra.mxu0 0.0
    %1059 = vmatpush.msra.mxu0 0.0
    %1060 = vmatpush.msra.mxu0 0.0
    %1061 = vmatpush.msra.mxu0 0.0
    %1062 = vmatpush.msra.mxu0 0.0
    %1063 = vmatpush.msra.mxu0 0.0
    %1064 = vmatpush.msra.mxu0 0.0
    %1065 = vmatpush.msra.mxu0 0.0
    %1066 = vmatpush.msra.mxu0 0.0
    %1067 = vmatpush.msra.mxu0 0.0
    %1068 = vmatpush.msra.mxu0 %v219
    %1069 = vmatpush.msra.mxu0 %v218
    %1070 = vmatpush.msra.mxu0 %v217
    %1071 = vmatpush.msra.mxu0 %v216
    %1072 = vmatmul.f32.gmra.mxu0 %v1054
    %v1073 = vpop.f32.mrf.mxu0
    %v1074 = vadd.f32 0.0, %v1073
    %1075 = vdwg.mxu0
    %v1076 = vadd.f32 %v1053, %v1074
    %v1077 = vxor.u32 %v1052, 2147483648
    %v1078 = vmul.f32 %v1077, 1.442695
    %v1079 = vpow.pop %v1078
    %v1080 = vadd.f32 %v1079, 1.0
    %v1081 = vrcp.pop %v1080
    %v1082 = vmul.f32 %v1080, %v1081
    %v1083 = vsub.f32 1.0, %v1082
    %v1084 = vmul.f32 %v1081, %v1083
    %v1085 = vadd.f32 %v1081, %v1084
    %vm1086 = vweird.f32 %v1080
    %vm1087 = vweird.f32 %v1081
    %vm1088 = vmor %vm1086, %vm1087
    %v1089 = vsel %vm1088, %v1081, %v1085
    %v1090 = vand.u32 2147483647, %v1080
    %vm1091 = vcmp.eq.f32.partialorder %v1090, 8.507059e+37
    %v1092 = vand.u32 %v1080, 2147483648
    %v1093 = vor.u32 1.1754944e-38, %v1092
    %v1094 = vsel %vm1091, %v1093, %v1089
    %v1095 = vmul.f32 1.0, %v1094
    %v1096 = vtanh.pop %v1052
    %v1097 = vxor.u32 %v1076, 2147483648
    %v1098 = vmul.f32 %v1097, 1.442695
    %v1099 = vpow.pop %v1098
    %v1100 = vadd.f32 %v1099, 1.0
    %v1101 = vrcp.pop %v1100
    %v1102 = vmul.f32 %v1100, %v1101
    %v1103 = vsub.f32 1.0, %v1102
    %v1104 = vmul.f32 %v1101, %v1103
    %v1105 = vadd.f32 %v1101, %v1104
    %vm1106 = vweird.f32 %v1100
    %vm1107 = vweird.f32 %v1101
    %vm1108 = vmor %vm1106, %vm1107
    %v1109 = vsel %vm1108, %v1101, %v1105
    %v1110 = vand.u32 2147483647, %v1100
    %vm1111 = vcmp.eq.f32.partialorder %v1110, 8.507059e+37
    %v1112 = vand.u32 %v1100, 2147483648
    %v1113 = vor.u32 1.1754944e-38, %v1112
    %v1114 = vsel %vm1111, %v1113, %v1109
    %v1115 = vmul.f32 1.0, %v1114
    %v1116 = vtanh.pop %v1076
    %v1117 = vmul.f32 %v1095, %v995
    %1119 = vrot.lane.b32.xlu0 %v1096, 64
    %v1120 = vpop.permute.xlu0 %1119
    %v1122 = vmul.f32 %v1095, %v1120
    %1124 = vrot.lane.b32.xlu0 %v1122, 32
    %v1125 = vpop.permute.xlu0 %1124
    %v1127 = vadd.f32 %v1117, %v1125
    %v1128 = vmul.f32 %v1115, %v1006
    %1130 = vrot.lane.b32.xlu0 %v1116, 64
    %v1131 = vpop.permute.xlu0 %1130
    %v1133 = vmul.f32 %v1115, %v1131
    %1135 = vrot.lane.b32.xlu0 %v1133, 32
    %v1136 = vpop.permute.xlu0 %1135
    %v1138 = vadd.f32 %v1128, %v1136
    %v1139 = vtanh.pop %v1127
    %1141 = vrot.lane.b32.xlu0 %v1139, 64
    %v1142 = vpop.permute.xlu0 %1141
    %v1144 = vmul.f32 %v1095, %v1142
    %v1145 = vtanh.pop %v1138
    %1147 = vrot.lane.b32.xlu0 %v1145, 64
    %v1148 = vpop.permute.xlu0 %1147
    %v1150 = vmul.f32 %v1115, %v1148
    %1152 = vrot.lane.b32.xlu0 %v1144, 32
    %v1153 = vpop.permute.xlu0 %1152
    %1155 = vst.msk [vmem:[%s7 + $0xc] sm:$0x3] %vm362, %v1153
    %1157 = vrot.lane.b32.xlu0 %v1150, 32
    %v1158 = vpop.permute.xlu0 %1157
    %1160 = vst.msk [vmem:[%s110 + $0x2] sm:$0x3] %vm362, %v1158
    %v1161 = vld [vmem:[#allocation2 + $0xe] sm:$0x3]
    %v1162 = vsel %vm143, %v1153, 0
    %1164 = vmatpush.msra.mxu0 0.0
    %1165 = vmatpush.msra.mxu0 0.0
    %1166 = vmatpush.msra.mxu0 0.0
    %1167 = vmatpush.msra.mxu0 0.0
    %1168 = vmatpush.msra.mxu0 0.0
    %1169 = vmatpush.msra.mxu0 0.0
    %1170 = vmatpush.msra.mxu0 0.0
    %1171 = vmatpush.msra.mxu0 0.0
    %1172 = vmatpush.msra.mxu0 0.0
    %1173 = vmatpush.msra.mxu0 0.0
    %1174 = vmatpush.msra.mxu0 0.0
    %1175 = vmatpush.msra.mxu0 0.0
    %1176 = vmatpush.msra.mxu0 %v214
    %1177 = vmatpush.msra.mxu0 %v213
    %1178 = vmatpush.msra.mxu0 %v212
    %1179 = vmatpush.msra.mxu0 %v211
    %1180 = vmatmul.f32.gmra.mxu0 %v1162
    %v1181 = vpop.f32.mrf.mxu0
    %v1182 = vadd.f32 0.0, %v1181
    %1183 = vdwg.mxu0
    %v1184 = vadd.f32 %v1161, %v1182
    %v1185 = vld [vmem:[#allocation3] sm:$0x3]
    %v1186 = vsel %vm143, %v1158, 0
    %1188 = vmatpush.msra.mxu0 0.0
    %1189 = vmatpush.msra.mxu0 0.0
    %1190 = vmatpush.msra.mxu0 0.0
    %1191 = vmatpush.msra.mxu0 0.0
    %1192 = vmatpush.msra.mxu0 0.0
    %1193 = vmatpush.msra.mxu0 0.0
    %1194 = vmatpush.msra.mxu0 0.0
    %1195 = vmatpush.msra.mxu0 0.0
    %1196 = vmatpush.msra.mxu0 0.0
    %1197 = vmatpush.msra.mxu0 0.0
    %1198 = vmatpush.msra.mxu0 0.0
    %1199 = vmatpush.msra.mxu0 0.0
    %1200 = vmatpush.msra.mxu0 %v219
    %1201 = vmatpush.msra.mxu0 %v218
    %1202 = vmatpush.msra.mxu0 %v217
    %1203 = vmatpush.msra.mxu0 %v216
    %1204 = vmatmul.f32.gmra.mxu0 %v1186
    %v1205 = vpop.f32.mrf.mxu0
    %v1206 = vadd.f32 0.0, %v1205
    %1207 = vdwg.mxu0
    %v1208 = vadd.f32 %v1185, %v1206
    %v1209 = vxor.u32 %v1184, 2147483648
    %v1210 = vmul.f32 %v1209, 1.442695
    %v1211 = vpow.pop %v1210
    %v1212 = vadd.f32 %v1211, 1.0
    %v1213 = vrcp.pop %v1212
    %v1214 = vmul.f32 %v1212, %v1213
    %v1215 = vsub.f32 1.0, %v1214
    %v1216 = vmul.f32 %v1213, %v1215
    %v1217 = vadd.f32 %v1213, %v1216
    %vm1218 = vweird.f32 %v1212
    %vm1219 = vweird.f32 %v1213
    %vm1220 = vmor %vm1218, %vm1219
    %v1221 = vsel %vm1220, %v1213, %v1217
    %v1222 = vand.u32 2147483647, %v1212
    %vm1223 = vcmp.eq.f32.partialorder %v1222, 8.507059e+37
    %v1224 = vand.u32 %v1212, 2147483648
    %v1225 = vor.u32 1.1754944e-38, %v1224
    %v1226 = vsel %vm1223, %v1225, %v1221
    %v1227 = vmul.f32 1.0, %v1226
    %v1228 = vtanh.pop %v1184
    %v1229 = vxor.u32 %v1208, 2147483648
    %v1230 = vmul.f32 %v1229, 1.442695
    %v1231 = vpow.pop %v1230
    %v1232 = vadd.f32 %v1231, 1.0
    %v1233 = vrcp.pop %v1232
    %v1234 = vmul.f32 %v1232, %v1233
    %v1235 = vsub.f32 1.0, %v1234
    %v1236 = vmul.f32 %v1233, %v1235
    %v1237 = vadd.f32 %v1233, %v1236
    %vm1238 = vweird.f32 %v1232
    %vm1239 = vweird.f32 %v1233
    %vm1240 = vmor %vm1238, %vm1239
    %v1241 = vsel %vm1240, %v1233, %v1237
    %v1242 = vand.u32 2147483647, %v1232
    %vm1243 = vcmp.eq.f32.partialorder %v1242, 8.507059e+37
    %v1244 = vand.u32 %v1232, 2147483648
    %v1245 = vor.u32 1.1754944e-38, %v1244
    %v1246 = vsel %vm1243, %v1245, %v1241
    %v1247 = vmul.f32 1.0, %v1246
    %v1248 = vtanh.pop %v1208
    %v1249 = vmul.f32 %v1227, %v1127
    %1251 = vrot.lane.b32.xlu0 %v1228, 64
    %v1252 = vpop.permute.xlu0 %1251
    %v1254 = vmul.f32 %v1227, %v1252
    %1256 = vrot.lane.b32.xlu0 %v1254, 32
    %v1257 = vpop.permute.xlu0 %1256
    %v1259 = vadd.f32 %v1249, %v1257
    %v1260 = vmul.f32 %v1247, %v1138
    %1262 = vrot.lane.b32.xlu0 %v1248, 64
    %v1263 = vpop.permute.xlu0 %1262
    %v1265 = vmul.f32 %v1247, %v1263
    %1267 = vrot.lane.b32.xlu0 %v1265, 32
    %v1268 = vpop.permute.xlu0 %1267
    %v1270 = vadd.f32 %v1260, %v1268
    %v1271 = vtanh.pop %v1259
    %1273 = vrot.lane.b32.xlu0 %v1271, 64
    %v1274 = vpop.permute.xlu0 %1273
    %v1276 = vmul.f32 %v1227, %v1274
    %v1277 = vtanh.pop %v1270
    %1279 = vrot.lane.b32.xlu0 %v1277, 64
    %v1280 = vpop.permute.xlu0 %1279
    %v1282 = vmul.f32 %v1247, %v1280
    %1284 = vrot.lane.b32.xlu0 %v1276, 32
    %v1285 = vpop.permute.xlu0 %1284
    %1287 = vst.msk [vmem:[%s7 + $0xe] sm:$0x3] %vm362, %v1285
    %1289 = vrot.lane.b32.xlu0 %v1282, 32
    %v1290 = vpop.permute.xlu0 %1289
    %1292 = vst.msk [vmem:[%s110] sm:$0x3] %vm362, %v1290
    %1293 = vst.msk [vmem:[%s9] sm:$0x3] %vm362, %v1285
    %1294 = vst.msk [vmem:[%s221] sm:$0x3] %vm362, %v1290
    %1296 = vrot.lane.b32.xlu0 %v1259, 96
    %v1297 = vpop.permute.xlu0 %1296
    %1299 = vst.msk [vmem:[%s10] sm:$0x3] %vm362, %v1297
    %1301 = vrot.lane.b32.xlu0 %v1270, 96
    %v1302 = vpop.permute.xlu0 %1301
    %1304 = vst.msk [vmem:[%s224] sm:$0x3] %vm362, %v1302
    %s1305 = ssub.s32 0, 0
    %s1306 = smul.u32 2, %s1305
    %p1307 = scmp.lt.s32.totalorder %s1306, 1
    %s1308 = scalar_select %p1307, %s1306, 1
    %s1309 = smul.addr %s1308, 8
    %s1310 = scalar_lea.vmem %s8, %s1309
    // Predicated region
    $region50: #{_lambda_.3} parent=1 // pred_check
      _
    $region51: #{_lambda_.3} parent=1 // pred_check_branch
      %1312 = sbr.rel (0) target = $region53
    $region52: #{_lambda_.3} parent=1 // pred_region
      _
    $region53: #{_lambda_.3} parent=1 // pred_fallthru
      _
    // Predicated region
    $region54: #{_lambda_.3} parent=1 // pred_check
      _
    $region55: #{_lambda_.3} parent=1 // pred_check_branch
      %1314 = sbr.rel (0) target = $region57
    $region56: #{_lambda_.3} parent=1 // pred_region
      %s1315 = ssub.s32 0, 0
      %s1316 = smul.u32 2, %s1315
    $region57: #{_lambda_.3} parent=1 // pred_fallthru
      _
    // Predicated region
    $region58: #{_lambda_.3} parent=1 // pred_check
      _
    $region59: #{_lambda_.3} parent=1 // pred_check_branch
      %1318 = sbr.rel (0) target = $region61
    $region60: #{_lambda_.3} parent=1 // pred_region
      _
    $region61: #{_lambda_.3} parent=1 // pred_fallthru
      _
    // Predicated region
    $region62: #{_lambda_.3} parent=1 // pred_check
      _
    $region63: #{_lambda_.3} parent=1 // pred_check_branch
      %1320 = sbr.rel (0) target = $region65
    $region64: #{_lambda_.3} parent=1 // pred_region
      _
    $region65: #{_lambda_.3} parent=1 // pred_fallthru
      _
    // Predicated region
    $region66: #{_lambda_.3} parent=1 // pred_check
      _
    $region67: #{_lambda_.3} parent=1 // pred_check_branch
      %1322 = sbr.rel (0) target = $region69
    $region68: #{_lambda_.3} parent=1 // pred_region
      _
    $region69: #{_lambda_.3} parent=1 // pred_fallthru
      _
    // Predicated region
    $region70: #{_lambda_.3} parent=1 // pred_check
      _
    $region71: #{_lambda_.3} parent=1 // pred_check_branch
      %1324 = sbr.rel (0) target = $region73
    $region72: #{_lambda_.3} parent=1 // pred_region
      %s1325 = ssub.s32 0, 0
      %s1326 = smul.u32 2, %s1325
      %p1327 = scmp.lt.s32.totalorder %s1326, 1
      %s1328 = scalar_select %p1327, %s1326, 1
      %s1329 = smul.addr %s1328, 8
      %s1330 = scalar_lea.vmem %s8, %s1329
    $region73: #{_lambda_.3} parent=1 // pred_fallthru
      _
    // Predicated region
    $region74: #{_lambda_.3} parent=1 // pred_check
      _
    $region75: #{_lambda_.3} parent=1 // pred_check_branch
      %1332 = sbr.rel (0) target = $region77
    $region76: #{_lambda_.3} parent=1 // pred_region
      _
    $region77: #{_lambda_.3} parent=1 // pred_fallthru
      _
    // Predicated region
    $region78: #{_lambda_.3} parent=1 // pred_check
      _
    $region79: #{_lambda_.3} parent=1 // pred_check_branch
      %1334 = sbr.rel (0) target = $region81
    $region80: #{_lambda_.3} parent=1 // pred_region
      _
    $region81: #{_lambda_.3} parent=1 // pred_fallthru
      _
    %1335 = vsyncpa [#allocation5], 1
    %1336 = vsyncpa [#allocation7], 1
    %1337 = vsyncpa [#allocation10], 1

// kernel: _lambda_.4
$region0: #{_lambda_.4}
  #allocation0 [shape = 'u32[]', space=smem, size = 0x4, offset = 0x4, fixed_abs, tag = 'smem constant byte address 0x4 - core index']
  #allocation1 [shape = 'u32[72,128]{1,0:T(1,128)}', space=vmem, size = 0x9000, scoped, tag = 'internal scratch']
  #allocation2 [shape = 'f32[16,128]{1,0:T(8,128)}', space=vmem, size = 0x2000, scoped, tag = 'scratch operand']
  #allocation3 [shape = 'f32[16,128]{1,0:T(8,128)}', space=vmem, size = 0x2000, scoped, tag = 'scratch operand']
  %s0 = inlined_call_operand.vmem [shape: f32[16,32], index: 0, kind: input, shape index: {}, may-alias: {0,2}]
  %s1 = inlined_call_operand.vmem [shape: f32[16,32], index: 1, kind: input, shape index: {}, may-alias: {1,3}]
  %s2 = inlined_call_operand.vmem [shape: f32[16,32], index: 2, kind: input, shape index: {}, may-alias: {0,2}]
  %s3 = inlined_call_operand.vmem [shape: f32[16,32], index: 3, kind: input, shape index: {}, may-alias: {1,3}]
  %s4 = inlined_call_operand.hbm [shape: f32[2,32,128], index: 4, kind: input, shape index: {}]
  %s5 = inlined_call_operand.hbm [shape: f32[2,32,128], index: 5, kind: input, shape index: {}]
  %s6 = inlined_call_operand.hbm [shape: f32[2,32,128], index: 6, kind: input, shape index: {}]
  %s7 = inlined_call_operand.vmem [shape: f32[2,1,128], index: 7, kind: input, shape index: {}]
  %s8 = inlined_call_operand.vmem [shape: f32[2,2,32], index: 8, kind: input, shape index: {}, may-alias: {8,9}]
  %s9 = inlined_call_operand.vmem [shape: f32[2,2,32], index: 9, kind: input, shape index: {}, may-alias: {8,9}]
  %s10 = inlined_call_operand.vmem [shape: f32[16,32], index: 10, kind: output, shape index: {0}]
  %s11 = inlined_call_operand.vmem [shape: f32[16,32], index: 11, kind: output, shape index: {1}]
  %s12 = inlined_call_operand.vmem [shape: f32[2,2,32], index: 12, kind: output, shape index: {2}]
  %s13 = inlined_call_operand.vmem [shape: f32[2,2,32], index: 13, kind: output, shape index: {3}]
  %14 = xla_tuple %s10, %s11, %s12, %s13
  %s15 = sld [smem:[#allocation0]]
  $region90: #{_lambda_.4} parent=0
    _
  %s17 = ssub.s32 1, %s15
  %s18 = scalar_select 0, %s17, %s15
  $region1: #{_lambda_.4} parent=0
    #allocation4 [shape = 'u8[32768]{0}', space=vmem, size = 0x8000, scoped, tag = 'input window, operand 4, single buffered']
    #allocation5 [shape = 's32[1]{0}', space=sflag, size = 0x4, scoped, tag = 'scoped memory for _lambda_.4']
    #allocation6 [shape = 'u8[32768]{0}', space=vmem, size = 0x8000, scoped, tag = 'input window, operand 5, single buffered']
    #allocation7 [shape = 's32[1]{0}', space=sflag, size = 0x4, scoped, tag = 'scoped memory for _lambda_.4']
    #allocation8 [shape = 'u8[32768]{0}', space=vmem, size = 0x8000, scoped, tag = 'input window, operand 6, single buffered']
    %19 = vsyncpa [#allocation5], 0
    %20 = vsyncpa [#allocation7], 0
    // Predicated region
    $region2: #{_lambda_.4} parent=1 // pred_check
      _
    $region3: #{_lambda_.4} parent=1 // pred_check_branch
      %22 = sbr.rel (0) target = $region5
    $region4: #{_lambda_.4} parent=1 // pred_region
      _
    $region5: #{_lambda_.4} parent=1 // pred_fallthru
      _
    // Predicated region
    $region6: #{_lambda_.4} parent=1 // pred_check
      _
    $region7: #{_lambda_.4} parent=1 // pred_check_branch
      %24 = sbr.rel (0) target = $region9
    $region8: #{_lambda_.4} parent=1 // pred_region
      _
    $region9: #{_lambda_.4} parent=1 // pred_fallthru
      _
    // Predicated region
    $region10: #{_lambda_.4} parent=1 // pred_check
      _
    $region11: #{_lambda_.4} parent=1 // pred_check_branch
      %26 = sbr.rel (0) target = $region13
    $region12: #{_lambda_.4} parent=1 // pred_region
      %s27 = ssub.s32 0, 0
      %s28 = smul.u32 2, %s27
      %p29 = scmp.lt.s32.totalorder %s28, 1
      %s30 = scalar_select %p29, %s28, 1
      %s31 = smul.addr %s30, 8
      %s32 = scalar_lea.vmem %s2, %s31
      %s33 = ssub.s32 0, 0
      %s34 = smul.u32 2, %s33
    $region13: #{_lambda_.4} parent=1 // pred_fallthru
      _
    // Predicated region
    $region14: #{_lambda_.4} parent=1 // pred_check
      _
    $region15: #{_lambda_.4} parent=1 // pred_check_branch
      %36 = sbr.rel (0) target = $region17
    $region16: #{_lambda_.4} parent=1 // pred_region
      %s37 = ssub.s32 0, 0
      %s38 = smul.u32 2, %s37
      %p39 = scmp.lt.s32.totalorder %s38, 1
      %s40 = scalar_select %p39, %s38, 1
      %s41 = smul.addr %s40, 8
      %s42 = scalar_lea.vmem %s3, %s41
      %s43 = ssub.s32 0, 0
      %s44 = smul.u32 2, %s43
    $region17: #{_lambda_.4} parent=1 // pred_fallthru
      _
    // Predicated region
    $region18: #{_lambda_.4} parent=1 // pred_check
      _
    $region19: #{_lambda_.4} parent=1 // pred_check_branch
      %46 = sbr.rel (0) target = $region21
    $region20: #{_lambda_.4} parent=1 // pred_region
      %48 = vsyncadd [#allocation5], 0
      %s49 = sshll.u32 %s4, 4
      %s50 = int_to_ptr.hbm [resolvable:$true] %s49
      %s51 = sshll.u32 [#allocation4], 4
      %s52 = int_to_ptr.vmem [resolvable:$true] %s51
      %57 = dma.hbm_to_vmem [thread:$0]  %s50, 1024, %s52, [#allocation5], 128, 128, 8
    $region21: #{_lambda_.4} parent=1 // pred_fallthru
      _
    // Predicated region
    $region22: #{_lambda_.4} parent=1 // pred_check
      _
    $region23: #{_lambda_.4} parent=1 // pred_check_branch
      %59 = sbr.rel (0) target = $region25
    $region24: #{_lambda_.4} parent=1 // pred_region
      %61 = vsyncadd [#allocation7], 0
      %s62 = sshll.u32 %s5, 4
      %s63 = int_to_ptr.hbm [resolvable:$true] %s62
      %s64 = sshll.u32 [#allocation6], 4
      %s65 = int_to_ptr.vmem [resolvable:$true] %s64
      %70 = dma.hbm_to_vmem [thread:$0]  %s63, 1024, %s65, [#allocation7], 128, 128, 8
    $region25: #{_lambda_.4} parent=1 // pred_fallthru
      _
    // Predicated region
    $region26: #{_lambda_.4} parent=1 // pred_check
      _
    $region27: #{_lambda_.4} parent=1 // pred_check_branch
      %72 = sbr.rel (0) target = $region29
    $region28: #{_lambda_.4} parent=1 // pred_region
      %74 = vsyncadd [#allocation7], 0
      %s75 = sshll.u32 %s6, 4
      %s76 = int_to_ptr.hbm [resolvable:$true] %s75
      %s77 = sshll.u32 [#allocation8], 4
      %s78 = int_to_ptr.vmem [resolvable:$true] %s77
      %83 = dma.hbm_to_vmem [thread:$0]  %s76, 1024, %s78, [#allocation7], 128, 128, 8
    $region29: #{_lambda_.4} parent=1 // pred_fallthru
      _
    // Predicated region
    $region30: #{_lambda_.4} parent=1 // pred_check
      _
    $region31: #{_lambda_.4} parent=1 // pred_check_branch
      %85 = sbr.rel (0) target = $region33
    $region32: #{_lambda_.4} parent=1 // pred_region
      _
    $region33: #{_lambda_.4} parent=1 // pred_fallthru
      _
    // Predicated region
    $region34: #{_lambda_.4} parent=1 // pred_check
      _
    $region35: #{_lambda_.4} parent=1 // pred_check_branch
      %87 = sbr.rel (0) target = $region37
    $region36: #{_lambda_.4} parent=1 // pred_region
      _
    $region37: #{_lambda_.4} parent=1 // pred_fallthru
      _
    // Predicated region
    $region38: #{_lambda_.4} parent=1 // pred_check
      _
    $region39: #{_lambda_.4} parent=1 // pred_check_branch
      %89 = sbr.rel (0) target = $region41
    $region40: #{_lambda_.4} parent=1 // pred_region
      _
    $region41: #{_lambda_.4} parent=1 // pred_fallthru
      _
    // Predicated region
    $region42: #{_lambda_.4} parent=1 // pred_check
      _
    $region43: #{_lambda_.4} parent=1 // pred_check_branch
      %91 = sbr.rel (0) target = $region45
    $region44: #{_lambda_.4} parent=1 // pred_region
      %93 = dma.done [#allocation5], 1024
    $region45: #{_lambda_.4} parent=1 // pred_fallthru
      _
    // Predicated region
    $region46: #{_lambda_.4} parent=1 // pred_check
      _
    $region47: #{_lambda_.4} parent=1 // pred_check_branch
      %95 = sbr.rel (0) target = $region49
    $region48: #{_lambda_.4} parent=1 // pred_region
      %97 = dma.done [#allocation7], 1024
    $region49: #{_lambda_.4} parent=1 // pred_fallthru
      _
    // Predicated region
    $region50: #{_lambda_.4} parent=1 // pred_check
      _
    $region51: #{_lambda_.4} parent=1 // pred_check_branch
      %99 = sbr.rel (0) target = $region53
    $region52: #{_lambda_.4} parent=1 // pred_region
      %101 = dma.done [#allocation7], 1024
    $region53: #{_lambda_.4} parent=1 // pred_fallthru
      _
    %s102 = ssub.s32 0, 0
    %s103 = smul.u32 2, %s102
    %p104 = scmp.lt.s32.totalorder %s103, 1
    %s105 = scalar_select %p104, %s103, 1
    %s106 = smul.addr %s105, 8
    %s107 = scalar_lea.vmem %s2, %s106
    %s108 = ssub.s32 0, 0
    %s109 = smul.u32 2, %s108
    %p110 = scmp.lt.s32.totalorder %s109, 1
    %s111 = scalar_select %p110, %s109, 1
    %s112 = smul.addr %s111, 8
    %s113 = scalar_lea.vmem %s3, %s112
    %s114 = ssub.s32 0, 0
    %s115 = smul.u32 2, %s114
    %p116 = scmp.lt.s32.totalorder %s115, 1
    %s117 = scalar_select %p116, %s115, 1
    %s118 = smul.addr %s117, 8
    %s119 = scalar_lea.vmem %s11, %s118
    %s120 = ssub.s32 0, 0
    %s121 = smul.u32 2, %s120
    %p122 = scmp.lt.s32.totalorder %s121, 1
    %s123 = scalar_select %p122, %s121, 1
    %s124 = smul.addr %s123, 8
    %s125 = scalar_lea.vmem %s2, %s124
    %s126 = ssub.s32 0, 0
    %s127 = smul.u32 2, %s126
    %s128 = ssub.s32 0, 0
    %s129 = smul.u32 2, %s128
    %p130 = scmp.lt.s32.totalorder %s129, 1
    %s131 = scalar_select %p130, %s129, 1
    %s132 = smul.addr %s131, 8
    %s133 = scalar_lea.vmem %s3, %s132
    %s134 = ssub.s32 0, 0
    %s135 = smul.u32 2, %s134
    %s136 = ssub.s32 0, 0
    %s137 = smul.u32 2, %s136
    %p138 = scmp.lt.s32.totalorder %s137, 1
    %s139 = scalar_select %p138, %s137, 1
    %s140 = smul.addr %s139, 8
    %s141 = scalar_lea.vmem %s11, %s140
    %s142 = ssub.s32 0, 0
    %s143 = smul.u32 2, %s142
    %p144 = scmp.eq.s32.totalorder 0, 0
    // Predicated region
    $region54: #{_lambda_.4} parent=1 // pred_check
      %p145 = pneg %p144
    $region55: #{_lambda_.4} parent=1 // pred_check_branch
      %147 = sbr.rel (%p145) target = $region57
    $region56: #{_lambda_.4} parent=1 // pred_region
      %v148 = vld [vmem:[%s8] sm:$0x3]
      %v149 = vld [vmem:[%s8 + $0x2] sm:$0x3]
      %vm150 = vcmask 254976
      %151 = vst.msk [vmem:[%s12] sm:$0x3] %vm150, %v148
      %152 = vst.msk [vmem:[%s12 + $0x2] sm:$0x3] %vm150, %v149
      %v153 = vld [vmem:[%s9] sm:$0x3]
      %v154 = vld [vmem:[%s9 + $0x2] sm:$0x3]
      %155 = vst.msk [vmem:[%s13] sm:$0x3] %vm150, %v153
      %156 = vst.msk [vmem:[%s13 + $0x2] sm:$0x3] %vm150, %v154
    $region57: #{_lambda_.4} parent=1 // pred_fallthru
      _
    %v157 = vld [vmem:[%s0] sm:$0xff]
    %v158 = vld [vmem:[%s0 + $0x8] sm:$0xff]
    %v159 = vld [vmem:[#allocation4] sm:$0xff]
    %v160 = vld [vmem:[#allocation4 + $0x8] sm:$0xff]
    %v161 = vld [vmem:[#allocation4 + $0x10] sm:$0xff]
    %v162 = vld [vmem:[#allocation4 + $0x18] sm:$0xff]
    %v163 = vld [vmem:[%s125] sm:$0xff]
    %v164 = vld [vmem:[%s125 + $0x8] sm:$0xff]
    %s165 = scalar_lea.vmem [#allocation4], 32
    %v166 = vld [vmem:[%s165] sm:$0xff]
    %v167 = vld [vmem:[%s165 + $0x8] sm:$0xff]
    %v168 = vld [vmem:[%s165 + $0x10] sm:$0xff]
    %v169 = vld [vmem:[%s165 + $0x18] sm:$0xff]
    %v170 = vld [vmem:[%s1] sm:$0xff]
    %v171 = vld [vmem:[%s1 + $0x8] sm:$0xff]
    %v172 = vld [vmem:[#allocation6] sm:$0xff]
    %v173 = vld [vmem:[#allocation6 + $0x8] sm:$0xff]
    %v174 = vld [vmem:[#allocation6 + $0x10] sm:$0xff]
    %v175 = vld [vmem:[#allocation6 + $0x18] sm:$0xff]
    %vm176 = vcmask 261120
    %v178 = vsel %vm176, %v170, 0
    %v181 = vsel %vm176, %v171, 0
    %183 = vmatpush.msra.mxu0 0.0
    %184 = vmatpush.msra.mxu0 0.0
    %185 = vmatpush.msra.mxu0 0.0
    %186 = vmatpush.msra.mxu0 0.0
    %187 = vmatpush.msra.mxu0 0.0
    %188 = vmatpush.msra.mxu0 0.0
    %189 = vmatpush.msra.mxu0 0.0
    %190 = vmatpush.msra.mxu0 0.0
    %191 = vmatpush.msra.mxu0 0.0
    %192 = vmatpush.msra.mxu0 0.0
    %193 = vmatpush.msra.mxu0 0.0
    %194 = vmatpush.msra.mxu0 0.0
    %195 = vmatpush.msra.mxu0 %v175
    %196 = vmatpush.msra.mxu0 %v174
    %197 = vmatpush.msra.mxu0 %v173
    %198 = vmatpush.msra.mxu0 %v172
    %199 = vmatmul.f32.gmra.mxu0 %v178
    %v200 = vpop.f32.mrf.mxu0
    %v201 = vadd.f32 0.0, %v200
    %202 = vmatmul.f32.gmra.mxu0 %v181
    %v203 = vpop.f32.mrf.mxu0
    %v204 = vadd.f32 0.0, %v203
    %205 = vdwg.mxu0
    %v207 = vsel %vm176, %v157, 0
    %v210 = vsel %vm176, %v158, 0
    %212 = vmatpush.msra.mxu0 0.0
    %213 = vmatpush.msra.mxu0 0.0
    %214 = vmatpush.msra.mxu0 0.0
    %215 = vmatpush.msra.mxu0 0.0
    %216 = vmatpush.msra.mxu0 0.0
    %217 = vmatpush.msra.mxu0 0.0
    %218 = vmatpush.msra.mxu0 0.0
    %219 = vmatpush.msra.mxu0 0.0
    %220 = vmatpush.msra.mxu0 0.0
    %221 = vmatpush.msra.mxu0 0.0
    %222 = vmatpush.msra.mxu0 0.0
    %223 = vmatpush.msra.mxu0 0.0
    %224 = vmatpush.msra.mxu0 %v162
    %225 = vmatpush.msra.mxu0 %v161
    %226 = vmatpush.msra.mxu0 %v160
    %227 = vmatpush.msra.mxu0 %v159
    %228 = vmatmul.f32.gmra.mxu0 %v207
    %v229 = vpop.f32.mrf.mxu0
    %v230 = vadd.f32 %v201, %v229
    %231 = vmatmul.f32.gmra.mxu0 %v210
    %v232 = vpop.f32.mrf.mxu0
    %v233 = vadd.f32 %v204, %v232
    %234 = vdwg.mxu0
    %v235 = vld [vmem:[%s133] sm:$0xff]
    %v236 = vld [vmem:[%s133 + $0x8] sm:$0xff]
    %s237 = scalar_lea.vmem [#allocation6], 32
    %v238 = vld [vmem:[%s237] sm:$0xff]
    %v239 = vld [vmem:[%s237 + $0x8] sm:$0xff]
    %v240 = vld [vmem:[%s237 + $0x10] sm:$0xff]
    %v241 = vld [vmem:[%s237 + $0x18] sm:$0xff]
    %v243 = vsel %vm176, %v235, 0
    %v246 = vsel %vm176, %v236, 0
    %248 = vmatpush.msra.mxu0 0.0
    %249 = vmatpush.msra.mxu0 0.0
    %250 = vmatpush.msra.mxu0 0.0
    %251 = vmatpush.msra.mxu0 0.0
    %252 = vmatpush.msra.mxu0 0.0
    %253 = vmatpush.msra.mxu0 0.0
    %254 = vmatpush.msra.mxu0 0.0
    %255 = vmatpush.msra.mxu0 0.0
    %256 = vmatpush.msra.mxu0 0.0
    %257 = vmatpush.msra.mxu0 0.0
    %258 = vmatpush.msra.mxu0 0.0
    %259 = vmatpush.msra.mxu0 0.0
    %260 = vmatpush.msra.mxu0 %v241
    %261 = vmatpush.msra.mxu0 %v240
    %262 = vmatpush.msra.mxu0 %v239
    %263 = vmatpush.msra.mxu0 %v238
    %264 = vmatmul.f32.gmra.mxu0 %v243
    %v265 = vpop.f32.mrf.mxu0
    %v266 = vadd.f32 0.0, %v265
    %267 = vmatmul.f32.gmra.mxu0 %v246
    %v268 = vpop.f32.mrf.mxu0
    %v269 = vadd.f32 0.0, %v268
    %270 = vdwg.mxu0
    %v272 = vsel %vm176, %v163, 0
    %v275 = vsel %vm176, %v164, 0
    %277 = vmatpush.msra.mxu0 0.0
    %278 = vmatpush.msra.mxu0 0.0
    %279 = vmatpush.msra.mxu0 0.0
    %280 = vmatpush.msra.mxu0 0.0
    %281 = vmatpush.msra.mxu0 0.0
    %282 = vmatpush.msra.mxu0 0.0
    %283 = vmatpush.msra.mxu0 0.0
    %284 = vmatpush.msra.mxu0 0.0
    %285 = vmatpush.msra.mxu0 0.0
    %286 = vmatpush.msra.mxu0 0.0
    %287 = vmatpush.msra.mxu0 0.0
    %288 = vmatpush.msra.mxu0 0.0
    %289 = vmatpush.msra.mxu0 %v169
    %290 = vmatpush.msra.mxu0 %v168
    %291 = vmatpush.msra.mxu0 %v167
    %292 = vmatpush.msra.mxu0 %v166
    %293 = vmatmul.f32.gmra.mxu0 %v272
    %v294 = vpop.f32.mrf.mxu0
    %v295 = vadd.f32 %v266, %v294
    %296 = vmatmul.f32.gmra.mxu0 %v275
    %v297 = vpop.f32.mrf.mxu0
    %v298 = vadd.f32 %v269, %v297
    %299 = vdwg.mxu0
    %v300 = vld [vmem:[%s7] sm:$0x1]
    %v302 = vperm.slane %v300, 0
    %v304 = vadd.f32 %v230, %v302
    %v305 = vadd.f32 %v233, %v302
    %306 = vst [vmem:[#allocation2] sm:$0xff] %v304
    %307 = vst [vmem:[#allocation2 + $0x8] sm:$0xff] %v305
    %s308 = scalar_lea.vmem %s7, 1
    %v309 = vld [vmem:[%s308] sm:$0x1]
    %v311 = vperm.slane %v309, 0
    %v313 = vadd.f32 %v295, %v311
    %v314 = vadd.f32 %v298, %v311
    %315 = vst [vmem:[#allocation3] sm:$0xff] %v313
    %316 = vst [vmem:[#allocation3 + $0x8] sm:$0xff] %v314
    %v317 = vld [vmem:[#allocation8] sm:$0xff]
    %v318 = vld [vmem:[#allocation8 + $0x8] sm:$0xff]
    %v319 = vld [vmem:[#allocation8 + $0x10] sm:$0xff]
    %v320 = vld [vmem:[#allocation8 + $0x18] sm:$0xff]
    %s321 = scalar_lea.vmem [#allocation8], 32
    %v322 = vld [vmem:[%s321] sm:$0xff]
    %v323 = vld [vmem:[%s321 + $0x8] sm:$0xff]
    %v324 = vld [vmem:[%s321 + $0x10] sm:$0xff]
    %v325 = vld [vmem:[%s321 + $0x18] sm:$0xff]
    %v326 = vld [vmem:[%s12] sm:$0x3]
    %s327 = scalar_lea.vmem %s12, 2
    %v328 = vld [vmem:[%s327] sm:$0x3]
    %v329 = vld [vmem:[%s13] sm:$0x3]
    %s330 = scalar_lea.vmem %s13, 2
    %v331 = vld [vmem:[%s330] sm:$0x3]
    %v332 = vld [vmem:[#allocation2] sm:$0x3]
    %v334 = vsel %vm176, %v326, 0
    %336 = vmatpush.msra.mxu0 0.0
    %337 = vmatpush.msra.mxu0 0.0
    %338 = vmatpush.msra.mxu0 0.0
    %339 = vmatpush.msra.mxu0 0.0
    %340 = vmatpush.msra.mxu0 0.0
    %341 = vmatpush.msra.mxu0 0.0
    %342 = vmatpush.msra.mxu0 0.0
    %343 = vmatpush.msra.mxu0 0.0
    %344 = vmatpush.msra.mxu0 0.0
    %345 = vmatpush.msra.mxu0 0.0
    %346 = vmatpush.msra.mxu0 0.0
    %347 = vmatpush.msra.mxu0 0.0
    %348 = vmatpush.msra.mxu0 %v320
    %349 = vmatpush.msra.mxu0 %v319
    %350 = vmatpush.msra.mxu0 %v318
    %351 = vmatpush.msra.mxu0 %v317
    %352 = vmatmul.f32.gmra.mxu0 %v334
    %v353 = vpop.f32.mrf.mxu0
    %v354 = vadd.f32 0.0, %v353
    %355 = vdwg.mxu0
    %v356 = vadd.f32 %v332, %v354
    %v357 = vld [vmem:[#allocation3 + $0xe] sm:$0x3]
    %v359 = vsel %vm176, %v328, 0
    %361 = vmatpush.msra.mxu0 0.0
    %362 = vmatpush.msra.mxu0 0.0
    %363 = vmatpush.msra.mxu0 0.0
    %364 = vmatpush.msra.mxu0 0.0
    %365 = vmatpush.msra.mxu0 0.0
    %366 = vmatpush.msra.mxu0 0.0
    %367 = vmatpush.msra.mxu0 0.0
    %368 = vmatpush.msra.mxu0 0.0
    %369 = vmatpush.msra.mxu0 0.0
    %370 = vmatpush.msra.mxu0 0.0
    %371 = vmatpush.msra.mxu0 0.0
    %372 = vmatpush.msra.mxu0 0.0
    %373 = vmatpush.msra.mxu0 %v325
    %374 = vmatpush.msra.mxu0 %v324
    %375 = vmatpush.msra.mxu0 %v323
    %376 = vmatpush.msra.mxu0 %v322
    %377 = vmatmul.f32.gmra.mxu0 %v359
    %v378 = vpop.f32.mrf.mxu0
    %v379 = vadd.f32 0.0, %v378
    %380 = vdwg.mxu0
    %v381 = vadd.f32 %v357, %v379
    %v382 = vxor.u32 %v356, 2147483648
    %v383 = vmul.f32 %v382, 1.442695
    %v384 = vpow.pop %v383
    %v385 = vadd.f32 %v384, 1.0
    %v386 = vrcp.pop %v385
    %v387 = vmul.f32 %v385, %v386
    %v388 = vsub.f32 1.0, %v387
    %v389 = vmul.f32 %v386, %v388
    %v390 = vadd.f32 %v386, %v389
    %vm391 = vweird.f32 %v385
    %vm392 = vweird.f32 %v386
    %vm393 = vmor %vm391, %vm392
    %v394 = vsel %vm393, %v386, %v390
    %v395 = vand.u32 2147483647, %v385
    %vm396 = vcmp.eq.f32.partialorder %v395, 8.507059e+37
    %v397 = vand.u32 %v385, 2147483648
    %v398 = vor.u32 1.1754944e-38, %v397
    %v399 = vsel %vm396, %v398, %v394
    %v400 = vmul.f32 1.0, %v399
    %v401 = vtanh.pop %v356
    %v402 = vxor.u32 %v381, 2147483648
    %v403 = vmul.f32 %v402, 1.442695
    %v404 = vpow.pop %v403
    %v405 = vadd.f32 %v404, 1.0
    %v406 = vrcp.pop %v405
    %v407 = vmul.f32 %v405, %v406
    %v408 = vsub.f32 1.0, %v407
    %v409 = vmul.f32 %v406, %v408
    %v410 = vadd.f32 %v406, %v409
    %vm411 = vweird.f32 %v405
    %vm412 = vweird.f32 %v406
    %vm413 = vmor %vm411, %vm412
    %v414 = vsel %vm413, %v406, %v410
    %v415 = vand.u32 2147483647, %v405
    %vm416 = vcmp.eq.f32.partialorder %v415, 8.507059e+37
    %v417 = vand.u32 %v405, 2147483648
    %v418 = vor.u32 1.1754944e-38, %v417
    %v419 = vsel %vm416, %v418, %v414
    %v420 = vmul.f32 1.0, %v419
    %v421 = vtanh.pop %v381
    %423 = vrot.lane.b32.xlu0 %v329, 32
    %v424 = vpop.permute.xlu0 %423
    %v426 = vmul.f32 %v400, %v424
    %428 = vrot.lane.b32.xlu0 %v401, 64
    %v429 = vpop.permute.xlu0 %428
    %v431 = vmul.f32 %v400, %v429
    %433 = vrot.lane.b32.xlu0 %v431, 32
    %v434 = vpop.permute.xlu0 %433
    %v436 = vadd.f32 %v426, %v434
    %438 = vrot.lane.b32.xlu0 %v331, 32
    %v439 = vpop.permute.xlu0 %438
    %v441 = vmul.f32 %v420, %v439
    %443 = vrot.lane.b32.xlu0 %v421, 64
    %v444 = vpop.permute.xlu0 %443
    %v446 = vmul.f32 %v420, %v444
    %448 = vrot.lane.b32.xlu0 %v446, 32
    %v449 = vpop.permute.xlu0 %448
    %v451 = vadd.f32 %v441, %v449
    %v452 = vtanh.pop %v436
    %454 = vrot.lane.b32.xlu0 %v452, 64
    %v455 = vpop.permute.xlu0 %454
    %v457 = vmul.f32 %v400, %v455
    %v458 = vtanh.pop %v451
    %460 = vrot.lane.b32.xlu0 %v458, 64
    %v461 = vpop.permute.xlu0 %460
    %v463 = vmul.f32 %v420, %v461
    %465 = vrot.lane.b32.xlu0 %v457, 32
    %v466 = vpop.permute.xlu0 %465
    %vm468 = vcmask 254976
    %469 = vst.msk [vmem:[%s10] sm:$0x3] %vm468, %v466
    %471 = vrot.lane.b32.xlu0 %v463, 32
    %v472 = vpop.permute.xlu0 %471
    %474 = vst.msk [vmem:[%s141 + $0xe] sm:$0x3] %vm468, %v472
    %v475 = vld [vmem:[#allocation2 + $0x2] sm:$0x3]
    %v476 = vsel %vm176, %v466, 0
    %478 = vmatpush.msra.mxu0 0.0
    %479 = vmatpush.msra.mxu0 0.0
    %480 = vmatpush.msra.mxu0 0.0
    %481 = vmatpush.msra.mxu0 0.0
    %482 = vmatpush.msra.mxu0 0.0
    %483 = vmatpush.msra.mxu0 0.0
    %484 = vmatpush.msra.mxu0 0.0
    %485 = vmatpush.msra.mxu0 0.0
    %486 = vmatpush.msra.mxu0 0.0
    %487 = vmatpush.msra.mxu0 0.0
    %488 = vmatpush.msra.mxu0 0.0
    %489 = vmatpush.msra.mxu0 0.0
    %490 = vmatpush.msra.mxu0 %v320
    %491 = vmatpush.msra.mxu0 %v319
    %492 = vmatpush.msra.mxu0 %v318
    %493 = vmatpush.msra.mxu0 %v317
    %494 = vmatmul.f32.gmra.mxu0 %v476
    %v495 = vpop.f32.mrf.mxu0
    %v496 = vadd.f32 0.0, %v495
    %497 = vdwg.mxu0
    %v498 = vadd.f32 %v475, %v496
    %v499 = vld [vmem:[#allocation3 + $0xc] sm:$0x3]
    %v500 = vsel %vm176, %v472, 0
    %502 = vmatpush.msra.mxu0 0.0
    %503 = vmatpush.msra.mxu0 0.0
    %504 = vmatpush.msra.mxu0 0.0
    %505 = vmatpush.msra.mxu0 0.0
    %506 = vmatpush.msra.mxu0 0.0
    %507 = vmatpush.msra.mxu0 0.0
    %508 = vmatpush.msra.mxu0 0.0
    %509 = vmatpush.msra.mxu0 0.0
    %510 = vmatpush.msra.mxu0 0.0
    %511 = vmatpush.msra.mxu0 0.0
    %512 = vmatpush.msra.mxu0 0.0
    %513 = vmatpush.msra.mxu0 0.0
    %514 = vmatpush.msra.mxu0 %v325
    %515 = vmatpush.msra.mxu0 %v324
    %516 = vmatpush.msra.mxu0 %v323
    %517 = vmatpush.msra.mxu0 %v322
    %518 = vmatmul.f32.gmra.mxu0 %v500
    %v519 = vpop.f32.mrf.mxu0
    %v520 = vadd.f32 0.0, %v519
    %521 = vdwg.mxu0
    %v522 = vadd.f32 %v499, %v520
    %v523 = vxor.u32 %v498, 2147483648
    %v524 = vmul.f32 %v523, 1.442695
    %v525 = vpow.pop %v524
    %v526 = vadd.f32 %v525, 1.0
    %v527 = vrcp.pop %v526
    %v528 = vmul.f32 %v526, %v527
    %v529 = vsub.f32 1.0, %v528
    %v530 = vmul.f32 %v527, %v529
    %v531 = vadd.f32 %v527, %v530
    %vm532 = vweird.f32 %v526
    %vm533 = vweird.f32 %v527
    %vm534 = vmor %vm532, %vm533
    %v535 = vsel %vm534, %v527, %v531
    %v536 = vand.u32 2147483647, %v526
    %vm537 = vcmp.eq.f32.partialorder %v536, 8.507059e+37
    %v538 = vand.u32 %v526, 2147483648
    %v539 = vor.u32 1.1754944e-38, %v538
    %v540 = vsel %vm537, %v539, %v535
    %v541 = vmul.f32 1.0, %v540
    %v542 = vtanh.pop %v498
    %v543 = vxor.u32 %v522, 2147483648
    %v544 = vmul.f32 %v543, 1.442695
    %v545 = vpow.pop %v544
    %v546 = vadd.f32 %v545, 1.0
    %v547 = vrcp.pop %v546
    %v548 = vmul.f32 %v546, %v547
    %v549 = vsub.f32 1.0, %v548
    %v550 = vmul.f32 %v547, %v549
    %v551 = vadd.f32 %v547, %v550
    %vm552 = vweird.f32 %v546
    %vm553 = vweird.f32 %v547
    %vm554 = vmor %vm552, %vm553
    %v555 = vsel %vm554, %v547, %v551
    %v556 = vand.u32 2147483647, %v546
    %vm557 = vcmp.eq.f32.partialorder %v556, 8.507059e+37
    %v558 = vand.u32 %v546, 2147483648
    %v559 = vor.u32 1.1754944e-38, %v558
    %v560 = vsel %vm557, %v559, %v555
    %v561 = vmul.f32 1.0, %v560
    %v562 = vtanh.pop %v522
    %v563 = vmul.f32 %v541, %v436
    %565 = vrot.lane.b32.xlu0 %v542, 64
    %v566 = vpop.permute.xlu0 %565
    %v568 = vmul.f32 %v541, %v566
    %570 = vrot.lane.b32.xlu0 %v568, 32
    %v571 = vpop.permute.xlu0 %570
    %v573 = vadd.f32 %v563, %v571
    %v574 = vmul.f32 %v561, %v451
    %576 = vrot.lane.b32.xlu0 %v562, 64
    %v577 = vpop.permute.xlu0 %576
    %v579 = vmul.f32 %v561, %v577
    %581 = vrot.lane.b32.xlu0 %v579, 32
    %v582 = vpop.permute.xlu0 %581
    %v584 = vadd.f32 %v574, %v582
    %v585 = vtanh.pop %v573
    %587 = vrot.lane.b32.xlu0 %v585, 64
    %v588 = vpop.permute.xlu0 %587
    %v590 = vmul.f32 %v541, %v588
    %v591 = vtanh.pop %v584
    %593 = vrot.lane.b32.xlu0 %v591, 64
    %v594 = vpop.permute.xlu0 %593
    %v596 = vmul.f32 %v561, %v594
    %598 = vrot.lane.b32.xlu0 %v590, 32
    %v599 = vpop.permute.xlu0 %598
    %601 = vst.msk [vmem:[%s10 + $0x2] sm:$0x3] %vm468, %v599
    %603 = vrot.lane.b32.xlu0 %v596, 32
    %v604 = vpop.permute.xlu0 %603
    %606 = vst.msk [vmem:[%s141 + $0xc] sm:$0x3] %vm468, %v604
    %v607 = vld [vmem:[#allocation2 + $0x4] sm:$0x3]
    %v608 = vsel %vm176, %v599, 0
    %610 = vmatpush.msra.mxu0 0.0
    %611 = vmatpush.msra.mxu0 0.0
    %612 = vmatpush.msra.mxu0 0.0
    %613 = vmatpush.msra.mxu0 0.0
    %614 = vmatpush.msra.mxu0 0.0
    %615 = vmatpush.msra.mxu0 0.0
    %616 = vmatpush.msra.mxu0 0.0
    %617 = vmatpush.msra.mxu0 0.0
    %618 = vmatpush.msra.mxu0 0.0
    %619 = vmatpush.msra.mxu0 0.0
    %620 = vmatpush.msra.mxu0 0.0
    %621 = vmatpush.msra.mxu0 0.0
    %622 = vmatpush.msra.mxu0 %v320
    %623 = vmatpush.msra.mxu0 %v319
    %624 = vmatpush.msra.mxu0 %v318
    %625 = vmatpush.msra.mxu0 %v317
    %626 = vmatmul.f32.gmra.mxu0 %v608
    %v627 = vpop.f32.mrf.mxu0
    %v628 = vadd.f32 0.0, %v627
    %629 = vdwg.mxu0
    %v630 = vadd.f32 %v607, %v628
    %v631 = vld [vmem:[#allocation3 + $0xa] sm:$0x3]
    %v632 = vsel %vm176, %v604, 0
    %634 = vmatpush.msra.mxu0 0.0
    %635 = vmatpush.msra.mxu0 0.0
    %636 = vmatpush.msra.mxu0 0.0
    %637 = vmatpush.msra.mxu0 0.0
    %638 = vmatpush.msra.mxu0 0.0
    %639 = vmatpush.msra.mxu0 0.0
    %640 = vmatpush.msra.mxu0 0.0
    %641 = vmatpush.msra.mxu0 0.0
    %642 = vmatpush.msra.mxu0 0.0
    %643 = vmatpush.msra.mxu0 0.0
    %644 = vmatpush.msra.mxu0 0.0
    %645 = vmatpush.msra.mxu0 0.0
    %646 = vmatpush.msra.mxu0 %v325
    %647 = vmatpush.msra.mxu0 %v324
    %648 = vmatpush.msra.mxu0 %v323
    %649 = vmatpush.msra.mxu0 %v322
    %650 = vmatmul.f32.gmra.mxu0 %v632
    %v651 = vpop.f32.mrf.mxu0
    %v652 = vadd.f32 0.0, %v651
    %653 = vdwg.mxu0
    %v654 = vadd.f32 %v631, %v652
    %v655 = vxor.u32 %v630, 2147483648
    %v656 = vmul.f32 %v655, 1.442695
    %v657 = vpow.pop %v656
    %v658 = vadd.f32 %v657, 1.0
    %v659 = vrcp.pop %v658
    %v660 = vmul.f32 %v658, %v659
    %v661 = vsub.f32 1.0, %v660
    %v662 = vmul.f32 %v659, %v661
    %v663 = vadd.f32 %v659, %v662
    %vm664 = vweird.f32 %v658
    %vm665 = vweird.f32 %v659
    %vm666 = vmor %vm664, %vm665
    %v667 = vsel %vm666, %v659, %v663
    %v668 = vand.u32 2147483647, %v658
    %vm669 = vcmp.eq.f32.partialorder %v668, 8.507059e+37
    %v670 = vand.u32 %v658, 2147483648
    %v671 = vor.u32 1.1754944e-38, %v670
    %v672 = vsel %vm669, %v671, %v667
    %v673 = vmul.f32 1.0, %v672
    %v674 = vtanh.pop %v630
    %v675 = vxor.u32 %v654, 2147483648
    %v676 = vmul.f32 %v675, 1.442695
    %v677 = vpow.pop %v676
    %v678 = vadd.f32 %v677, 1.0
    %v679 = vrcp.pop %v678
    %v680 = vmul.f32 %v678, %v679
    %v681 = vsub.f32 1.0, %v680
    %v682 = vmul.f32 %v679, %v681
    %v683 = vadd.f32 %v679, %v682
    %vm684 = vweird.f32 %v678
    %vm685 = vweird.f32 %v679
    %vm686 = vmor %vm684, %vm685
    %v687 = vsel %vm686, %v679, %v683
    %v688 = vand.u32 2147483647, %v678
    %vm689 = vcmp.eq.f32.partialorder %v688, 8.507059e+37
    %v690 = vand.u32 %v678, 2147483648
    %v691 = vor.u32 1.1754944e-38, %v690
    %v692 = vsel %vm689, %v691, %v687
    %v693 = vmul.f32 1.0, %v692
    %v694 = vtanh.pop %v654
    %v695 = vmul.f32 %v673, %v573
    %697 = vrot.lane.b32.xlu0 %v674, 64
    %v698 = vpop.permute.xlu0 %697
    %v700 = vmul.f32 %v673, %v698
    %702 = vrot.lane.b32.xlu0 %v700, 32
    %v703 = vpop.permute.xlu0 %702
    %v705 = vadd.f32 %v695, %v703
    %v706 = vmul.f32 %v693, %v584
    %708 = vrot.lane.b32.xlu0 %v694, 64
    %v709 = vpop.permute.xlu0 %708
    %v711 = vmul.f32 %v693, %v709
    %713 = vrot.lane.b32.xlu0 %v711, 32
    %v714 = vpop.permute.xlu0 %713
    %v716 = vadd.f32 %v706, %v714
    %v717 = vtanh.pop %v705
    %719 = vrot.lane.b32.xlu0 %v717, 64
    %v720 = vpop.permute.xlu0 %719
    %v722 = vmul.f32 %v673, %v720
    %v723 = vtanh.pop %v716
    %725 = vrot.lane.b32.xlu0 %v723, 64
    %v726 = vpop.permute.xlu0 %725
    %v728 = vmul.f32 %v693, %v726
    %730 = vrot.lane.b32.xlu0 %v722, 32
    %v731 = vpop.permute.xlu0 %730
    %733 = vst.msk [vmem:[%s10 + $0x4] sm:$0x3] %vm468, %v731
    %735 = vrot.lane.b32.xlu0 %v728, 32
    %v736 = vpop.permute.xlu0 %735
    %738 = vst.msk [vmem:[%s141 + $0xa] sm:$0x3] %vm468, %v736
    %v739 = vld [vmem:[#allocation2 + $0x6] sm:$0x3]
    %v740 = vsel %vm176, %v731, 0
    %742 = vmatpush.msra.mxu0 0.0
    %743 = vmatpush.msra.mxu0 0.0
    %744 = vmatpush.msra.mxu0 0.0
    %745 = vmatpush.msra.mxu0 0.0
    %746 = vmatpush.msra.mxu0 0.0
    %747 = vmatpush.msra.mxu0 0.0
    %748 = vmatpush.msra.mxu0 0.0
    %749 = vmatpush.msra.mxu0 0.0
    %750 = vmatpush.msra.mxu0 0.0
    %751 = vmatpush.msra.mxu0 0.0
    %752 = vmatpush.msra.mxu0 0.0
    %753 = vmatpush.msra.mxu0 0.0
    %754 = vmatpush.msra.mxu0 %v320
    %755 = vmatpush.msra.mxu0 %v319
    %756 = vmatpush.msra.mxu0 %v318
    %757 = vmatpush.msra.mxu0 %v317
    %758 = vmatmul.f32.gmra.mxu0 %v740
    %v759 = vpop.f32.mrf.mxu0
    %v760 = vadd.f32 0.0, %v759
    %761 = vdwg.mxu0
    %v762 = vadd.f32 %v739, %v760
    %v763 = vld [vmem:[#allocation3 + $0x8] sm:$0x3]
    %v764 = vsel %vm176, %v736, 0
    %766 = vmatpush.msra.mxu0 0.0
    %767 = vmatpush.msra.mxu0 0.0
    %768 = vmatpush.msra.mxu0 0.0
    %769 = vmatpush.msra.mxu0 0.0
    %770 = vmatpush.msra.mxu0 0.0
    %771 = vmatpush.msra.mxu0 0.0
    %772 = vmatpush.msra.mxu0 0.0
    %773 = vmatpush.msra.mxu0 0.0
    %774 = vmatpush.msra.mxu0 0.0
    %775 = vmatpush.msra.mxu0 0.0
    %776 = vmatpush.msra.mxu0 0.0
    %777 = vmatpush.msra.mxu0 0.0
    %778 = vmatpush.msra.mxu0 %v325
    %779 = vmatpush.msra.mxu0 %v324
    %780 = vmatpush.msra.mxu0 %v323
    %781 = vmatpush.msra.mxu0 %v322
    %782 = vmatmul.f32.gmra.mxu0 %v764
    %v783 = vpop.f32.mrf.mxu0
    %v784 = vadd.f32 0.0, %v783
    %785 = vdwg.mxu0
    %v786 = vadd.f32 %v763, %v784
    %v787 = vxor.u32 %v762, 2147483648
    %v788 = vmul.f32 %v787, 1.442695
    %v789 = vpow.pop %v788
    %v790 = vadd.f32 %v789, 1.0
    %v791 = vrcp.pop %v790
    %v792 = vmul.f32 %v790, %v791
    %v793 = vsub.f32 1.0, %v792
    %v794 = vmul.f32 %v791, %v793
    %v795 = vadd.f32 %v791, %v794
    %vm796 = vweird.f32 %v790
    %vm797 = vweird.f32 %v791
    %vm798 = vmor %vm796, %vm797
    %v799 = vsel %vm798, %v791, %v795
    %v800 = vand.u32 2147483647, %v790
    %vm801 = vcmp.eq.f32.partialorder %v800, 8.507059e+37
    %v802 = vand.u32 %v790, 2147483648
    %v803 = vor.u32 1.1754944e-38, %v802
    %v804 = vsel %vm801, %v803, %v799
    %v805 = vmul.f32 1.0, %v804
    %v806 = vtanh.pop %v762
    %v807 = vxor.u32 %v786, 2147483648
    %v808 = vmul.f32 %v807, 1.442695
    %v809 = vpow.pop %v808
    %v810 = vadd.f32 %v809, 1.0
    %v811 = vrcp.pop %v810
    %v812 = vmul.f32 %v810, %v811
    %v813 = vsub.f32 1.0, %v812
    %v814 = vmul.f32 %v811, %v813
    %v815 = vadd.f32 %v811, %v814
    %vm816 = vweird.f32 %v810
    %vm817 = vweird.f32 %v811
    %vm818 = vmor %vm816, %vm817
    %v819 = vsel %vm818, %v811, %v815
    %v820 = vand.u32 2147483647, %v810
    %vm821 = vcmp.eq.f32.partialorder %v820, 8.507059e+37
    %v822 = vand.u32 %v810, 2147483648
    %v823 = vor.u32 1.1754944e-38, %v822
    %v824 = vsel %vm821, %v823, %v819
    %v825 = vmul.f32 1.0, %v824
    %v826 = vtanh.pop %v786
    %v827 = vmul.f32 %v805, %v705
    %829 = vrot.lane.b32.xlu0 %v806, 64
    %v830 = vpop.permute.xlu0 %829
    %v832 = vmul.f32 %v805, %v830
    %834 = vrot.lane.b32.xlu0 %v832, 32
    %v835 = vpop.permute.xlu0 %834
    %v837 = vadd.f32 %v827, %v835
    %v838 = vmul.f32 %v825, %v716
    %840 = vrot.lane.b32.xlu0 %v826, 64
    %v841 = vpop.permute.xlu0 %840
    %v843 = vmul.f32 %v825, %v841
    %845 = vrot.lane.b32.xlu0 %v843, 32
    %v846 = vpop.permute.xlu0 %845
    %v848 = vadd.f32 %v838, %v846
    %v849 = vtanh.pop %v837
    %851 = vrot.lane.b32.xlu0 %v849, 64
    %v852 = vpop.permute.xlu0 %851
    %v854 = vmul.f32 %v805, %v852
    %v855 = vtanh.pop %v848
    %857 = vrot.lane.b32.xlu0 %v855, 64
    %v858 = vpop.permute.xlu0 %857
    %v860 = vmul.f32 %v825, %v858
    %862 = vrot.lane.b32.xlu0 %v854, 32
    %v863 = vpop.permute.xlu0 %862
    %865 = vst.msk [vmem:[%s10 + $0x6] sm:$0x3] %vm468, %v863
    %867 = vrot.lane.b32.xlu0 %v860, 32
    %v868 = vpop.permute.xlu0 %867
    %870 = vst.msk [vmem:[%s141 + $0x8] sm:$0x3] %vm468, %v868
    %v871 = vld [vmem:[#allocation2 + $0x8] sm:$0x3]
    %v872 = vsel %vm176, %v863, 0
    %874 = vmatpush.msra.mxu0 0.0
    %875 = vmatpush.msra.mxu0 0.0
    %876 = vmatpush.msra.mxu0 0.0
    %877 = vmatpush.msra.mxu0 0.0
    %878 = vmatpush.msra.mxu0 0.0
    %879 = vmatpush.msra.mxu0 0.0
    %880 = vmatpush.msra.mxu0 0.0
    %881 = vmatpush.msra.mxu0 0.0
    %882 = vmatpush.msra.mxu0 0.0
    %883 = vmatpush.msra.mxu0 0.0
    %884 = vmatpush.msra.mxu0 0.0
    %885 = vmatpush.msra.mxu0 0.0
    %886 = vmatpush.msra.mxu0 %v320
    %887 = vmatpush.msra.mxu0 %v319
    %888 = vmatpush.msra.mxu0 %v318
    %889 = vmatpush.msra.mxu0 %v317
    %890 = vmatmul.f32.gmra.mxu0 %v872
    %v891 = vpop.f32.mrf.mxu0
    %v892 = vadd.f32 0.0, %v891
    %893 = vdwg.mxu0
    %v894 = vadd.f32 %v871, %v892
    %v895 = vld [vmem:[#allocation3 + $0x6] sm:$0x3]
    %v896 = vsel %vm176, %v868, 0
    %898 = vmatpush.msra.mxu0 0.0
    %899 = vmatpush.msra.mxu0 0.0
    %900 = vmatpush.msra.mxu0 0.0
    %901 = vmatpush.msra.mxu0 0.0
    %902 = vmatpush.msra.mxu0 0.0
    %903 = vmatpush.msra.mxu0 0.0
    %904 = vmatpush.msra.mxu0 0.0
    %905 = vmatpush.msra.mxu0 0.0
    %906 = vmatpush.msra.mxu0 0.0
    %907 = vmatpush.msra.mxu0 0.0
    %908 = vmatpush.msra.mxu0 0.0
    %909 = vmatpush.msra.mxu0 0.0
    %910 = vmatpush.msra.mxu0 %v325
    %911 = vmatpush.msra.mxu0 %v324
    %912 = vmatpush.msra.mxu0 %v323
    %913 = vmatpush.msra.mxu0 %v322
    %914 = vmatmul.f32.gmra.mxu0 %v896
    %v915 = vpop.f32.mrf.mxu0
    %v916 = vadd.f32 0.0, %v915
    %917 = vdwg.mxu0
    %v918 = vadd.f32 %v895, %v916
    %v919 = vxor.u32 %v894, 2147483648
    %v920 = vmul.f32 %v919, 1.442695
    %v921 = vpow.pop %v920
    %v922 = vadd.f32 %v921, 1.0
    %v923 = vrcp.pop %v922
    %v924 = vmul.f32 %v922, %v923
    %v925 = vsub.f32 1.0, %v924
    %v926 = vmul.f32 %v923, %v925
    %v927 = vadd.f32 %v923, %v926
    %vm928 = vweird.f32 %v922
    %vm929 = vweird.f32 %v923
    %vm930 = vmor %vm928, %vm929
    %v931 = vsel %vm930, %v923, %v927
    %v932 = vand.u32 2147483647, %v922
    %vm933 = vcmp.eq.f32.partialorder %v932, 8.507059e+37
    %v934 = vand.u32 %v922, 2147483648
    %v935 = vor.u32 1.1754944e-38, %v934
    %v936 = vsel %vm933, %v935, %v931
    %v937 = vmul.f32 1.0, %v936
    %v938 = vtanh.pop %v894
    %v939 = vxor.u32 %v918, 2147483648
    %v940 = vmul.f32 %v939, 1.442695
    %v941 = vpow.pop %v940
    %v942 = vadd.f32 %v941, 1.0
    %v943 = vrcp.pop %v942
    %v944 = vmul.f32 %v942, %v943
    %v945 = vsub.f32 1.0, %v944
    %v946 = vmul.f32 %v943, %v945
    %v947 = vadd.f32 %v943, %v946
    %vm948 = vweird.f32 %v942
    %vm949 = vweird.f32 %v943
    %vm950 = vmor %vm948, %vm949
    %v951 = vsel %vm950, %v943, %v947
    %v952 = vand.u32 2147483647, %v942
    %vm953 = vcmp.eq.f32.partialorder %v952, 8.507059e+37
    %v954 = vand.u32 %v942, 2147483648
    %v955 = vor.u32 1.1754944e-38, %v954
    %v956 = vsel %vm953, %v955, %v951
    %v957 = vmul.f32 1.0, %v956
    %v958 = vtanh.pop %v918
    %v959 = vmul.f32 %v937, %v837
    %961 = vrot.lane.b32.xlu0 %v938, 64
    %v962 = vpop.permute.xlu0 %961
    %v964 = vmul.f32 %v937, %v962
    %966 = vrot.lane.b32.xlu0 %v964, 32
    %v967 = vpop.permute.xlu0 %966
    %v969 = vadd.f32 %v959, %v967
    %v970 = vmul.f32 %v957, %v848
    %972 = vrot.lane.b32.xlu0 %v958, 64
    %v973 = vpop.permute.xlu0 %972
    %v975 = vmul.f32 %v957, %v973
    %977 = vrot.lane.b32.xlu0 %v975, 32
    %v978 = vpop.permute.xlu0 %977
    %v980 = vadd.f32 %v970, %v978
    %v981 = vtanh.pop %v969
    %983 = vrot.lane.b32.xlu0 %v981, 64
    %v984 = vpop.permute.xlu0 %983
    %v986 = vmul.f32 %v937, %v984
    %v987 = vtanh.pop %v980
    %989 = vrot.lane.b32.xlu0 %v987, 64
    %v990 = vpop.permute.xlu0 %989
    %v992 = vmul.f32 %v957, %v990
    %994 = vrot.lane.b32.xlu0 %v986, 32
    %v995 = vpop.permute.xlu0 %994
    %997 = vst.msk [vmem:[%s10 + $0x8] sm:$0x3] %vm468, %v995
    %999 = vrot.lane.b32.xlu0 %v992, 32
    %v1000 = vpop.permute.xlu0 %999
    %1002 = vst.msk [vmem:[%s141 + $0x6] sm:$0x3] %vm468, %v1000
    %v1003 = vld [vmem:[#allocation2 + $0xa] sm:$0x3]
    %v1004 = vsel %vm176, %v995, 0
    %1006 = vmatpush.msra.mxu0 0.0
    %1007 = vmatpush.msra.mxu0 0.0
    %1008 = vmatpush.msra.mxu0 0.0
    %1009 = vmatpush.msra.mxu0 0.0
    %1010 = vmatpush.msra.mxu0 0.0
    %1011 = vmatpush.msra.mxu0 0.0
    %1012 = vmatpush.msra.mxu0 0.0
    %1013 = vmatpush.msra.mxu0 0.0
    %1014 = vmatpush.msra.mxu0 0.0
    %1015 = vmatpush.msra.mxu0 0.0
    %1016 = vmatpush.msra.mxu0 0.0
    %1017 = vmatpush.msra.mxu0 0.0
    %1018 = vmatpush.msra.mxu0 %v320
    %1019 = vmatpush.msra.mxu0 %v319
    %1020 = vmatpush.msra.mxu0 %v318
    %1021 = vmatpush.msra.mxu0 %v317
    %1022 = vmatmul.f32.gmra.mxu0 %v1004
    %v1023 = vpop.f32.mrf.mxu0
    %v1024 = vadd.f32 0.0, %v1023
    %1025 = vdwg.mxu0
    %v1026 = vadd.f32 %v1003, %v1024
    %v1027 = vld [vmem:[#allocation3 + $0x4] sm:$0x3]
    %v1028 = vsel %vm176, %v1000, 0
    %1030 = vmatpush.msra.mxu0 0.0
    %1031 = vmatpush.msra.mxu0 0.0
    %1032 = vmatpush.msra.mxu0 0.0
    %1033 = vmatpush.msra.mxu0 0.0
    %1034 = vmatpush.msra.mxu0 0.0
    %1035 = vmatpush.msra.mxu0 0.0
    %1036 = vmatpush.msra.mxu0 0.0
    %1037 = vmatpush.msra.mxu0 0.0
    %1038 = vmatpush.msra.mxu0 0.0
    %1039 = vmatpush.msra.mxu0 0.0
    %1040 = vmatpush.msra.mxu0 0.0
    %1041 = vmatpush.msra.mxu0 0.0
    %1042 = vmatpush.msra.mxu0 %v325
    %1043 = vmatpush.msra.mxu0 %v324
    %1044 = vmatpush.msra.mxu0 %v323
    %1045 = vmatpush.msra.mxu0 %v322
    %1046 = vmatmul.f32.gmra.mxu0 %v1028
    %v1047 = vpop.f32.mrf.mxu0
    %v1048 = vadd.f32 0.0, %v1047
    %1049 = vdwg.mxu0
    %v1050 = vadd.f32 %v1027, %v1048
    %v1051 = vxor.u32 %v1026, 2147483648
    %v1052 = vmul.f32 %v1051, 1.442695
    %v1053 = vpow.pop %v1052
    %v1054 = vadd.f32 %v1053, 1.0
    %v1055 = vrcp.pop %v1054
    %v1056 = vmul.f32 %v1054, %v1055
    %v1057 = vsub.f32 1.0, %v1056
    %v1058 = vmul.f32 %v1055, %v1057
    %v1059 = vadd.f32 %v1055, %v1058
    %vm1060 = vweird.f32 %v1054
    %vm1061 = vweird.f32 %v1055
    %vm1062 = vmor %vm1060, %vm1061
    %v1063 = vsel %vm1062, %v1055, %v1059
    %v1064 = vand.u32 2147483647, %v1054
    %vm1065 = vcmp.eq.f32.partialorder %v1064, 8.507059e+37
    %v1066 = vand.u32 %v1054, 2147483648
    %v1067 = vor.u32 1.1754944e-38, %v1066
    %v1068 = vsel %vm1065, %v1067, %v1063
    %v1069 = vmul.f32 1.0, %v1068
    %v1070 = vtanh.pop %v1026
    %v1071 = vxor.u32 %v1050, 2147483648
    %v1072 = vmul.f32 %v1071, 1.442695
    %v1073 = vpow.pop %v1072
    %v1074 = vadd.f32 %v1073, 1.0
    %v1075 = vrcp.pop %v1074
    %v1076 = vmul.f32 %v1074, %v1075
    %v1077 = vsub.f32 1.0, %v1076
    %v1078 = vmul.f32 %v1075, %v1077
    %v1079 = vadd.f32 %v1075, %v1078
    %vm1080 = vweird.f32 %v1074
    %vm1081 = vweird.f32 %v1075
    %vm1082 = vmor %vm1080, %vm1081
    %v1083 = vsel %vm1082, %v1075, %v1079
    %v1084 = vand.u32 2147483647, %v1074
    %vm1085 = vcmp.eq.f32.partialorder %v1084, 8.507059e+37
    %v1086 = vand.u32 %v1074, 2147483648
    %v1087 = vor.u32 1.1754944e-38, %v1086
    %v1088 = vsel %vm1085, %v1087, %v1083
    %v1089 = vmul.f32 1.0, %v1088
    %v1090 = vtanh.pop %v1050
    %v1091 = vmul.f32 %v1069, %v969
    %1093 = vrot.lane.b32.xlu0 %v1070, 64
    %v1094 = vpop.permute.xlu0 %1093
    %v1096 = vmul.f32 %v1069, %v1094
    %1098 = vrot.lane.b32.xlu0 %v1096, 32
    %v1099 = vpop.permute.xlu0 %1098
    %v1101 = vadd.f32 %v1091, %v1099
    %v1102 = vmul.f32 %v1089, %v980
    %1104 = vrot.lane.b32.xlu0 %v1090, 64
    %v1105 = vpop.permute.xlu0 %1104
    %v1107 = vmul.f32 %v1089, %v1105
    %1109 = vrot.lane.b32.xlu0 %v1107, 32
    %v1110 = vpop.permute.xlu0 %1109
    %v1112 = vadd.f32 %v1102, %v1110
    %v1113 = vtanh.pop %v1101
    %1115 = vrot.lane.b32.xlu0 %v1113, 64
    %v1116 = vpop.permute.xlu0 %1115
    %v1118 = vmul.f32 %v1069, %v1116
    %v1119 = vtanh.pop %v1112
    %1121 = vrot.lane.b32.xlu0 %v1119, 64
    %v1122 = vpop.permute.xlu0 %1121
    %v1124 = vmul.f32 %v1089, %v1122
    %1126 = vrot.lane.b32.xlu0 %v1118, 32
    %v1127 = vpop.permute.xlu0 %1126
    %1129 = vst.msk [vmem:[%s10 + $0xa] sm:$0x3] %vm468, %v1127
    %1131 = vrot.lane.b32.xlu0 %v1124, 32
    %v1132 = vpop.permute.xlu0 %1131
    %1134 = vst.msk [vmem:[%s141 + $0x4] sm:$0x3] %vm468, %v1132
    %v1135 = vld [vmem:[#allocation2 + $0xc] sm:$0x3]
    %v1136 = vsel %vm176, %v1127, 0
    %1138 = vmatpush.msra.mxu0 0.0
    %1139 = vmatpush.msra.mxu0 0.0
    %1140 = vmatpush.msra.mxu0 0.0
    %1141 = vmatpush.msra.mxu0 0.0
    %1142 = vmatpush.msra.mxu0 0.0
    %1143 = vmatpush.msra.mxu0 0.0
    %1144 = vmatpush.msra.mxu0 0.0
    %1145 = vmatpush.msra.mxu0 0.0
    %1146 = vmatpush.msra.mxu0 0.0
    %1147 = vmatpush.msra.mxu0 0.0
    %1148 = vmatpush.msra.mxu0 0.0
    %1149 = vmatpush.msra.mxu0 0.0
    %1150 = vmatpush.msra.mxu0 %v320
    %1151 = vmatpush.msra.mxu0 %v319
    %1152 = vmatpush.msra.mxu0 %v318
    %1153 = vmatpush.msra.mxu0 %v317
    %1154 = vmatmul.f32.gmra.mxu0 %v1136
    %v1155 = vpop.f32.mrf.mxu0
    %v1156 = vadd.f32 0.0, %v1155
    %1157 = vdwg.mxu0
    %v1158 = vadd.f32 %v1135, %v1156
    %v1159 = vld [vmem:[#allocation3 + $0x2] sm:$0x3]
    %v1160 = vsel %vm176, %v1132, 0
    %1162 = vmatpush.msra.mxu0 0.0
    %1163 = vmatpush.msra.mxu0 0.0
    %1164 = vmatpush.msra.mxu0 0.0
    %1165 = vmatpush.msra.mxu0 0.0
    %1166 = vmatpush.msra.mxu0 0.0
    %1167 = vmatpush.msra.mxu0 0.0
    %1168 = vmatpush.msra.mxu0 0.0
    %1169 = vmatpush.msra.mxu0 0.0
    %1170 = vmatpush.msra.mxu0 0.0
    %1171 = vmatpush.msra.mxu0 0.0
    %1172 = vmatpush.msra.mxu0 0.0
    %1173 = vmatpush.msra.mxu0 0.0
    %1174 = vmatpush.msra.mxu0 %v325
    %1175 = vmatpush.msra.mxu0 %v324
    %1176 = vmatpush.msra.mxu0 %v323
    %1177 = vmatpush.msra.mxu0 %v322
    %1178 = vmatmul.f32.gmra.mxu0 %v1160
    %v1179 = vpop.f32.mrf.mxu0
    %v1180 = vadd.f32 0.0, %v1179
    %1181 = vdwg.mxu0
    %v1182 = vadd.f32 %v1159, %v1180
    %v1183 = vxor.u32 %v1158, 2147483648
    %v1184 = vmul.f32 %v1183, 1.442695
    %v1185 = vpow.pop %v1184
    %v1186 = vadd.f32 %v1185, 1.0
    %v1187 = vrcp.pop %v1186
    %v1188 = vmul.f32 %v1186, %v1187
    %v1189 = vsub.f32 1.0, %v1188
    %v1190 = vmul.f32 %v1187, %v1189
    %v1191 = vadd.f32 %v1187, %v1190
    %vm1192 = vweird.f32 %v1186
    %vm1193 = vweird.f32 %v1187
    %vm1194 = vmor %vm1192, %vm1193
    %v1195 = vsel %vm1194, %v1187, %v1191
    %v1196 = vand.u32 2147483647, %v1186
    %vm1197 = vcmp.eq.f32.partialorder %v1196, 8.507059e+37
    %v1198 = vand.u32 %v1186, 2147483648
    %v1199 = vor.u32 1.1754944e-38, %v1198
    %v1200 = vsel %vm1197, %v1199, %v1195
    %v1201 = vmul.f32 1.0, %v1200
    %v1202 = vtanh.pop %v1158
    %v1203 = vxor.u32 %v1182, 2147483648
    %v1204 = vmul.f32 %v1203, 1.442695
    %v1205 = vpow.pop %v1204
    %v1206 = vadd.f32 %v1205, 1.0
    %v1207 = vrcp.pop %v1206
    %v1208 = vmul.f32 %v1206, %v1207
    %v1209 = vsub.f32 1.0, %v1208
    %v1210 = vmul.f32 %v1207, %v1209
    %v1211 = vadd.f32 %v1207, %v1210
    %vm1212 = vweird.f32 %v1206
    %vm1213 = vweird.f32 %v1207
    %vm1214 = vmor %vm1212, %vm1213
    %v1215 = vsel %vm1214, %v1207, %v1211
    %v1216 = vand.u32 2147483647, %v1206
    %vm1217 = vcmp.eq.f32.partialorder %v1216, 8.507059e+37
    %v1218 = vand.u32 %v1206, 2147483648
    %v1219 = vor.u32 1.1754944e-38, %v1218
    %v1220 = vsel %vm1217, %v1219, %v1215
    %v1221 = vmul.f32 1.0, %v1220
    %v1222 = vtanh.pop %v1182
    %v1223 = vmul.f32 %v1201, %v1101
    %1225 = vrot.lane.b32.xlu0 %v1202, 64
    %v1226 = vpop.permute.xlu0 %1225
    %v1228 = vmul.f32 %v1201, %v1226
    %1230 = vrot.lane.b32.xlu0 %v1228, 32
    %v1231 = vpop.permute.xlu0 %1230
    %v1233 = vadd.f32 %v1223, %v1231
    %v1234 = vmul.f32 %v1221, %v1112
    %1236 = vrot.lane.b32.xlu0 %v1222, 64
    %v1237 = vpop.permute.xlu0 %1236
    %v1239 = vmul.f32 %v1221, %v1237
    %1241 = vrot.lane.b32.xlu0 %v1239, 32
    %v1242 = vpop.permute.xlu0 %1241
    %v1244 = vadd.f32 %v1234, %v1242
    %v1245 = vtanh.pop %v1233
    %1247 = vrot.lane.b32.xlu0 %v1245, 64
    %v1248 = vpop.permute.xlu0 %1247
    %v1250 = vmul.f32 %v1201, %v1248
    %v1251 = vtanh.pop %v1244
    %1253 = vrot.lane.b32.xlu0 %v1251, 64
    %v1254 = vpop.permute.xlu0 %1253
    %v1256 = vmul.f32 %v1221, %v1254
    %1258 = vrot.lane.b32.xlu0 %v1250, 32
    %v1259 = vpop.permute.xlu0 %1258
    %1261 = vst.msk [vmem:[%s10 + $0xc] sm:$0x3] %vm468, %v1259
    %1263 = vrot.lane.b32.xlu0 %v1256, 32
    %v1264 = vpop.permute.xlu0 %1263
    %1266 = vst.msk [vmem:[%s141 + $0x2] sm:$0x3] %vm468, %v1264
    %v1267 = vld [vmem:[#allocation2 + $0xe] sm:$0x3]
    %v1268 = vsel %vm176, %v1259, 0
    %1270 = vmatpush.msra.mxu0 0.0
    %1271 = vmatpush.msra.mxu0 0.0
    %1272 = vmatpush.msra.mxu0 0.0
    %1273 = vmatpush.msra.mxu0 0.0
    %1274 = vmatpush.msra.mxu0 0.0
    %1275 = vmatpush.msra.mxu0 0.0
    %1276 = vmatpush.msra.mxu0 0.0
    %1277 = vmatpush.msra.mxu0 0.0
    %1278 = vmatpush.msra.mxu0 0.0
    %1279 = vmatpush.msra.mxu0 0.0
    %1280 = vmatpush.msra.mxu0 0.0
    %1281 = vmatpush.msra.mxu0 0.0
    %1282 = vmatpush.msra.mxu0 %v320
    %1283 = vmatpush.msra.mxu0 %v319
    %1284 = vmatpush.msra.mxu0 %v318
    %1285 = vmatpush.msra.mxu0 %v317
    %1286 = vmatmul.f32.gmra.mxu0 %v1268
    %v1287 = vpop.f32.mrf.mxu0
    %v1288 = vadd.f32 0.0, %v1287
    %1289 = vdwg.mxu0
    %v1290 = vadd.f32 %v1267, %v1288
    %v1291 = vld [vmem:[#allocation3] sm:$0x3]
    %v1292 = vsel %vm176, %v1264, 0
    %1294 = vmatpush.msra.mxu0 0.0
    %1295 = vmatpush.msra.mxu0 0.0
    %1296 = vmatpush.msra.mxu0 0.0
    %1297 = vmatpush.msra.mxu0 0.0
    %1298 = vmatpush.msra.mxu0 0.0
    %1299 = vmatpush.msra.mxu0 0.0
    %1300 = vmatpush.msra.mxu0 0.0
    %1301 = vmatpush.msra.mxu0 0.0
    %1302 = vmatpush.msra.mxu0 0.0
    %1303 = vmatpush.msra.mxu0 0.0
    %1304 = vmatpush.msra.mxu0 0.0
    %1305 = vmatpush.msra.mxu0 0.0
    %1306 = vmatpush.msra.mxu0 %v325
    %1307 = vmatpush.msra.mxu0 %v324
    %1308 = vmatpush.msra.mxu0 %v323
    %1309 = vmatpush.msra.mxu0 %v322
    %1310 = vmatmul.f32.gmra.mxu0 %v1292
    %v1311 = vpop.f32.mrf.mxu0
    %v1312 = vadd.f32 0.0, %v1311
    %1313 = vdwg.mxu0
    %v1314 = vadd.f32 %v1291, %v1312
    %v1315 = vxor.u32 %v1290, 2147483648
    %v1316 = vmul.f32 %v1315, 1.442695
    %v1317 = vpow.pop %v1316
    %v1318 = vadd.f32 %v1317, 1.0
    %v1319 = vrcp.pop %v1318
    %v1320 = vmul.f32 %v1318, %v1319
    %v1321 = vsub.f32 1.0, %v1320
    %v1322 = vmul.f32 %v1319, %v1321
    %v1323 = vadd.f32 %v1319, %v1322
    %vm1324 = vweird.f32 %v1318
    %vm1325 = vweird.f32 %v1319
    %vm1326 = vmor %vm1324, %vm1325
    %v1327 = vsel %vm1326, %v1319, %v1323
    %v1328 = vand.u32 2147483647, %v1318
    %vm1329 = vcmp.eq.f32.partialorder %v1328, 8.507059e+37
    %v1330 = vand.u32 %v1318, 2147483648
    %v1331 = vor.u32 1.1754944e-38, %v1330
    %v1332 = vsel %vm1329, %v1331, %v1327
    %v1333 = vmul.f32 1.0, %v1332
    %v1334 = vtanh.pop %v1290
    %v1335 = vxor.u32 %v1314, 2147483648
    %v1336 = vmul.f32 %v1335, 1.442695
    %v1337 = vpow.pop %v1336
    %v1338 = vadd.f32 %v1337, 1.0
    %v1339 = vrcp.pop %v1338
    %v1340 = vmul.f32 %v1338, %v1339
    %v1341 = vsub.f32 1.0, %v1340
    %v1342 = vmul.f32 %v1339, %v1341
    %v1343 = vadd.f32 %v1339, %v1342
    %vm1344 = vweird.f32 %v1338
    %vm1345 = vweird.f32 %v1339
    %vm1346 = vmor %vm1344, %vm1345
    %v1347 = vsel %vm1346, %v1339, %v1343
    %v1348 = vand.u32 2147483647, %v1338
    %vm1349 = vcmp.eq.f32.partialorder %v1348, 8.507059e+37
    %v1350 = vand.u32 %v1338, 2147483648
    %v1351 = vor.u32 1.1754944e-38, %v1350
    %v1352 = vsel %vm1349, %v1351, %v1347
    %v1353 = vmul.f32 1.0, %v1352
    %v1354 = vtanh.pop %v1314
    %v1355 = vmul.f32 %v1333, %v1233
    %1357 = vrot.lane.b32.xlu0 %v1334, 64
    %v1358 = vpop.permute.xlu0 %1357
    %v1360 = vmul.f32 %v1333, %v1358
    %1362 = vrot.lane.b32.xlu0 %v1360, 32
    %v1363 = vpop.permute.xlu0 %1362
    %v1365 = vadd.f32 %v1355, %v1363
    %v1366 = vmul.f32 %v1353, %v1244
    %1368 = vrot.lane.b32.xlu0 %v1354, 64
    %v1369 = vpop.permute.xlu0 %1368
    %v1371 = vmul.f32 %v1353, %v1369
    %1373 = vrot.lane.b32.xlu0 %v1371, 32
    %v1374 = vpop.permute.xlu0 %1373
    %v1376 = vadd.f32 %v1366, %v1374
    %v1377 = vtanh.pop %v1365
    %1379 = vrot.lane.b32.xlu0 %v1377, 64
    %v1380 = vpop.permute.xlu0 %1379
    %v1382 = vmul.f32 %v1333, %v1380
    %v1383 = vtanh.pop %v1376
    %1385 = vrot.lane.b32.xlu0 %v1383, 64
    %v1386 = vpop.permute.xlu0 %1385
    %v1388 = vmul.f32 %v1353, %v1386
    %1390 = vrot.lane.b32.xlu0 %v1382, 32
    %v1391 = vpop.permute.xlu0 %1390
    %1393 = vst.msk [vmem:[%s10 + $0xe] sm:$0x3] %vm468, %v1391
    %1395 = vrot.lane.b32.xlu0 %v1388, 32
    %v1396 = vpop.permute.xlu0 %1395
    %1398 = vst.msk [vmem:[%s141] sm:$0x3] %vm468, %v1396
    %1399 = vst.msk [vmem:[%s12] sm:$0x3] %vm468, %v1391
    %1400 = vst.msk [vmem:[%s327] sm:$0x3] %vm468, %v1396
    %1402 = vrot.lane.b32.xlu0 %v1365, 96
    %v1403 = vpop.permute.xlu0 %1402
    %1405 = vst.msk [vmem:[%s13] sm:$0x3] %vm468, %v1403
    %1407 = vrot.lane.b32.xlu0 %v1376, 96
    %v1408 = vpop.permute.xlu0 %1407
    %1410 = vst.msk [vmem:[%s330] sm:$0x3] %vm468, %v1408
    %s1411 = ssub.s32 0, 0
    %s1412 = smul.u32 2, %s1411
    %p1413 = scmp.lt.s32.totalorder %s1412, 1
    %s1414 = scalar_select %p1413, %s1412, 1
    %s1415 = smul.addr %s1414, 8
    %s1416 = scalar_lea.vmem %s11, %s1415
    // Predicated region
    $region58: #{_lambda_.4} parent=1 // pred_check
      _
    $region59: #{_lambda_.4} parent=1 // pred_check_branch
      %1418 = sbr.rel (0) target = $region61
    $region60: #{_lambda_.4} parent=1 // pred_region
      _
    $region61: #{_lambda_.4} parent=1 // pred_fallthru
      _
    // Predicated region
    $region62: #{_lambda_.4} parent=1 // pred_check
      _
    $region63: #{_lambda_.4} parent=1 // pred_check_branch
      %1420 = sbr.rel (0) target = $region65
    $region64: #{_lambda_.4} parent=1 // pred_region
      %s1421 = ssub.s32 0, 0
      %s1422 = smul.u32 2, %s1421
    $region65: #{_lambda_.4} parent=1 // pred_fallthru
      _
    // Predicated region
    $region66: #{_lambda_.4} parent=1 // pred_check
      _
    $region67: #{_lambda_.4} parent=1 // pred_check_branch
      %1424 = sbr.rel (0) target = $region69
    $region68: #{_lambda_.4} parent=1 // pred_region
      _
    $region69: #{_lambda_.4} parent=1 // pred_fallthru
      _
    // Predicated region
    $region70: #{_lambda_.4} parent=1 // pred_check
      _
    $region71: #{_lambda_.4} parent=1 // pred_check_branch
      %1426 = sbr.rel (0) target = $region73
    $region72: #{_lambda_.4} parent=1 // pred_region
      _
    $region73: #{_lambda_.4} parent=1 // pred_fallthru
      _
    // Predicated region
    $region74: #{_lambda_.4} parent=1 // pred_check
      _
    $region75: #{_lambda_.4} parent=1 // pred_check_branch
      %1428 = sbr.rel (0) target = $region77
    $region76: #{_lambda_.4} parent=1 // pred_region
      _
    $region77: #{_lambda_.4} parent=1 // pred_fallthru
      _
    // Predicated region
    $region78: #{_lambda_.4} parent=1 // pred_check
      _
    $region79: #{_lambda_.4} parent=1 // pred_check_branch
      %1430 = sbr.rel (0) target = $region81
    $region80: #{_lambda_.4} parent=1 // pred_region
      %s1431 = ssub.s32 0, 0
      %s1432 = smul.u32 2, %s1431
      %p1433 = scmp.lt.s32.totalorder %s1432, 1
      %s1434 = scalar_select %p1433, %s1432, 1
      %s1435 = smul.addr %s1434, 8
      %s1436 = scalar_lea.vmem %s11, %s1435
    $region81: #{_lambda_.4} parent=1 // pred_fallthru
      _
    // Predicated region
    $region82: #{_lambda_.4} parent=1 // pred_check
      _
    $region83: #{_lambda_.4} parent=1 // pred_check_branch
      %1438 = sbr.rel (0) target = $region85
    $region84: #{_lambda_.4} parent=1 // pred_region
      _
    $region85: #{_lambda_.4} parent=1 // pred_fallthru
      _
    // Predicated region
    $region86: #{_lambda_.4} parent=1 // pred_check
      _
    $region87: #{_lambda_.4} parent=1 // pred_check_branch
      %1440 = sbr.rel (0) target = $region89
    $region88: #{_lambda_.4} parent=1 // pred_region
      _
    $region89: #{_lambda_.4} parent=1 // pred_fallthru
      _
    %1441 = vsyncpa [#allocation5], 1
    %1442 = vsyncpa [#allocation7], 1

</llo_original>
